<compile_context>
chip_gen: v7x
topology: tpu7x:2x2x1
jax: 0.10.0
libtpu: 0.0.40
codegen_flags: <defaults>
</compile_context>

<pallas_src>
import jax
import jax.numpy as jnp
from jax import lax
from jax.experimental import pallas as pl
from jax.experimental.pallas import tpu as pltpu


def gru_encoder_kernel(tok_ref, len_ref, h0_ref, wp_ref, bx_ref,
                       whf_ref, whb_ref, bhf_ref, bhb_ref,
                       out_ref, hid_ref,
                       gif_ref, gib_ref, bwd_ref):
    T, Bp, H = out_ref.shape
    V = wp_ref.shape[0]
    GP = gif_ref.shape[-1]          # per-direction gate slab, padded to a full 128-lane tile
    TB = T * Bp

    # ---- batched embedding lookup + input-gate projection (off the recurrence path) ----
    # wp_ref already holds emb @ [w_if | 0 | w_ib | 0] (folded in the wrapper); a single
    # one-hot matmul yields all input-gate pre-activations for every step of BOTH directions.
    tok = tok_ref[...]                                                         # (TB, 1) int32
    onehot = (tok == lax.broadcasted_iota(jnp.int32, (TB, V), 1)).astype(jnp.float32)
    gi = jnp.dot(onehot, wp_ref[...], preferred_element_type=jnp.float32) + bx_ref[...]
    gif_ref[...] = gi[:, :GP]       # lane-dense (TB, 128) store (forward direction, all steps)
    gib_ref[...] = gi[:, GP:]       # lane-dense (TB, 128) store (backward direction, all steps)

    # ---- validity mask for all timesteps, held in vregs (pack/pad_packed semantics) ----
    lengths = len_ref[...]                                                     # (Bp, 1) int32
    t_iota = lax.broadcasted_iota(jnp.int32, (T, Bp, H), 0)
    valid = t_iota < lengths[None, :, :]                                       # (T, Bp, H) bool

    w_hf = whf_ref[...]
    w_hb = whb_ref[...]
    b_hf = bhf_ref[...]
    b_hb = bhb_ref[...]

    def cell(gx, h, w_hh, b_hh):
        # PyTorch GRU gate order: r, z, n.  Only h @ w_hh remains on the serial path.
        gh = jnp.dot(h, w_hh, preferred_element_type=jnp.float32) + b_hh
        rz = jax.nn.sigmoid(gx[:, :2 * H] + gh[:, :2 * H])        # one EUP push for r and z
        r = rz[:, :H]
        z = rz[:, H:]
        n = jnp.tanh(gx[:, 2 * H:3 * H] + r * gh[:, 2 * H:3 * H])
        return n + z * (h - n)                                     # == (1-z)*n + z*h (FMA form)

    # ---- fused forward/backward recurrence; static Python loop == fully unrolled, all
    #      indices concrete so every slice below is a static, aligned access ----
    h_f = h0_ref[0]
    h_b = h0_ref[1]
    for i in range(T):
        tb = T - 1 - i
        gf = gif_ref[pl.ds(i * Bp, Bp), :]        # (Bp, 128) full-vreg load
        gb = gib_ref[pl.ds(tb * Bp, Bp), :]
        vf = valid[i]                             # (Bp, H) bool, free static slice
        vb = valid[tb]

        hf_new = cell(gf, h_f, w_hf, b_hf)
        hb_new = cell(gb, h_b, w_hb, b_hb)

        out_ref[i] = jnp.where(vf, hf_new, 0.0)   # padded steps -> 0 (pad_packed_sequence)
        bwd_ref[tb] = jnp.where(vb, hb_new, 0.0)  # backward half into scratch, summed once later
        h_f = jnp.where(vf, hf_new, h_f)          # hidden frozen past sequence end
        h_b = jnp.where(vb, hb_new, h_b)

    out_ref[...] = out_ref[...] + bwd_ref[...]    # sum fwd + bwd halves, one vectorized op
    hid_ref[0] = h_f
    hid_ref[1] = h_b


def features_encoder_forward(tokens, lengths, params, h0=None):
    T, B, _ = tokens.shape
    V, H = params["emb"].shape
    if h0 is None:
        h0 = jnp.zeros((2, B, H), jnp.float32)

    # Pad batch to a full f32 sublane multiple (8).  Padded rows get length 0, so they are
    # masked everywhere and sliced off on the way out.
    Bp = ((B + 7) // 8) * 8
    # Per-direction gate slab padded from 3H=96 to a full 128-lane tile.
    GP = max(128, ((3 * H + 127) // 128) * 128)

    tok_p = jnp.zeros((T, Bp, 1), jnp.int32).at[:, :B].set(tokens)
    len_p = jnp.zeros((Bp, 1), jnp.int32).at[:B].set(lengths)
    h0_p = jnp.zeros((2, Bp, H), jnp.float32).at[:, :B].set(h0)
    tok_flat = tok_p.reshape(T * Bp, 1)

    # Parameter-only work hoisted out of the kernel: fold the embedding into the input
    # projection (Wp = emb @ w_i*) and place each direction's 3H-wide slab into a zero-padded
    # 128-lane slot so all in-kernel gate stores/loads are lane-dense.
    hp = lax.Precision.HIGHEST
    wp_f = jnp.dot(params["emb"], params["w_if"], precision=hp)     # (V, 3H)
    wp_b = jnp.dot(params["emb"], params["w_ib"], precision=hp)     # (V, 3H)
    wp = jnp.zeros((V, 2 * GP), jnp.float32)
    wp = wp.at[:, :3 * H].set(wp_f).at[:, GP:GP + 3 * H].set(wp_b)  # (V, 256)
    bx = jnp.zeros((1, 2 * GP), jnp.float32)
    bx = bx.at[:, :3 * H].set(params["b_if"]).at[:, GP:GP + 3 * H].set(params["b_ib"])

    vmem = pl.BlockSpec(memory_space=pltpu.MemorySpace.VMEM)
    inputs = (tok_flat, len_p, h0_p, wp, bx,
              params["w_hf"], params["w_hb"], params["b_hf"], params["b_hb"])

    out_p, hid_p = pl.pallas_call(
        gru_encoder_kernel,
        out_shape=(jax.ShapeDtypeStruct((T, Bp, H), jnp.float32),
                   jax.ShapeDtypeStruct((2, Bp, H), jnp.float32)),
        in_specs=[vmem] * len(inputs),
        out_specs=(vmem, vmem),
        scratch_shapes=[
            pltpu.VMEM((T * Bp, GP), jnp.float32),   # fwd input-gate pre-activations, all steps
            pltpu.VMEM((T * Bp, GP), jnp.float32),   # bwd input-gate pre-activations, all steps
            pltpu.VMEM((T, Bp, H), jnp.float32),     # backward-direction outputs
        ],
    )(*inputs)
    return out_p[:, :B], hid_p[:, :B]


def reference_forward(tokens, lengths, params, h0):
    """Pure-JAX reference replicating the PyTorch packed bi-GRU semantics."""
    V, H = params["emb"].shape
    T, B, _ = tokens.shape
    x = params["emb"][tokens[:, :, 0]]          # (T, B, H)
    lens = lengths[:, 0]
    dot = lambda a, b: jnp.dot(a, b, precision=lax.Precision.HIGHEST)

    def cell(x_t, h, w_ih, w_hh, b_ih, b_hh):
        gi = dot(x_t, w_ih) + b_ih
        gh = dot(h, w_hh) + b_hh
        r = jax.nn.sigmoid(gi[:, :H] + gh[:, :H])
        z = jax.nn.sigmoid(gi[:, H:2 * H] + gh[:, H:2 * H])
        n = jnp.tanh(gi[:, 2 * H:] + r * gh[:, 2 * H:])
        return (1.0 - z) * n + z * h

    out_f = []
    h = h0[0]
    for t in range(T):
        hn = cell(x[t], h, params["w_if"], params["w_hf"], params["b_if"], params["b_hf"])
        valid = (lens > t)[:, None]
        out_f.append(jnp.where(valid, hn, 0.0))
        h = jnp.where(valid, hn, h)
    h_fwd = h

    out_b = [None] * T
    h = h0[1]
    for t in range(T - 1, -1, -1):
        hn = cell(x[t], h, params["w_ib"], params["w_hb"], params["b_ib"], params["b_hb"])
        valid = (lens > t)[:, None]
        out_b[t] = jnp.where(valid, hn, 0.0)
        h = jnp.where(valid, hn, h)
    h_bwd = h

    out = jnp.stack(out_f) + jnp.stack(out_b)
    hidden = jnp.stack([h_fwd, h_bwd])
    return out, hidden


def make_params(key, V, H):
    ks = jax.random.split(key, 9)
    s = 1.0 / jnp.sqrt(jnp.float32(H))
    u = lambda k, shape: jax.random.uniform(k, shape, jnp.float32, minval=-s, maxval=s)
    return {
        "emb":  jax.random.normal(ks[0], (V, H), jnp.float32) * 0.1,
        # forward direction GRU weights (stored as (H, 3H) so we compute x @ W)
        "w_if": u(ks[1], (H, 3 * H)), "w_hf": u(ks[2], (H, 3 * H)),
        "b_if": u(ks[3], (1, 3 * H)), "b_hf": u(ks[4], (1, 3 * H)),
        # backward direction GRU weights
        "w_ib": u(ks[5], (H, 3 * H)), "w_hb": u(ks[6], (H, 3 * H)),
        "b_ib": u(ks[7], (1, 3 * H)), "b_hb": u(ks[8], (1, 3 * H)),
    }


if __name__ == "__main__":
    # Small shapes consistent with the module: vocab=64, hidden=32, seq=8, batch=4.
    V, H, T, B = 64, 32, 8, 4
    key = jax.random.PRNGKey(0)
    k_tok, k_par = jax.random.split(key)

    params = make_params(k_par, V, H)
    tokens = jax.random.randint(k_tok, (T, B, 1), 0, V, dtype=jnp.int32)
    # lengths sorted descending (pack_padded_sequence default enforce_sorted=True),
    # max length == T so padded output length matches input length.
    lengths = jnp.array([[8], [6], [5], [3]], dtype=jnp.int32)
    h0 = jnp.zeros((2, B, H), jnp.float32)

    out, hidden = features_encoder_forward(tokens, lengths, params, h0)
    jax.block_until_ready((out, hidden))

    out_ref, hid_ref = reference_forward(tokens, lengths, params, h0)
    assert out.shape == (T, B, H) and hidden.shape == (2, B, H)
    assert jnp.allclose(out, out_ref, atol=2e-3, rtol=2e-3)
    assert jnp.allclose(hidden, hid_ref, atol=2e-3, rtol=2e-3)

    print("KERNEL_OK")
</pallas_src>

<mosaic_0001>
module attributes {stable_mosaic.version = 11 : i64} {
  func.func @gru_encoder_kernel(%arg0: memref<64x1xi32, #tpu.memory_space<vmem>>, %arg1: memref<8x1xi32, #tpu.memory_space<vmem>>, %arg2: memref<2x8x32xf32, #tpu.memory_space<vmem>>, %arg3: memref<64x256xf32, #tpu.memory_space<vmem>>, %arg4: memref<1x256xf32, #tpu.memory_space<vmem>>, %arg5: memref<32x96xf32, #tpu.memory_space<vmem>>, %arg6: memref<32x96xf32, #tpu.memory_space<vmem>>, %arg7: memref<1x96xf32, #tpu.memory_space<vmem>>, %arg8: memref<1x96xf32, #tpu.memory_space<vmem>>, %arg9: memref<8x8x32xf32, #tpu.memory_space<vmem>>, %arg10: memref<2x8x32xf32, #tpu.memory_space<vmem>>, %arg11: memref<64x128xf32, #tpu.memory_space<vmem>>, %arg12: memref<64x128xf32, #tpu.memory_space<vmem>>, %arg13: memref<8x8x32xf32, #tpu.memory_space<vmem>>) attributes {dimension_semantics = [], scalar_prefetch = 0 : i64, scratch_operands = 3 : i64, tpu.core_type = #tpu.core_type<tc>} {
    %c0 = arith.constant 0 : index
    %c0_0 = arith.constant 0 : index
    %0 = vector.load %arg0[%c0, %c0_0] : memref<64x1xi32, #tpu.memory_space<vmem>>, vector<64x1xi32>
    %1 = tpu.iota {dimensions = array<i32: 1>} : vector<64x64xi32>
    %2 = vector.broadcast %0 : vector<64x1xi32> to vector<64x64xi32>
    %3 = arith.cmpi eq, %2, %1 : vector<64x64xi32>
    %4 = arith.extui %3 : vector<64x64xi1> to vector<64x64xi32>
    %5 = arith.sitofp %4 : vector<64x64xi32> to vector<64x64xf32>
    %c0_1 = arith.constant 0 : index
    %c0_2 = arith.constant 0 : index
    %6 = vector.load %arg3[%c0_1, %c0_2] : memref<64x256xf32, #tpu.memory_space<vmem>>, vector<64x256xf32>
    %cst = arith.constant dense<0.000000e+00> : vector<64x256xf32>
    %7 = tpu.matmul %5, %6, %cst {dimension_numbers = #tpu.dot_dimension_numbers<[1], [0], [0], [1], [0, 0, 1, 1], [], []>} : vector<64x64xf32>, vector<64x256xf32>, vector<64x256xf32> -> vector<64x256xf32>
    %c0_3 = arith.constant 0 : index
    %c0_4 = arith.constant 0 : index
    %8 = vector.load %arg4[%c0_3, %c0_4] : memref<1x256xf32, #tpu.memory_space<vmem>>, vector<1x256xf32>
    %9 = vector.broadcast %8 : vector<1x256xf32> to vector<64x256xf32>
    %10 = arith.addf %7, %9 : vector<64x256xf32>
    %11 = vector.extract_strided_slice %10 {offsets = [0, 0], sizes = [64, 128], strides = [1, 1]} : vector<64x256xf32> to vector<64x128xf32>
    %c0_5 = arith.constant 0 : index
    %c0_6 = arith.constant 0 : index
    %12 = vector.load %arg11[%c0_5, %c0_6] : memref<64x128xf32, #tpu.memory_space<vmem>>, vector<64x128xf32>
    tpu.vector_store %arg11[%c0_5, %c0_6], %11 {strides = array<i32>} : memref<64x128xf32, #tpu.memory_space<vmem>>, vector<64x128xf32>,
    %13 = vector.extract_strided_slice %10 {offsets = [0, 128], sizes = [64, 128], strides = [1, 1]} : vector<64x256xf32> to vector<64x128xf32>
    %c0_7 = arith.constant 0 : index
    %c0_8 = arith.constant 0 : index
    %14 = vector.load %arg12[%c0_7, %c0_8] : memref<64x128xf32, #tpu.memory_space<vmem>>, vector<64x128xf32>
    tpu.vector_store %arg12[%c0_7, %c0_8], %13 {strides = array<i32>} : memref<64x128xf32, #tpu.memory_space<vmem>>, vector<64x128xf32>,
    %c0_9 = arith.constant 0 : index
    %c0_10 = arith.constant 0 : index
    %15 = vector.load %arg1[%c0_9, %c0_10] : memref<8x1xi32, #tpu.memory_space<vmem>>, vector<8x1xi32>
    %16 = tpu.iota {dimensions = array<i32: 0>} : vector<8x8x32xi32>
    %17 = vector.shape_cast %15 : vector<8x1xi32> to vector<1x8x1xi32>
    %18 = vector.broadcast %17 : vector<1x8x1xi32> to vector<8x8x32xi32>
    %19 = arith.cmpi slt, %16, %18 : vector<8x8x32xi32>
    %c0_11 = arith.constant 0 : index
    %c0_12 = arith.constant 0 : index
    %20 = vector.load %arg5[%c0_11, %c0_12] : memref<32x96xf32, #tpu.memory_space<vmem>>, vector<32x96xf32>
    %c0_13 = arith.constant 0 : index
    %c0_14 = arith.constant 0 : index
    %21 = vector.load %arg6[%c0_13, %c0_14] : memref<32x96xf32, #tpu.memory_space<vmem>>, vector<32x96xf32>
    %c0_15 = arith.constant 0 : index
    %c0_16 = arith.constant 0 : index
    %22 = vector.load %arg7[%c0_15, %c0_16] : memref<1x96xf32, #tpu.memory_space<vmem>>, vector<1x96xf32>
    %c0_17 = arith.constant 0 : index
    %c0_18 = arith.constant 0 : index
    %23 = vector.load %arg8[%c0_17, %c0_18] : memref<1x96xf32, #tpu.memory_space<vmem>>, vector<1x96xf32>
    %c0_19 = arith.constant 0 : index
    %c0_20 = arith.constant 0 : index
    %c0_21 = arith.constant 0 : index
    %24 = vector.load %arg2[%c0_19, %c0_20, %c0_21] : memref<2x8x32xf32, #tpu.memory_space<vmem>>, vector<1x8x32xf32>
    %25 = vector.shape_cast %24 : vector<1x8x32xf32> to vector<8x32xf32>
    %c1 = arith.constant 1 : index
    %c0_22 = arith.constant 0 : index
    %c0_23 = arith.constant 0 : index
    %26 = vector.load %arg2[%c1, %c0_22, %c0_23] : memref<2x8x32xf32, #tpu.memory_space<vmem>>, vector<1x8x32xf32>
    %27 = vector.shape_cast %26 : vector<1x8x32xf32> to vector<8x32xf32>
    %c0_24 = arith.constant 0 : index
    %c0_25 = arith.constant 0 : index
    %28 = vector.load %arg11[%c0_24, %c0_25] : memref<64x128xf32, #tpu.memory_space<vmem>>, vector<8x128xf32>
    %c56 = arith.constant 56 : index
    %c0_26 = arith.constant 0 : index
    %29 = vector.load %arg12[%c56, %c0_26] : memref<64x128xf32, #tpu.memory_space<vmem>>, vector<8x128xf32>
    %30 = vector.extract_strided_slice %19 {offsets = [0, 0, 0], sizes = [1, 8, 32], strides = [1, 1, 1]} : vector<8x8x32xi1> to vector<1x8x32xi1>
    %31 = vector.shape_cast %30 : vector<1x8x32xi1> to vector<8x32xi1>
    %32 = vector.extract_strided_slice %19 {offsets = [7, 0, 0], sizes = [1, 8, 32], strides = [1, 1, 1]} : vector<8x8x32xi1> to vector<1x8x32xi1>
    %33 = vector.shape_cast %32 : vector<1x8x32xi1> to vector<8x32xi1>
    %cst_27 = arith.constant dense<0.000000e+00> : vector<8x96xf32>
    %34 = tpu.matmul %25, %20, %cst_27 {dimension_numbers = #tpu.dot_dimension_numbers<[1], [0], [0], [1], [0, 0, 1, 1], [], []>} : vector<8x32xf32>, vector<32x96xf32>, vector<8x96xf32> -> vector<8x96xf32>
    %35 = vector.broadcast %22 : vector<1x96xf32> to vector<8x96xf32>
    %36 = arith.addf %34, %35 : vector<8x96xf32>
    %37 = vector.extract_strided_slice %28 {offsets = [0, 0], sizes = [8, 64], strides = [1, 1]} : vector<8x128xf32> to vector<8x64xf32>
    %38 = vector.extract_strided_slice %36 {offsets = [0, 0], sizes = [8, 64], strides = [1, 1]} : vector<8x96xf32> to vector<8x64xf32>
    %39 = arith.addf %37, %38 : vector<8x64xf32>
    %40 = arith.negf %39 : vector<8x64xf32>
    %41 = math.exp %40 : vector<8x64xf32>
    %cst_28 = arith.constant 1.000000e+00 : f32
    %42 = vector.broadcast %cst_28 : f32 to vector<8x64xf32>
    %43 = arith.addf %42, %41 : vector<8x64xf32>
    %44 = arith.divf %42, %43 : vector<8x64xf32>
    %45 = vector.extract_strided_slice %44 {offsets = [0, 0], sizes = [8, 32], strides = [1, 1]} : vector<8x64xf32> to vector<8x32xf32>
    %46 = vector.extract_strided_slice %44 {offsets = [0, 32], sizes = [8, 32], strides = [1, 1]} : vector<8x64xf32> to vector<8x32xf32>
    %47 = vector.extract_strided_slice %28 {offsets = [0, 64], sizes = [8, 32], strides = [1, 1]} : vector<8x128xf32> to vector<8x32xf32>
    %48 = vector.extract_strided_slice %36 {offsets = [0, 64], sizes = [8, 32], strides = [1, 1]} : vector<8x96xf32> to vector<8x32xf32>
    %49 = arith.mulf %45, %48 : vector<8x32xf32>
    %50 = arith.addf %47, %49 : vector<8x32xf32>
    %51 = math.tanh %50 : vector<8x32xf32>
    %52 = arith.subf %25, %51 : vector<8x32xf32>
    %53 = arith.mulf %46, %52 : vector<8x32xf32>
    %54 = arith.addf %51, %53 : vector<8x32xf32>
    %cst_29 = arith.constant dense<0.000000e+00> : vector<8x96xf32>
    %55 = tpu.matmul %27, %21, %cst_29 {dimension_numbers = #tpu.dot_dimension_numbers<[1], [0], [0], [1], [0, 0, 1, 1], [], []>} : vector<8x32xf32>, vector<32x96xf32>, vector<8x96xf32> -> vector<8x96xf32>
    %56 = vector.broadcast %23 : vector<1x96xf32> to vector<8x96xf32>
    %57 = arith.addf %55, %56 : vector<8x96xf32>
    %58 = vector.extract_strided_slice %29 {offsets = [0, 0], sizes = [8, 64], strides = [1, 1]} : vector<8x128xf32> to vector<8x64xf32>
    %59 = vector.extract_strided_slice %57 {offsets = [0, 0], sizes = [8, 64], strides = [1, 1]} : vector<8x96xf32> to vector<8x64xf32>
    %60 = arith.addf %58, %59 : vector<8x64xf32>
    %61 = arith.negf %60 : vector<8x64xf32>
    %62 = math.exp %61 : vector<8x64xf32>
    %cst_30 = arith.constant 1.000000e+00 : f32
    %63 = vector.broadcast %cst_30 : f32 to vector<8x64xf32>
    %64 = arith.addf %63, %62 : vector<8x64xf32>
    %65 = arith.divf %63, %64 : vector<8x64xf32>
    %66 = vector.extract_strided_slice %65 {offsets = [0, 0], sizes = [8, 32], strides = [1, 1]} : vector<8x64xf32> to vector<8x32xf32>
    %67 = vector.extract_strided_slice %65 {offsets = [0, 32], sizes = [8, 32], strides = [1, 1]} : vector<8x64xf32> to vector<8x32xf32>
    %68 = vector.extract_strided_slice %29 {offsets = [0, 64], sizes = [8, 32], strides = [1, 1]} : vector<8x128xf32> to vector<8x32xf32>
    %69 = vector.extract_strided_slice %57 {offsets = [0, 64], sizes = [8, 32], strides = [1, 1]} : vector<8x96xf32> to vector<8x32xf32>
    %70 = arith.mulf %66, %69 : vector<8x32xf32>
    %71 = arith.addf %68, %70 : vector<8x32xf32>
    %72 = math.tanh %71 : vector<8x32xf32>
    %73 = arith.subf %27, %72 : vector<8x32xf32>
    %74 = arith.mulf %67, %73 : vector<8x32xf32>
    %75 = arith.addf %72, %74 : vector<8x32xf32>
    %cst_31 = arith.constant 0.000000e+00 : f32
    %76 = vector.broadcast %cst_31 : f32 to vector<8x32xf32>
    %77 = arith.select %31, %54, %76 : vector<8x32xi1>, vector<8x32xf32>
    %c0_32 = arith.constant 0 : index
    %c0_33 = arith.constant 0 : index
    %c0_34 = arith.constant 0 : index
    %78 = vector.load %arg9[%c0_32, %c0_33, %c0_34] : memref<8x8x32xf32, #tpu.memory_space<vmem>>, vector<1x8x32xf32>
    %79 = vector.shape_cast %78 : vector<1x8x32xf32> to vector<8x32xf32>
    %80 = vector.shape_cast %77 : vector<8x32xf32> to vector<1x8x32xf32>
    tpu.vector_store %arg9[%c0_32, %c0_33, %c0_34], %80 {strides = array<i32>} : memref<8x8x32xf32, #tpu.memory_space<vmem>>, vector<1x8x32xf32>,
    %cst_35 = arith.constant 0.000000e+00 : f32
    %81 = vector.broadcast %cst_35 : f32 to vector<8x32xf32>
    %82 = arith.select %33, %75, %81 : vector<8x32xi1>, vector<8x32xf32>
    %c7 = arith.constant 7 : index
    %c0_36 = arith.constant 0 : index
    %c0_37 = arith.constant 0 : index
    %83 = vector.load %arg13[%c7, %c0_36, %c0_37] : memref<8x8x32xf32, #tpu.memory_space<vmem>>, vector<1x8x32xf32>
    %84 = vector.shape_cast %83 : vector<1x8x32xf32> to vector<8x32xf32>
    %85 = vector.shape_cast %82 : vector<8x32xf32> to vector<1x8x32xf32>
    tpu.vector_store %arg13[%c7, %c0_36, %c0_37], %85 {strides = array<i32>} : memref<8x8x32xf32, #tpu.memory_space<vmem>>, vector<1x8x32xf32>,
    %86 = arith.select %31, %54, %25 : vector<8x32xi1>, vector<8x32xf32>
    %87 = arith.select %33, %75, %27 : vector<8x32xi1>, vector<8x32xf32>
    %c8 = arith.constant 8 : index
    %c0_38 = arith.constant 0 : index
    %88 = vector.load %arg11[%c8, %c0_38] : memref<64x128xf32, #tpu.memory_space<vmem>>, vector<8x128xf32>
    %c48 = arith.constant 48 : index
    %c0_39 = arith.constant 0 : index
    %89 = vector.load %arg12[%c48, %c0_39] : memref<64x128xf32, #tpu.memory_space<vmem>>, vector<8x128xf32>
    %90 = vector.extract_strided_slice %19 {offsets = [1, 0, 0], sizes = [1, 8, 32], strides = [1, 1, 1]} : vector<8x8x32xi1> to vector<1x8x32xi1>
    %91 = vector.shape_cast %90 : vector<1x8x32xi1> to vector<8x32xi1>
    %92 = vector.extract_strided_slice %19 {offsets = [6, 0, 0], sizes = [1, 8, 32], strides = [1, 1, 1]} : vector<8x8x32xi1> to vector<1x8x32xi1>
    %93 = vector.shape_cast %92 : vector<1x8x32xi1> to vector<8x32xi1>
    %cst_40 = arith.constant dense<0.000000e+00> : vector<8x96xf32>
    %94 = tpu.matmul %86, %20, %cst_40 {dimension_numbers = #tpu.dot_dimension_numbers<[1], [0], [0], [1], [0, 0, 1, 1], [], []>} : vector<8x32xf32>, vector<32x96xf32>, vector<8x96xf32> -> vector<8x96xf32>
    %95 = vector.broadcast %22 : vector<1x96xf32> to vector<8x96xf32>
    %96 = arith.addf %94, %95 : vector<8x96xf32>
    %97 = vector.extract_strided_slice %88 {offsets = [0, 0], sizes = [8, 64], strides = [1, 1]} : vector<8x128xf32> to vector<8x64xf32>
    %98 = vector.extract_strided_slice %96 {offsets = [0, 0], sizes = [8, 64], strides = [1, 1]} : vector<8x96xf32> to vector<8x64xf32>
    %99 = arith.addf %97, %98 : vector<8x64xf32>
    %100 = arith.negf %99 : vector<8x64xf32>
    %101 = math.exp %100 : vector<8x64xf32>
    %cst_41 = arith.constant 1.000000e+00 : f32
    %102 = vector.broadcast %cst_41 : f32 to vector<8x64xf32>
    %103 = arith.addf %102, %101 : vector<8x64xf32>
    %104 = arith.divf %102, %103 : vector<8x64xf32>
    %105 = vector.extract_strided_slice %104 {offsets = [0, 0], sizes = [8, 32], strides = [1, 1]} : vector<8x64xf32> to vector<8x32xf32>
    %106 = vector.extract_strided_slice %104 {offsets = [0, 32], sizes = [8, 32], strides = [1, 1]} : vector<8x64xf32> to vector<8x32xf32>
    %107 = vector.extract_strided_slice %88 {offsets = [0, 64], sizes = [8, 32], strides = [1, 1]} : vector<8x128xf32> to vector<8x32xf32>
    %108 = vector.extract_strided_slice %96 {offsets = [0, 64], sizes = [8, 32], strides = [1, 1]} : vector<8x96xf32> to vector<8x32xf32>
    %109 = arith.mulf %105, %108 : vector<8x32xf32>
    %110 = arith.addf %107, %109 : vector<8x32xf32>
    %111 = math.tanh %110 : vector<8x32xf32>
    %112 = arith.subf %86, %111 : vector<8x32xf32>
    %113 = arith.mulf %106, %112 : vector<8x32xf32>
    %114 = arith.addf %111, %113 : vector<8x32xf32>
    %cst_42 = arith.constant dense<0.000000e+00> : vector<8x96xf32>
    %115 = tpu.matmul %87, %21, %cst_42 {dimension_numbers = #tpu.dot_dimension_numbers<[1], [0], [0], [1], [0, 0, 1, 1], [], []>} : vector<8x32xf32>, vector<32x96xf32>, vector<8x96xf32> -> vector<8x96xf32>
    %116 = vector.broadcast %23 : vector<1x96xf32> to vector<8x96xf32>
    %117 = arith.addf %115, %116 : vector<8x96xf32>
    %118 = vector.extract_strided_slice %89 {offsets = [0, 0], sizes = [8, 64], strides = [1, 1]} : vector<8x128xf32> to vector<8x64xf32>
    %119 = vector.extract_strided_slice %117 {offsets = [0, 0], sizes = [8, 64], strides = [1, 1]} : vector<8x96xf32> to vector<8x64xf32>
    %120 = arith.addf %118, %119 : vector<8x64xf32>
    %121 = arith.negf %120 : vector<8x64xf32>
    %122 = math.exp %121 : vector<8x64xf32>
    %cst_43 = arith.constant 1.000000e+00 : f32
    %123 = vector.broadcast %cst_43 : f32 to vector<8x64xf32>
    %124 = arith.addf %123, %122 : vector<8x64xf32>
    %125 = arith.divf %123, %124 : vector<8x64xf32>
    %126 = vector.extract_strided_slice %125 {offsets = [0, 0], sizes = [8, 32], strides = [1, 1]} : vector<8x64xf32> to vector<8x32xf32>
    %127 = vector.extract_strided_slice %125 {offsets = [0, 32], sizes = [8, 32], strides = [1, 1]} : vector<8x64xf32> to vector<8x32xf32>
    %128 = vector.extract_strided_slice %89 {offsets = [0, 64], sizes = [8, 32], strides = [1, 1]} : vector<8x128xf32> to vector<8x32xf32>
    %129 = vector.extract_strided_slice %117 {offsets = [0, 64], sizes = [8, 32], strides = [1, 1]} : vector<8x96xf32> to vector<8x32xf32>
    %130 = arith.mulf %126, %129 : vector<8x32xf32>
    %131 = arith.addf %128, %130 : vector<8x32xf32>
    %132 = math.tanh %131 : vector<8x32xf32>
    %133 = arith.subf %87, %132 : vector<8x32xf32>
    %134 = arith.mulf %127, %133 : vector<8x32xf32>
    %135 = arith.addf %132, %134 : vector<8x32xf32>
    %cst_44 = arith.constant 0.000000e+00 : f32
    %136 = vector.broadcast %cst_44 : f32 to vector<8x32xf32>
    %137 = arith.select %91, %114, %136 : vector<8x32xi1>, vector<8x32xf32>
    %c1_45 = arith.constant 1 : index
    %c0_46 = arith.constant 0 : index
    %c0_47 = arith.constant 0 : index
    %138 = vector.load %arg9[%c1_45, %c0_46, %c0_47] : memref<8x8x32xf32, #tpu.memory_space<vmem>>, vector<1x8x32xf32>
    %139 = vector.shape_cast %138 : vector<1x8x32xf32> to vector<8x32xf32>
    %140 = vector.shape_cast %137 : vector<8x32xf32> to vector<1x8x32xf32>
    tpu.vector_store %arg9[%c1_45, %c0_46, %c0_47], %140 {strides = array<i32>} : memref<8x8x32xf32, #tpu.memory_space<vmem>>, vector<1x8x32xf32>,
    %cst_48 = arith.constant 0.000000e+00 : f32
    %141 = vector.broadcast %cst_48 : f32 to vector<8x32xf32>
    %142 = arith.select %93, %135, %141 : vector<8x32xi1>, vector<8x32xf32>
    %c6 = arith.constant 6 : index
    %c0_49 = arith.constant 0 : index
    %c0_50 = arith.constant 0 : index
    %143 = vector.load %arg13[%c6, %c0_49, %c0_50] : memref<8x8x32xf32, #tpu.memory_space<vmem>>, vector<1x8x32xf32>
    %144 = vector.shape_cast %143 : vector<1x8x32xf32> to vector<8x32xf32>
    %145 = vector.shape_cast %142 : vector<8x32xf32> to vector<1x8x32xf32>
    tpu.vector_store %arg13[%c6, %c0_49, %c0_50], %145 {strides = array<i32>} : memref<8x8x32xf32, #tpu.memory_space<vmem>>, vector<1x8x32xf32>,
    %146 = arith.select %91, %114, %86 : vector<8x32xi1>, vector<8x32xf32>
    %147 = arith.select %93, %135, %87 : vector<8x32xi1>, vector<8x32xf32>
    %c16 = arith.constant 16 : index
    %c0_51 = arith.constant 0 : index
    %148 = vector.load %arg11[%c16, %c0_51] : memref<64x128xf32, #tpu.memory_space<vmem>>, vector<8x128xf32>
    %c40 = arith.constant 40 : index
    %c0_52 = arith.constant 0 : index
    %149 = vector.load %arg12[%c40, %c0_52] : memref<64x128xf32, #tpu.memory_space<vmem>>, vector<8x128xf32>
    %150 = vector.extract_strided_slice %19 {offsets = [2, 0, 0], sizes = [1, 8, 32], strides = [1, 1, 1]} : vector<8x8x32xi1> to vector<1x8x32xi1>
    %151 = vector.shape_cast %150 : vector<1x8x32xi1> to vector<8x32xi1>
    %152 = vector.extract_strided_slice %19 {offsets = [5, 0, 0], sizes = [1, 8, 32], strides = [1, 1, 1]} : vector<8x8x32xi1> to vector<1x8x32xi1>
    %153 = vector.shape_cast %152 : vector<1x8x32xi1> to vector<8x32xi1>
    %cst_53 = arith.constant dense<0.000000e+00> : vector<8x96xf32>
    %154 = tpu.matmul %146, %20, %cst_53 {dimension_numbers = #tpu.dot_dimension_numbers<[1], [0], [0], [1], [0, 0, 1, 1], [], []>} : vector<8x32xf32>, vector<32x96xf32>, vector<8x96xf32> -> vector<8x96xf32>
    %155 = vector.broadcast %22 : vector<1x96xf32> to vector<8x96xf32>
    %156 = arith.addf %154, %155 : vector<8x96xf32>
    %157 = vector.extract_strided_slice %148 {offsets = [0, 0], sizes = [8, 64], strides = [1, 1]} : vector<8x128xf32> to vector<8x64xf32>
    %158 = vector.extract_strided_slice %156 {offsets = [0, 0], sizes = [8, 64], strides = [1, 1]} : vector<8x96xf32> to vector<8x64xf32>
    %159 = arith.addf %157, %158 : vector<8x64xf32>
    %160 = arith.negf %159 : vector<8x64xf32>
    %161 = math.exp %160 : vector<8x64xf32>
    %cst_54 = arith.constant 1.000000e+00 : f32
    %162 = vector.broadcast %cst_54 : f32 to vector<8x64xf32>
    %163 = arith.addf %162, %161 : vector<8x64xf32>
    %164 = arith.divf %162, %163 : vector<8x64xf32>
    %165 = vector.extract_strided_slice %164 {offsets = [0, 0], sizes = [8, 32], strides = [1, 1]} : vector<8x64xf32> to vector<8x32xf32>
    %166 = vector.extract_strided_slice %164 {offsets = [0, 32], sizes = [8, 32], strides = [1, 1]} : vector<8x64xf32> to vector<8x32xf32>
    %167 = vector.extract_strided_slice %148 {offsets = [0, 64], sizes = [8, 32], strides = [1, 1]} : vector<8x128xf32> to vector<8x32xf32>
    %168 = vector.extract_strided_slice %156 {offsets = [0, 64], sizes = [8, 32], strides = [1, 1]} : vector<8x96xf32> to vector<8x32xf32>
    %169 = arith.mulf %165, %168 : vector<8x32xf32>
    %170 = arith.addf %167, %169 : vector<8x32xf32>
    %171 = math.tanh %170 : vector<8x32xf32>
    %172 = arith.subf %146, %171 : vector<8x32xf32>
    %173 = arith.mulf %166, %172 : vector<8x32xf32>
    %174 = arith.addf %171, %173 : vector<8x32xf32>
    %cst_55 = arith.constant dense<0.000000e+00> : vector<8x96xf32>
    %175 = tpu.matmul %147, %21, %cst_55 {dimension_numbers = #tpu.dot_dimension_numbers<[1], [0], [0], [1], [0, 0, 1, 1], [], []>} : vector<8x32xf32>, vector<32x96xf32>, vector<8x96xf32> -> vector<8x96xf32>
    %176 = vector.broadcast %23 : vector<1x96xf32> to vector<8x96xf32>
    %177 = arith.addf %175, %176 : vector<8x96xf32>
    %178 = vector.extract_strided_slice %149 {offsets = [0, 0], sizes = [8, 64], strides = [1, 1]} : vector<8x128xf32> to vector<8x64xf32>
    %179 = vector.extract_strided_slice %177 {offsets = [0, 0], sizes = [8, 64], strides = [1, 1]} : vector<8x96xf32> to vector<8x64xf32>
    %180 = arith.addf %178, %179 : vector<8x64xf32>
    %181 = arith.negf %180 : vector<8x64xf32>
    %182 = math.exp %181 : vector<8x64xf32>
    %cst_56 = arith.constant 1.000000e+00 : f32
    %183 = vector.broadcast %cst_56 : f32 to vector<8x64xf32>
    %184 = arith.addf %183, %182 : vector<8x64xf32>
    %185 = arith.divf %183, %184 : vector<8x64xf32>
    %186 = vector.extract_strided_slice %185 {offsets = [0, 0], sizes = [8, 32], strides = [1, 1]} : vector<8x64xf32> to vector<8x32xf32>
    %187 = vector.extract_strided_slice %185 {offsets = [0, 32], sizes = [8, 32], strides = [1, 1]} : vector<8x64xf32> to vector<8x32xf32>
    %188 = vector.extract_strided_slice %149 {offsets = [0, 64], sizes = [8, 32], strides = [1, 1]} : vector<8x128xf32> to vector<8x32xf32>
    %189 = vector.extract_strided_slice %177 {offsets = [0, 64], sizes = [8, 32], strides = [1, 1]} : vector<8x96xf32> to vector<8x32xf32>
    %190 = arith.mulf %186, %189 : vector<8x32xf32>
    %191 = arith.addf %188, %190 : vector<8x32xf32>
    %192 = math.tanh %191 : vector<8x32xf32>
    %193 = arith.subf %147, %192 : vector<8x32xf32>
    %194 = arith.mulf %187, %193 : vector<8x32xf32>
    %195 = arith.addf %192, %194 : vector<8x32xf32>
    %cst_57 = arith.constant 0.000000e+00 : f32
    %196 = vector.broadcast %cst_57 : f32 to vector<8x32xf32>
    %197 = arith.select %151, %174, %196 : vector<8x32xi1>, vector<8x32xf32>
    %c2 = arith.constant 2 : index
    %c0_58 = arith.constant 0 : index
    %c0_59 = arith.constant 0 : index
    %198 = vector.load %arg9[%c2, %c0_58, %c0_59] : memref<8x8x32xf32, #tpu.memory_space<vmem>>, vector<1x8x32xf32>
    %199 = vector.shape_cast %198 : vector<1x8x32xf32> to vector<8x32xf32>
    %200 = vector.shape_cast %197 : vector<8x32xf32> to vector<1x8x32xf32>
    tpu.vector_store %arg9[%c2, %c0_58, %c0_59], %200 {strides = array<i32>} : memref<8x8x32xf32, #tpu.memory_space<vmem>>, vector<1x8x32xf32>,
    %cst_60 = arith.constant 0.000000e+00 : f32
    %201 = vector.broadcast %cst_60 : f32 to vector<8x32xf32>
    %202 = arith.select %153, %195, %201 : vector<8x32xi1>, vector<8x32xf32>
    %c5 = arith.constant 5 : index
    %c0_61 = arith.constant 0 : index
    %c0_62 = arith.constant 0 : index
    %203 = vector.load %arg13[%c5, %c0_61, %c0_62] : memref<8x8x32xf32, #tpu.memory_space<vmem>>, vector<1x8x32xf32>
    %204 = vector.shape_cast %203 : vector<1x8x32xf32> to vector<8x32xf32>
    %205 = vector.shape_cast %202 : vector<8x32xf32> to vector<1x8x32xf32>
    tpu.vector_store %arg13[%c5, %c0_61, %c0_62], %205 {strides = array<i32>} : memref<8x8x32xf32, #tpu.memory_space<vmem>>, vector<1x8x32xf32>,
    %206 = arith.select %151, %174, %146 : vector<8x32xi1>, vector<8x32xf32>
    %207 = arith.select %153, %195, %147 : vector<8x32xi1>, vector<8x32xf32>
    %c24 = arith.constant 24 : index
    %c0_63 = arith.constant 0 : index
    %208 = vector.load %arg11[%c24, %c0_63] : memref<64x128xf32, #tpu.memory_space<vmem>>, vector<8x128xf32>
    %c32 = arith.constant 32 : index
    %c0_64 = arith.constant 0 : index
    %209 = vector.load %arg12[%c32, %c0_64] : memref<64x128xf32, #tpu.memory_space<vmem>>, vector<8x128xf32>
    %210 = vector.extract_strided_slice %19 {offsets = [3, 0, 0], sizes = [1, 8, 32], strides = [1, 1, 1]} : vector<8x8x32xi1> to vector<1x8x32xi1>
    %211 = vector.shape_cast %210 : vector<1x8x32xi1> to vector<8x32xi1>
    %212 = vector.extract_strided_slice %19 {offsets = [4, 0, 0], sizes = [1, 8, 32], strides = [1, 1, 1]} : vector<8x8x32xi1> to vector<1x8x32xi1>
    %213 = vector.shape_cast %212 : vector<1x8x32xi1> to vector<8x32xi1>
    %cst_65 = arith.constant dense<0.000000e+00> : vector<8x96xf32>
    %214 = tpu.matmul %206, %20, %cst_65 {dimension_numbers = #tpu.dot_dimension_numbers<[1], [0], [0], [1], [0, 0, 1, 1], [], []>} : vector<8x32xf32>, vector<32x96xf32>, vector<8x96xf32> -> vector<8x96xf32>
    %215 = vector.broadcast %22 : vector<1x96xf32> to vector<8x96xf32>
    %216 = arith.addf %214, %215 : vector<8x96xf32>
    %217 = vector.extract_strided_slice %208 {offsets = [0, 0], sizes = [8, 64], strides = [1, 1]} : vector<8x128xf32> to vector<8x64xf32>
    %218 = vector.extract_strided_slice %216 {offsets = [0, 0], sizes = [8, 64], strides = [1, 1]} : vector<8x96xf32> to vector<8x64xf32>
    %219 = arith.addf %217, %218 : vector<8x64xf32>
    %220 = arith.negf %219 : vector<8x64xf32>
    %221 = math.exp %220 : vector<8x64xf32>
    %cst_66 = arith.constant 1.000000e+00 : f32
    %222 = vector.broadcast %cst_66 : f32 to vector<8x64xf32>
    %223 = arith.addf %222, %221 : vector<8x64xf32>
    %224 = arith.divf %222, %223 : vector<8x64xf32>
    %225 = vector.extract_strided_slice %224 {offsets = [0, 0], sizes = [8, 32], strides = [1, 1]} : vector<8x64xf32> to vector<8x32xf32>
    %226 = vector.extract_strided_slice %224 {offsets = [0, 32], sizes = [8, 32], strides = [1, 1]} : vector<8x64xf32> to vector<8x32xf32>
    %227 = vector.extract_strided_slice %208 {offsets = [0, 64], sizes = [8, 32], strides = [1, 1]} : vector<8x128xf32> to vector<8x32xf32>
    %228 = vector.extract_strided_slice %216 {offsets = [0, 64], sizes = [8, 32], strides = [1, 1]} : vector<8x96xf32> to vector<8x32xf32>
    %229 = arith.mulf %225, %228 : vector<8x32xf32>
    %230 = arith.addf %227, %229 : vector<8x32xf32>
    %231 = math.tanh %230 : vector<8x32xf32>
    %232 = arith.subf %206, %231 : vector<8x32xf32>
    %233 = arith.mulf %226, %232 : vector<8x32xf32>
    %234 = arith.addf %231, %233 : vector<8x32xf32>
    %cst_67 = arith.constant dense<0.000000e+00> : vector<8x96xf32>
    %235 = tpu.matmul %207, %21, %cst_67 {dimension_numbers = #tpu.dot_dimension_numbers<[1], [0], [0], [1], [0, 0, 1, 1], [], []>} : vector<8x32xf32>, vector<32x96xf32>, vector<8x96xf32> -> vector<8x96xf32>
    %236 = vector.broadcast %23 : vector<1x96xf32> to vector<8x96xf32>
    %237 = arith.addf %235, %236 : vector<8x96xf32>
    %238 = vector.extract_strided_slice %209 {offsets = [0, 0], sizes = [8, 64], strides = [1, 1]} : vector<8x128xf32> to vector<8x64xf32>
    %239 = vector.extract_strided_slice %237 {offsets = [0, 0], sizes = [8, 64], strides = [1, 1]} : vector<8x96xf32> to vector<8x64xf32>
    %240 = arith.addf %238, %239 : vector<8x64xf32>
    %241 = arith.negf %240 : vector<8x64xf32>
    %242 = math.exp %241 : vector<8x64xf32>
    %cst_68 = arith.constant 1.000000e+00 : f32
    %243 = vector.broadcast %cst_68 : f32 to vector<8x64xf32>
    %244 = arith.addf %243, %242 : vector<8x64xf32>
    %245 = arith.divf %243, %244 : vector<8x64xf32>
    %246 = vector.extract_strided_slice %245 {offsets = [0, 0], sizes = [8, 32], strides = [1, 1]} : vector<8x64xf32> to vector<8x32xf32>
    %247 = vector.extract_strided_slice %245 {offsets = [0, 32], sizes = [8, 32], strides = [1, 1]} : vector<8x64xf32> to vector<8x32xf32>
    %248 = vector.extract_strided_slice %209 {offsets = [0, 64], sizes = [8, 32], strides = [1, 1]} : vector<8x128xf32> to vector<8x32xf32>
    %249 = vector.extract_strided_slice %237 {offsets = [0, 64], sizes = [8, 32], strides = [1, 1]} : vector<8x96xf32> to vector<8x32xf32>
    %250 = arith.mulf %246, %249 : vector<8x32xf32>
    %251 = arith.addf %248, %250 : vector<8x32xf32>
    %252 = math.tanh %251 : vector<8x32xf32>
    %253 = arith.subf %207, %252 : vector<8x32xf32>
    %254 = arith.mulf %247, %253 : vector<8x32xf32>
    %255 = arith.addf %252, %254 : vector<8x32xf32>
    %cst_69 = arith.constant 0.000000e+00 : f32
    %256 = vector.broadcast %cst_69 : f32 to vector<8x32xf32>
    %257 = arith.select %211, %234, %256 : vector<8x32xi1>, vector<8x32xf32>
    %c3 = arith.constant 3 : index
    %c0_70 = arith.constant 0 : index
    %c0_71 = arith.constant 0 : index
    %258 = vector.load %arg9[%c3, %c0_70, %c0_71] : memref<8x8x32xf32, #tpu.memory_space<vmem>>, vector<1x8x32xf32>
    %259 = vector.shape_cast %258 : vector<1x8x32xf32> to vector<8x32xf32>
    %260 = vector.shape_cast %257 : vector<8x32xf32> to vector<1x8x32xf32>
    tpu.vector_store %arg9[%c3, %c0_70, %c0_71], %260 {strides = array<i32>} : memref<8x8x32xf32, #tpu.memory_space<vmem>>, vector<1x8x32xf32>,
    %cst_72 = arith.constant 0.000000e+00 : f32
    %261 = vector.broadcast %cst_72 : f32 to vector<8x32xf32>
    %262 = arith.select %213, %255, %261 : vector<8x32xi1>, vector<8x32xf32>
    %c4 = arith.constant 4 : index
    %c0_73 = arith.constant 0 : index
    %c0_74 = arith.constant 0 : index
    %263 = vector.load %arg13[%c4, %c0_73, %c0_74] : memref<8x8x32xf32, #tpu.memory_space<vmem>>, vector<1x8x32xf32>
    %264 = vector.shape_cast %263 : vector<1x8x32xf32> to vector<8x32xf32>
    %265 = vector.shape_cast %262 : vector<8x32xf32> to vector<1x8x32xf32>
    tpu.vector_store %arg13[%c4, %c0_73, %c0_74], %265 {strides = array<i32>} : memref<8x8x32xf32, #tpu.memory_space<vmem>>, vector<1x8x32xf32>,
    %266 = arith.select %211, %234, %206 : vector<8x32xi1>, vector<8x32xf32>
    %267 = arith.select %213, %255, %207 : vector<8x32xi1>, vector<8x32xf32>
    %c32_75 = arith.constant 32 : index
    %c0_76 = arith.constant 0 : index
    %268 = vector.load %arg11[%c32_75, %c0_76] : memref<64x128xf32, #tpu.memory_space<vmem>>, vector<8x128xf32>
    %c24_77 = arith.constant 24 : index
    %c0_78 = arith.constant 0 : index
    %269 = vector.load %arg12[%c24_77, %c0_78] : memref<64x128xf32, #tpu.memory_space<vmem>>, vector<8x128xf32>
    %270 = vector.extract_strided_slice %19 {offsets = [4, 0, 0], sizes = [1, 8, 32], strides = [1, 1, 1]} : vector<8x8x32xi1> to vector<1x8x32xi1>
    %271 = vector.shape_cast %270 : vector<1x8x32xi1> to vector<8x32xi1>
    %272 = vector.extract_strided_slice %19 {offsets = [3, 0, 0], sizes = [1, 8, 32], strides = [1, 1, 1]} : vector<8x8x32xi1> to vector<1x8x32xi1>
    %273 = vector.shape_cast %272 : vector<1x8x32xi1> to vector<8x32xi1>
    %cst_79 = arith.constant dense<0.000000e+00> : vector<8x96xf32>
    %274 = tpu.matmul %266, %20, %cst_79 {dimension_numbers = #tpu.dot_dimension_numbers<[1], [0], [0], [1], [0, 0, 1, 1], [], []>} : vector<8x32xf32>, vector<32x96xf32>, vector<8x96xf32> -> vector<8x96xf32>
    %275 = vector.broadcast %22 : vector<1x96xf32> to vector<8x96xf32>
    %276 = arith.addf %274, %275 : vector<8x96xf32>
    %277 = vector.extract_strided_slice %268 {offsets = [0, 0], sizes = [8, 64], strides = [1, 1]} : vector<8x128xf32> to vector<8x64xf32>
    %278 = vector.extract_strided_slice %276 {offsets = [0, 0], sizes = [8, 64], strides = [1, 1]} : vector<8x96xf32> to vector<8x64xf32>
    %279 = arith.addf %277, %278 : vector<8x64xf32>
    %280 = arith.negf %279 : vector<8x64xf32>
    %281 = math.exp %280 : vector<8x64xf32>
    %cst_80 = arith.constant 1.000000e+00 : f32
    %282 = vector.broadcast %cst_80 : f32 to vector<8x64xf32>
    %283 = arith.addf %282, %281 : vector<8x64xf32>
    %284 = arith.divf %282, %283 : vector<8x64xf32>
    %285 = vector.extract_strided_slice %284 {offsets = [0, 0], sizes = [8, 32], strides = [1, 1]} : vector<8x64xf32> to vector<8x32xf32>
    %286 = vector.extract_strided_slice %284 {offsets = [0, 32], sizes = [8, 32], strides = [1, 1]} : vector<8x64xf32> to vector<8x32xf32>
    %287 = vector.extract_strided_slice %268 {offsets = [0, 64], sizes = [8, 32], strides = [1, 1]} : vector<8x128xf32> to vector<8x32xf32>
    %288 = vector.extract_strided_slice %276 {offsets = [0, 64], sizes = [8, 32], strides = [1, 1]} : vector<8x96xf32> to vector<8x32xf32>
    %289 = arith.mulf %285, %288 : vector<8x32xf32>
    %290 = arith.addf %287, %289 : vector<8x32xf32>
    %291 = math.tanh %290 : vector<8x32xf32>
    %292 = arith.subf %266, %291 : vector<8x32xf32>
    %293 = arith.mulf %286, %292 : vector<8x32xf32>
    %294 = arith.addf %291, %293 : vector<8x32xf32>
    %cst_81 = arith.constant dense<0.000000e+00> : vector<8x96xf32>
    %295 = tpu.matmul %267, %21, %cst_81 {dimension_numbers = #tpu.dot_dimension_numbers<[1], [0], [0], [1], [0, 0, 1, 1], [], []>} : vector<8x32xf32>, vector<32x96xf32>, vector<8x96xf32> -> vector<8x96xf32>
    %296 = vector.broadcast %23 : vector<1x96xf32> to vector<8x96xf32>
    %297 = arith.addf %295, %296 : vector<8x96xf32>
    %298 = vector.extract_strided_slice %269 {offsets = [0, 0], sizes = [8, 64], strides = [1, 1]} : vector<8x128xf32> to vector<8x64xf32>
    %299 = vector.extract_strided_slice %297 {offsets = [0, 0], sizes = [8, 64], strides = [1, 1]} : vector<8x96xf32> to vector<8x64xf32>
    %300 = arith.addf %298, %299 : vector<8x64xf32>
    %301 = arith.negf %300 : vector<8x64xf32>
    %302 = math.exp %301 : vector<8x64xf32>
    %cst_82 = arith.constant 1.000000e+00 : f32
    %303 = vector.broadcast %cst_82 : f32 to vector<8x64xf32>
    %304 = arith.addf %303, %302 : vector<8x64xf32>
    %305 = arith.divf %303, %304 : vector<8x64xf32>
    %306 = vector.extract_strided_slice %305 {offsets = [0, 0], sizes = [8, 32], strides = [1, 1]} : vector<8x64xf32> to vector<8x32xf32>
    %307 = vector.extract_strided_slice %305 {offsets = [0, 32], sizes = [8, 32], strides = [1, 1]} : vector<8x64xf32> to vector<8x32xf32>
    %308 = vector.extract_strided_slice %269 {offsets = [0, 64], sizes = [8, 32], strides = [1, 1]} : vector<8x128xf32> to vector<8x32xf32>
    %309 = vector.extract_strided_slice %297 {offsets = [0, 64], sizes = [8, 32], strides = [1, 1]} : vector<8x96xf32> to vector<8x32xf32>
    %310 = arith.mulf %306, %309 : vector<8x32xf32>
    %311 = arith.addf %308, %310 : vector<8x32xf32>
    %312 = math.tanh %311 : vector<8x32xf32>
    %313 = arith.subf %267, %312 : vector<8x32xf32>
    %314 = arith.mulf %307, %313 : vector<8x32xf32>
    %315 = arith.addf %312, %314 : vector<8x32xf32>
    %cst_83 = arith.constant 0.000000e+00 : f32
    %316 = vector.broadcast %cst_83 : f32 to vector<8x32xf32>
    %317 = arith.select %271, %294, %316 : vector<8x32xi1>, vector<8x32xf32>
    %c4_84 = arith.constant 4 : index
    %c0_85 = arith.constant 0 : index
    %c0_86 = arith.constant 0 : index
    %318 = vector.load %arg9[%c4_84, %c0_85, %c0_86] : memref<8x8x32xf32, #tpu.memory_space<vmem>>, vector<1x8x32xf32>
    %319 = vector.shape_cast %318 : vector<1x8x32xf32> to vector<8x32xf32>
    %320 = vector.shape_cast %317 : vector<8x32xf32> to vector<1x8x32xf32>
    tpu.vector_store %arg9[%c4_84, %c0_85, %c0_86], %320 {strides = array<i32>} : memref<8x8x32xf32, #tpu.memory_space<vmem>>, vector<1x8x32xf32>,
    %cst_87 = arith.constant 0.000000e+00 : f32
    %321 = vector.broadcast %cst_87 : f32 to vector<8x32xf32>
    %322 = arith.select %273, %315, %321 : vector<8x32xi1>, vector<8x32xf32>
    %c3_88 = arith.constant 3 : index
    %c0_89 = arith.constant 0 : index
    %c0_90 = arith.constant 0 : index
    %323 = vector.load %arg13[%c3_88, %c0_89, %c0_90] : memref<8x8x32xf32, #tpu.memory_space<vmem>>, vector<1x8x32xf32>
    %324 = vector.shape_cast %323 : vector<1x8x32xf32> to vector<8x32xf32>
    %325 = vector.shape_cast %322 : vector<8x32xf32> to vector<1x8x32xf32>
    tpu.vector_store %arg13[%c3_88, %c0_89, %c0_90], %325 {strides = array<i32>} : memref<8x8x32xf32, #tpu.memory_space<vmem>>, vector<1x8x32xf32>,
    %326 = arith.select %271, %294, %266 : vector<8x32xi1>, vector<8x32xf32>
    %327 = arith.select %273, %315, %267 : vector<8x32xi1>, vector<8x32xf32>
    %c40_91 = arith.constant 40 : index
    %c0_92 = arith.constant 0 : index
    %328 = vector.load %arg11[%c40_91, %c0_92] : memref<64x128xf32, #tpu.memory_space<vmem>>, vector<8x128xf32>
    %c16_93 = arith.constant 16 : index
    %c0_94 = arith.constant 0 : index
    %329 = vector.load %arg12[%c16_93, %c0_94] : memref<64x128xf32, #tpu.memory_space<vmem>>, vector<8x128xf32>
    %330 = vector.extract_strided_slice %19 {offsets = [5, 0, 0], sizes = [1, 8, 32], strides = [1, 1, 1]} : vector<8x8x32xi1> to vector<1x8x32xi1>
    %331 = vector.shape_cast %330 : vector<1x8x32xi1> to vector<8x32xi1>
    %332 = vector.extract_strided_slice %19 {offsets = [2, 0, 0], sizes = [1, 8, 32], strides = [1, 1, 1]} : vector<8x8x32xi1> to vector<1x8x32xi1>
    %333 = vector.shape_cast %332 : vector<1x8x32xi1> to vector<8x32xi1>
    %cst_95 = arith.constant dense<0.000000e+00> : vector<8x96xf32>
    %334 = tpu.matmul %326, %20, %cst_95 {dimension_numbers = #tpu.dot_dimension_numbers<[1], [0], [0], [1], [0, 0, 1, 1], [], []>} : vector<8x32xf32>, vector<32x96xf32>, vector<8x96xf32> -> vector<8x96xf32>
    %335 = vector.broadcast %22 : vector<1x96xf32> to vector<8x96xf32>
    %336 = arith.addf %334, %335 : vector<8x96xf32>
    %337 = vector.extract_strided_slice %328 {offsets = [0, 0], sizes = [8, 64], strides = [1, 1]} : vector<8x128xf32> to vector<8x64xf32>
    %338 = vector.extract_strided_slice %336 {offsets = [0, 0], sizes = [8, 64], strides = [1, 1]} : vector<8x96xf32> to vector<8x64xf32>
    %339 = arith.addf %337, %338 : vector<8x64xf32>
    %340 = arith.negf %339 : vector<8x64xf32>
    %341 = math.exp %340 : vector<8x64xf32>
    %cst_96 = arith.constant 1.000000e+00 : f32
    %342 = vector.broadcast %cst_96 : f32 to vector<8x64xf32>
    %343 = arith.addf %342, %341 : vector<8x64xf32>
    %344 = arith.divf %342, %343 : vector<8x64xf32>
    %345 = vector.extract_strided_slice %344 {offsets = [0, 0], sizes = [8, 32], strides = [1, 1]} : vector<8x64xf32> to vector<8x32xf32>
    %346 = vector.extract_strided_slice %344 {offsets = [0, 32], sizes = [8, 32], strides = [1, 1]} : vector<8x64xf32> to vector<8x32xf32>
    %347 = vector.extract_strided_slice %328 {offsets = [0, 64], sizes = [8, 32], strides = [1, 1]} : vector<8x128xf32> to vector<8x32xf32>
    %348 = vector.extract_strided_slice %336 {offsets = [0, 64], sizes = [8, 32], strides = [1, 1]} : vector<8x96xf32> to vector<8x32xf32>
    %349 = arith.mulf %345, %348 : vector<8x32xf32>
    %350 = arith.addf %347, %349 : vector<8x32xf32>
    %351 = math.tanh %350 : vector<8x32xf32>
    %352 = arith.subf %326, %351 : vector<8x32xf32>
    %353 = arith.mulf %346, %352 : vector<8x32xf32>
    %354 = arith.addf %351, %353 : vector<8x32xf32>
    %cst_97 = arith.constant dense<0.000000e+00> : vector<8x96xf32>
    %355 = tpu.matmul %327, %21, %cst_97 {dimension_numbers = #tpu.dot_dimension_numbers<[1], [0], [0], [1], [0, 0, 1, 1], [], []>} : vector<8x32xf32>, vector<32x96xf32>, vector<8x96xf32> -> vector<8x96xf32>
    %356 = vector.broadcast %23 : vector<1x96xf32> to vector<8x96xf32>
    %357 = arith.addf %355, %356 : vector<8x96xf32>
    %358 = vector.extract_strided_slice %329 {offsets = [0, 0], sizes = [8, 64], strides = [1, 1]} : vector<8x128xf32> to vector<8x64xf32>
    %359 = vector.extract_strided_slice %357 {offsets = [0, 0], sizes = [8, 64], strides = [1, 1]} : vector<8x96xf32> to vector<8x64xf32>
    %360 = arith.addf %358, %359 : vector<8x64xf32>
    %361 = arith.negf %360 : vector<8x64xf32>
    %362 = math.exp %361 : vector<8x64xf32>
    %cst_98 = arith.constant 1.000000e+00 : f32
    %363 = vector.broadcast %cst_98 : f32 to vector<8x64xf32>
    %364 = arith.addf %363, %362 : vector<8x64xf32>
    %365 = arith.divf %363, %364 : vector<8x64xf32>
    %366 = vector.extract_strided_slice %365 {offsets = [0, 0], sizes = [8, 32], strides = [1, 1]} : vector<8x64xf32> to vector<8x32xf32>
    %367 = vector.extract_strided_slice %365 {offsets = [0, 32], sizes = [8, 32], strides = [1, 1]} : vector<8x64xf32> to vector<8x32xf32>
    %368 = vector.extract_strided_slice %329 {offsets = [0, 64], sizes = [8, 32], strides = [1, 1]} : vector<8x128xf32> to vector<8x32xf32>
    %369 = vector.extract_strided_slice %357 {offsets = [0, 64], sizes = [8, 32], strides = [1, 1]} : vector<8x96xf32> to vector<8x32xf32>
    %370 = arith.mulf %366, %369 : vector<8x32xf32>
    %371 = arith.addf %368, %370 : vector<8x32xf32>
    %372 = math.tanh %371 : vector<8x32xf32>
    %373 = arith.subf %327, %372 : vector<8x32xf32>
    %374 = arith.mulf %367, %373 : vector<8x32xf32>
    %375 = arith.addf %372, %374 : vector<8x32xf32>
    %cst_99 = arith.constant 0.000000e+00 : f32
    %376 = vector.broadcast %cst_99 : f32 to vector<8x32xf32>
    %377 = arith.select %331, %354, %376 : vector<8x32xi1>, vector<8x32xf32>
    %c5_100 = arith.constant 5 : index
    %c0_101 = arith.constant 0 : index
    %c0_102 = arith.constant 0 : index
    %378 = vector.load %arg9[%c5_100, %c0_101, %c0_102] : memref<8x8x32xf32, #tpu.memory_space<vmem>>, vector<1x8x32xf32>
    %379 = vector.shape_cast %378 : vector<1x8x32xf32> to vector<8x32xf32>
    %380 = vector.shape_cast %377 : vector<8x32xf32> to vector<1x8x32xf32>
    tpu.vector_store %arg9[%c5_100, %c0_101, %c0_102], %380 {strides = array<i32>} : memref<8x8x32xf32, #tpu.memory_space<vmem>>, vector<1x8x32xf32>,
    %cst_103 = arith.constant 0.000000e+00 : f32
    %381 = vector.broadcast %cst_103 : f32 to vector<8x32xf32>
    %382 = arith.select %333, %375, %381 : vector<8x32xi1>, vector<8x32xf32>
    %c2_104 = arith.constant 2 : index
    %c0_105 = arith.constant 0 : index
    %c0_106 = arith.constant 0 : index
    %383 = vector.load %arg13[%c2_104, %c0_105, %c0_106] : memref<8x8x32xf32, #tpu.memory_space<vmem>>, vector<1x8x32xf32>
    %384 = vector.shape_cast %383 : vector<1x8x32xf32> to vector<8x32xf32>
    %385 = vector.shape_cast %382 : vector<8x32xf32> to vector<1x8x32xf32>
    tpu.vector_store %arg13[%c2_104, %c0_105, %c0_106], %385 {strides = array<i32>} : memref<8x8x32xf32, #tpu.memory_space<vmem>>, vector<1x8x32xf32>,
    %386 = arith.select %331, %354, %326 : vector<8x32xi1>, vector<8x32xf32>
    %387 = arith.select %333, %375, %327 : vector<8x32xi1>, vector<8x32xf32>
    %c48_107 = arith.constant 48 : index
    %c0_108 = arith.constant 0 : index
    %388 = vector.load %arg11[%c48_107, %c0_108] : memref<64x128xf32, #tpu.memory_space<vmem>>, vector<8x128xf32>
    %c8_109 = arith.constant 8 : index
    %c0_110 = arith.constant 0 : index
    %389 = vector.load %arg12[%c8_109, %c0_110] : memref<64x128xf32, #tpu.memory_space<vmem>>, vector<8x128xf32>
    %390 = vector.extract_strided_slice %19 {offsets = [6, 0, 0], sizes = [1, 8, 32], strides = [1, 1, 1]} : vector<8x8x32xi1> to vector<1x8x32xi1>
    %391 = vector.shape_cast %390 : vector<1x8x32xi1> to vector<8x32xi1>
    %392 = vector.extract_strided_slice %19 {offsets = [1, 0, 0], sizes = [1, 8, 32], strides = [1, 1, 1]} : vector<8x8x32xi1> to vector<1x8x32xi1>
    %393 = vector.shape_cast %392 : vector<1x8x32xi1> to vector<8x32xi1>
    %cst_111 = arith.constant dense<0.000000e+00> : vector<8x96xf32>
    %394 = tpu.matmul %386, %20, %cst_111 {dimension_numbers = #tpu.dot_dimension_numbers<[1], [0], [0], [1], [0, 0, 1, 1], [], []>} : vector<8x32xf32>, vector<32x96xf32>, vector<8x96xf32> -> vector<8x96xf32>
    %395 = vector.broadcast %22 : vector<1x96xf32> to vector<8x96xf32>
    %396 = arith.addf %394, %395 : vector<8x96xf32>
    %397 = vector.extract_strided_slice %388 {offsets = [0, 0], sizes = [8, 64], strides = [1, 1]} : vector<8x128xf32> to vector<8x64xf32>
    %398 = vector.extract_strided_slice %396 {offsets = [0, 0], sizes = [8, 64], strides = [1, 1]} : vector<8x96xf32> to vector<8x64xf32>
    %399 = arith.addf %397, %398 : vector<8x64xf32>
    %400 = arith.negf %399 : vector<8x64xf32>
    %401 = math.exp %400 : vector<8x64xf32>
    %cst_112 = arith.constant 1.000000e+00 : f32
    %402 = vector.broadcast %cst_112 : f32 to vector<8x64xf32>
    %403 = arith.addf %402, %401 : vector<8x64xf32>
    %404 = arith.divf %402, %403 : vector<8x64xf32>
    %405 = vector.extract_strided_slice %404 {offsets = [0, 0], sizes = [8, 32], strides = [1, 1]} : vector<8x64xf32> to vector<8x32xf32>
    %406 = vector.extract_strided_slice %404 {offsets = [0, 32], sizes = [8, 32], strides = [1, 1]} : vector<8x64xf32> to vector<8x32xf32>
    %407 = vector.extract_strided_slice %388 {offsets = [0, 64], sizes = [8, 32], strides = [1, 1]} : vector<8x128xf32> to vector<8x32xf32>
    %408 = vector.extract_strided_slice %396 {offsets = [0, 64], sizes = [8, 32], strides = [1, 1]} : vector<8x96xf32> to vector<8x32xf32>
    %409 = arith.mulf %405, %408 : vector<8x32xf32>
    %410 = arith.addf %407, %409 : vector<8x32xf32>
    %411 = math.tanh %410 : vector<8x32xf32>
    %412 = arith.subf %386, %411 : vector<8x32xf32>
    %413 = arith.mulf %406, %412 : vector<8x32xf32>
    %414 = arith.addf %411, %413 : vector<8x32xf32>
    %cst_113 = arith.constant dense<0.000000e+00> : vector<8x96xf32>
    %415 = tpu.matmul %387, %21, %cst_113 {dimension_numbers = #tpu.dot_dimension_numbers<[1], [0], [0], [1], [0, 0, 1, 1], [], []>} : vector<8x32xf32>, vector<32x96xf32>, vector<8x96xf32> -> vector<8x96xf32>
    %416 = vector.broadcast %23 : vector<1x96xf32> to vector<8x96xf32>
    %417 = arith.addf %415, %416 : vector<8x96xf32>
    %418 = vector.extract_strided_slice %389 {offsets = [0, 0], sizes = [8, 64], strides = [1, 1]} : vector<8x128xf32> to vector<8x64xf32>
    %419 = vector.extract_strided_slice %417 {offsets = [0, 0], sizes = [8, 64], strides = [1, 1]} : vector<8x96xf32> to vector<8x64xf32>
    %420 = arith.addf %418, %419 : vector<8x64xf32>
    %421 = arith.negf %420 : vector<8x64xf32>
    %422 = math.exp %421 : vector<8x64xf32>
    %cst_114 = arith.constant 1.000000e+00 : f32
    %423 = vector.broadcast %cst_114 : f32 to vector<8x64xf32>
    %424 = arith.addf %423, %422 : vector<8x64xf32>
    %425 = arith.divf %423, %424 : vector<8x64xf32>
    %426 = vector.extract_strided_slice %425 {offsets = [0, 0], sizes = [8, 32], strides = [1, 1]} : vector<8x64xf32> to vector<8x32xf32>
    %427 = vector.extract_strided_slice %425 {offsets = [0, 32], sizes = [8, 32], strides = [1, 1]} : vector<8x64xf32> to vector<8x32xf32>
    %428 = vector.extract_strided_slice %389 {offsets = [0, 64], sizes = [8, 32], strides = [1, 1]} : vector<8x128xf32> to vector<8x32xf32>
    %429 = vector.extract_strided_slice %417 {offsets = [0, 64], sizes = [8, 32], strides = [1, 1]} : vector<8x96xf32> to vector<8x32xf32>
    %430 = arith.mulf %426, %429 : vector<8x32xf32>
    %431 = arith.addf %428, %430 : vector<8x32xf32>
    %432 = math.tanh %431 : vector<8x32xf32>
    %433 = arith.subf %387, %432 : vector<8x32xf32>
    %434 = arith.mulf %427, %433 : vector<8x32xf32>
    %435 = arith.addf %432, %434 : vector<8x32xf32>
    %cst_115 = arith.constant 0.000000e+00 : f32
    %436 = vector.broadcast %cst_115 : f32 to vector<8x32xf32>
    %437 = arith.select %391, %414, %436 : vector<8x32xi1>, vector<8x32xf32>
    %c6_116 = arith.constant 6 : index
    %c0_117 = arith.constant 0 : index
    %c0_118 = arith.constant 0 : index
    %438 = vector.load %arg9[%c6_116, %c0_117, %c0_118] : memref<8x8x32xf32, #tpu.memory_space<vmem>>, vector<1x8x32xf32>
    %439 = vector.shape_cast %438 : vector<1x8x32xf32> to vector<8x32xf32>
    %440 = vector.shape_cast %437 : vector<8x32xf32> to vector<1x8x32xf32>
    tpu.vector_store %arg9[%c6_116, %c0_117, %c0_118], %440 {strides = array<i32>} : memref<8x8x32xf32, #tpu.memory_space<vmem>>, vector<1x8x32xf32>,
    %cst_119 = arith.constant 0.000000e+00 : f32
    %441 = vector.broadcast %cst_119 : f32 to vector<8x32xf32>
    %442 = arith.select %393, %435, %441 : vector<8x32xi1>, vector<8x32xf32>
    %c1_120 = arith.constant 1 : index
    %c0_121 = arith.constant 0 : index
    %c0_122 = arith.constant 0 : index
    %443 = vector.load %arg13[%c1_120, %c0_121, %c0_122] : memref<8x8x32xf32, #tpu.memory_space<vmem>>, vector<1x8x32xf32>
    %444 = vector.shape_cast %443 : vector<1x8x32xf32> to vector<8x32xf32>
    %445 = vector.shape_cast %442 : vector<8x32xf32> to vector<1x8x32xf32>
    tpu.vector_store %arg13[%c1_120, %c0_121, %c0_122], %445 {strides = array<i32>} : memref<8x8x32xf32, #tpu.memory_space<vmem>>, vector<1x8x32xf32>,
    %446 = arith.select %391, %414, %386 : vector<8x32xi1>, vector<8x32xf32>
    %447 = arith.select %393, %435, %387 : vector<8x32xi1>, vector<8x32xf32>
    %c56_123 = arith.constant 56 : index
    %c0_124 = arith.constant 0 : index
    %448 = vector.load %arg11[%c56_123, %c0_124] : memref<64x128xf32, #tpu.memory_space<vmem>>, vector<8x128xf32>
    %c0_125 = arith.constant 0 : index
    %c0_126 = arith.constant 0 : index
    %449 = vector.load %arg12[%c0_125, %c0_126] : memref<64x128xf32, #tpu.memory_space<vmem>>, vector<8x128xf32>
    %450 = vector.extract_strided_slice %19 {offsets = [7, 0, 0], sizes = [1, 8, 32], strides = [1, 1, 1]} : vector<8x8x32xi1> to vector<1x8x32xi1>
    %451 = vector.shape_cast %450 : vector<1x8x32xi1> to vector<8x32xi1>
    %452 = vector.extract_strided_slice %19 {offsets = [0, 0, 0], sizes = [1, 8, 32], strides = [1, 1, 1]} : vector<8x8x32xi1> to vector<1x8x32xi1>
    %453 = vector.shape_cast %452 : vector<1x8x32xi1> to vector<8x32xi1>
    %cst_127 = arith.constant dense<0.000000e+00> : vector<8x96xf32>
    %454 = tpu.matmul %446, %20, %cst_127 {dimension_numbers = #tpu.dot_dimension_numbers<[1], [0], [0], [1], [0, 0, 1, 1], [], []>} : vector<8x32xf32>, vector<32x96xf32>, vector<8x96xf32> -> vector<8x96xf32>
    %455 = vector.broadcast %22 : vector<1x96xf32> to vector<8x96xf32>
    %456 = arith.addf %454, %455 : vector<8x96xf32>
    %457 = vector.extract_strided_slice %448 {offsets = [0, 0], sizes = [8, 64], strides = [1, 1]} : vector<8x128xf32> to vector<8x64xf32>
    %458 = vector.extract_strided_slice %456 {offsets = [0, 0], sizes = [8, 64], strides = [1, 1]} : vector<8x96xf32> to vector<8x64xf32>
    %459 = arith.addf %457, %458 : vector<8x64xf32>
    %460 = arith.negf %459 : vector<8x64xf32>
    %461 = math.exp %460 : vector<8x64xf32>
    %cst_128 = arith.constant 1.000000e+00 : f32
    %462 = vector.broadcast %cst_128 : f32 to vector<8x64xf32>
    %463 = arith.addf %462, %461 : vector<8x64xf32>
    %464 = arith.divf %462, %463 : vector<8x64xf32>
    %465 = vector.extract_strided_slice %464 {offsets = [0, 0], sizes = [8, 32], strides = [1, 1]} : vector<8x64xf32> to vector<8x32xf32>
    %466 = vector.extract_strided_slice %464 {offsets = [0, 32], sizes = [8, 32], strides = [1, 1]} : vector<8x64xf32> to vector<8x32xf32>
    %467 = vector.extract_strided_slice %448 {offsets = [0, 64], sizes = [8, 32], strides = [1, 1]} : vector<8x128xf32> to vector<8x32xf32>
    %468 = vector.extract_strided_slice %456 {offsets = [0, 64], sizes = [8, 32], strides = [1, 1]} : vector<8x96xf32> to vector<8x32xf32>
    %469 = arith.mulf %465, %468 : vector<8x32xf32>
    %470 = arith.addf %467, %469 : vector<8x32xf32>
    %471 = math.tanh %470 : vector<8x32xf32>
    %472 = arith.subf %446, %471 : vector<8x32xf32>
    %473 = arith.mulf %466, %472 : vector<8x32xf32>
    %474 = arith.addf %471, %473 : vector<8x32xf32>
    %cst_129 = arith.constant dense<0.000000e+00> : vector<8x96xf32>
    %475 = tpu.matmul %447, %21, %cst_129 {dimension_numbers = #tpu.dot_dimension_numbers<[1], [0], [0], [1], [0, 0, 1, 1], [], []>} : vector<8x32xf32>, vector<32x96xf32>, vector<8x96xf32> -> vector<8x96xf32>
    %476 = vector.broadcast %23 : vector<1x96xf32> to vector<8x96xf32>
    %477 = arith.addf %475, %476 : vector<8x96xf32>
    %478 = vector.extract_strided_slice %449 {offsets = [0, 0], sizes = [8, 64], strides = [1, 1]} : vector<8x128xf32> to vector<8x64xf32>
    %479 = vector.extract_strided_slice %477 {offsets = [0, 0], sizes = [8, 64], strides = [1, 1]} : vector<8x96xf32> to vector<8x64xf32>
    %480 = arith.addf %478, %479 : vector<8x64xf32>
    %481 = arith.negf %480 : vector<8x64xf32>
    %482 = math.exp %481 : vector<8x64xf32>
    %cst_130 = arith.constant 1.000000e+00 : f32
    %483 = vector.broadcast %cst_130 : f32 to vector<8x64xf32>
    %484 = arith.addf %483, %482 : vector<8x64xf32>
    %485 = arith.divf %483, %484 : vector<8x64xf32>
    %486 = vector.extract_strided_slice %485 {offsets = [0, 0], sizes = [8, 32], strides = [1, 1]} : vector<8x64xf32> to vector<8x32xf32>
    %487 = vector.extract_strided_slice %485 {offsets = [0, 32], sizes = [8, 32], strides = [1, 1]} : vector<8x64xf32> to vector<8x32xf32>
    %488 = vector.extract_strided_slice %449 {offsets = [0, 64], sizes = [8, 32], strides = [1, 1]} : vector<8x128xf32> to vector<8x32xf32>
    %489 = vector.extract_strided_slice %477 {offsets = [0, 64], sizes = [8, 32], strides = [1, 1]} : vector<8x96xf32> to vector<8x32xf32>
    %490 = arith.mulf %486, %489 : vector<8x32xf32>
    %491 = arith.addf %488, %490 : vector<8x32xf32>
    %492 = math.tanh %491 : vector<8x32xf32>
    %493 = arith.subf %447, %492 : vector<8x32xf32>
    %494 = arith.mulf %487, %493 : vector<8x32xf32>
    %495 = arith.addf %492, %494 : vector<8x32xf32>
    %cst_131 = arith.constant 0.000000e+00 : f32
    %496 = vector.broadcast %cst_131 : f32 to vector<8x32xf32>
    %497 = arith.select %451, %474, %496 : vector<8x32xi1>, vector<8x32xf32>
    %c7_132 = arith.constant 7 : index
    %c0_133 = arith.constant 0 : index
    %c0_134 = arith.constant 0 : index
    %498 = vector.load %arg9[%c7_132, %c0_133, %c0_134] : memref<8x8x32xf32, #tpu.memory_space<vmem>>, vector<1x8x32xf32>
    %499 = vector.shape_cast %498 : vector<1x8x32xf32> to vector<8x32xf32>
    %500 = vector.shape_cast %497 : vector<8x32xf32> to vector<1x8x32xf32>
    tpu.vector_store %arg9[%c7_132, %c0_133, %c0_134], %500 {strides = array<i32>} : memref<8x8x32xf32, #tpu.memory_space<vmem>>, vector<1x8x32xf32>,
    %cst_135 = arith.constant 0.000000e+00 : f32
    %501 = vector.broadcast %cst_135 : f32 to vector<8x32xf32>
    %502 = arith.select %453, %495, %501 : vector<8x32xi1>, vector<8x32xf32>
    %c0_136 = arith.constant 0 : index
    %c0_137 = arith.constant 0 : index
    %c0_138 = arith.constant 0 : index
    %503 = vector.load %arg13[%c0_136, %c0_137, %c0_138] : memref<8x8x32xf32, #tpu.memory_space<vmem>>, vector<1x8x32xf32>
    %504 = vector.shape_cast %503 : vector<1x8x32xf32> to vector<8x32xf32>
    %505 = vector.shape_cast %502 : vector<8x32xf32> to vector<1x8x32xf32>
    tpu.vector_store %arg13[%c0_136, %c0_137, %c0_138], %505 {strides = array<i32>} : memref<8x8x32xf32, #tpu.memory_space<vmem>>, vector<1x8x32xf32>,
    %506 = arith.select %451, %474, %446 : vector<8x32xi1>, vector<8x32xf32>
    %507 = arith.select %453, %495, %447 : vector<8x32xi1>, vector<8x32xf32>
    %c0_139 = arith.constant 0 : index
    %c0_140 = arith.constant 0 : index
    %c0_141 = arith.constant 0 : index
    %508 = vector.load %arg9[%c0_139, %c0_140, %c0_141] : memref<8x8x32xf32, #tpu.memory_space<vmem>>, vector<8x8x32xf32>
    %c0_142 = arith.constant 0 : index
    %c0_143 = arith.constant 0 : index
    %c0_144 = arith.constant 0 : index
    %509 = vector.load %arg13[%c0_142, %c0_143, %c0_144] : memref<8x8x32xf32, #tpu.memory_space<vmem>>, vector<8x8x32xf32>
    %510 = arith.addf %508, %509 : vector<8x8x32xf32>
    %c0_145 = arith.constant 0 : index
    %c0_146 = arith.constant 0 : index
    %c0_147 = arith.constant 0 : index
    %511 = vector.load %arg9[%c0_145, %c0_146, %c0_147] : memref<8x8x32xf32, #tpu.memory_space<vmem>>, vector<8x8x32xf32>
    tpu.vector_store %arg9[%c0_145, %c0_146, %c0_147], %510 {strides = array<i32>} : memref<8x8x32xf32, #tpu.memory_space<vmem>>, vector<8x8x32xf32>,
    %c0_148 = arith.constant 0 : index
    %c0_149 = arith.constant 0 : index
    %c0_150 = arith.constant 0 : index
    %512 = vector.load %arg10[%c0_148, %c0_149, %c0_150] : memref<2x8x32xf32, #tpu.memory_space<vmem>>, vector<1x8x32xf32>
    %513 = vector.shape_cast %512 : vector<1x8x32xf32> to vector<8x32xf32>
    %514 = vector.shape_cast %506 : vector<8x32xf32> to vector<1x8x32xf32>
    tpu.vector_store %arg10[%c0_148, %c0_149, %c0_150], %514 {strides = array<i32>} : memref<2x8x32xf32, #tpu.memory_space<vmem>>, vector<1x8x32xf32>,
    %c1_151 = arith.constant 1 : index
    %c0_152 = arith.constant 0 : index
    %c0_153 = arith.constant 0 : index
    %515 = vector.load %arg10[%c1_151, %c0_152, %c0_153] : memref<2x8x32xf32, #tpu.memory_space<vmem>>, vector<1x8x32xf32>
    %516 = vector.shape_cast %515 : vector<1x8x32xf32> to vector<8x32xf32>
    %517 = vector.shape_cast %507 : vector<8x32xf32> to vector<1x8x32xf32>
    tpu.vector_store %arg10[%c1_151, %c0_152, %c0_153], %517 {strides = array<i32>} : memref<2x8x32xf32, #tpu.memory_space<vmem>>, vector<1x8x32xf32>,
    return
  }
}

</mosaic_0001>

<llo_original>
// kernel: tpu_custom_call.1
$region0: #{tpu_custom_call.1}
  #allocation0 [shape = 'u32[]', space=smem, size = 0x4, offset = 0x4, fixed_abs, tag = 'smem constant byte address 0x4 - core index']
  #allocation1 [shape = 'u32[144,128]{1,0:T(1,128)}', space=vmem, size = 0x12000, scoped, tag = 'internal scratch']
  #allocation2 [shape = 'f32[64,128]{1,0:T(8,128)}', space=vmem, size = 0x8000, scoped, tag = 'scratch operand']
  #allocation3 [shape = 'f32[64,128]{1,0:T(8,128)}', space=vmem, size = 0x8000, scoped, tag = 'scratch operand']
  #allocation4 [shape = 'f32[8,8,32]{2,1,0:T(8,128)}', space=vmem, size = 0x8000, scoped, tag = 'scratch operand']
  %s0 = inlined_call_operand.vmem [shape: s32[64,1], index: 0, kind: input, shape index: {}]
  %s1 = inlined_call_operand.vmem [shape: s32[8,1], index: 1, kind: input, shape index: {}]
  %s2 = inlined_call_operand.vmem [shape: f32[2,8,32], index: 2, kind: input, shape index: {}]
  %s3 = inlined_call_operand.hbm [shape: f32[64,256], index: 3, kind: input, shape index: {}]
  %s4 = inlined_call_operand.vmem [shape: f32[1,256], index: 4, kind: input, shape index: {}]
  %s5 = inlined_call_operand.vmem [shape: f32[32,96], index: 5, kind: input, shape index: {}]
  %s6 = inlined_call_operand.vmem [shape: f32[32,96], index: 6, kind: input, shape index: {}]
  %s7 = inlined_call_operand.vmem [shape: f32[1,96], index: 7, kind: input, shape index: {}]
  %s8 = inlined_call_operand.vmem [shape: f32[1,96], index: 8, kind: input, shape index: {}]
  %s9 = inlined_call_operand.hbm [shape: f32[8,8,32], index: 9, kind: output, shape index: {0}]
  %s10 = inlined_call_operand.hbm [shape: f32[2,8,32], index: 10, kind: output, shape index: {1}]
  %11 = xla_tuple %s9, %s10
  %s12 = sld [smem:[#allocation0]]
  $region58: #{tpu_custom_call.1} parent=0
    _
  %s14 = ssub.s32 1, %s12
  %s15 = scalar_select 0, %s14, %s12
  $region1: #{tpu_custom_call.1} parent=0
    #allocation5 [shape = 'u8[65536]{0}', space=vmem, size = 0x10000, scoped, tag = 'input window, operand 3, single buffered']
    #allocation6 [shape = 's32[1]{0}', space=sflag, size = 0x4, scoped, tag = 'scoped memory for tpu_custom_call.1']
    #allocation7 [shape = 's32[1]{0}', space=sflag, size = 0x4, scoped, tag = 'scoped memory for tpu_custom_call.1']
    #allocation8 [shape = 'u8[32768]{0}', space=vmem, size = 0x8000, scoped, tag = 'output window, operand 0, single buffered']
    #allocation9 [shape = 'u8[8192]{0}', space=vmem, size = 0x2000, scoped, tag = 'output window, operand 1, single buffered']
    #allocation10 [shape = 's32[1]{0}', space=sflag, size = 0x4, scoped, tag = 'scoped memory for tpu_custom_call.1']
    %16 = vsyncpa [#allocation6], 0
    %17 = vsyncpa [#allocation7], 0
    %18 = vsyncpa [#allocation10], 0
    // Predicated region
    $region2: #{tpu_custom_call.1} parent=1 // pred_check
      _
    $region3: #{tpu_custom_call.1} parent=1 // pred_check_branch
      %20 = sbr.rel (0) target = $region5
    $region4: #{tpu_custom_call.1} parent=1 // pred_region
      _
    $region5: #{tpu_custom_call.1} parent=1 // pred_fallthru
      _
    // Predicated region
    $region6: #{tpu_custom_call.1} parent=1 // pred_check
      _
    $region7: #{tpu_custom_call.1} parent=1 // pred_check_branch
      %22 = sbr.rel (0) target = $region9
    $region8: #{tpu_custom_call.1} parent=1 // pred_region
      _
    $region9: #{tpu_custom_call.1} parent=1 // pred_fallthru
      _
    // Predicated region
    $region10: #{tpu_custom_call.1} parent=1 // pred_check
      _
    $region11: #{tpu_custom_call.1} parent=1 // pred_check_branch
      %24 = sbr.rel (0) target = $region13
    $region12: #{tpu_custom_call.1} parent=1 // pred_region
      _
    $region13: #{tpu_custom_call.1} parent=1 // pred_fallthru
      _
    // Predicated region
    $region14: #{tpu_custom_call.1} parent=1 // pred_check
      _
    $region15: #{tpu_custom_call.1} parent=1 // pred_check_branch
      %26 = sbr.rel (0) target = $region17
    $region16: #{tpu_custom_call.1} parent=1 // pred_region
      %s28 = ssub.s32 2048, 2048
      %29 = vsyncadd [#allocation6], %s28
      %s30 = sshll.u32 [#allocation5], 4
      %s31 = int_to_ptr.vmem [resolvable:$true] %s30
      %36 = dma.hbm_to_vmem [thread:$0]  %s3, 2048, %s31, [#allocation6], 256, 256, 16
    $region17: #{tpu_custom_call.1} parent=1 // pred_fallthru
      _
    // Predicated region
    $region18: #{tpu_custom_call.1} parent=1 // pred_check
      _
    $region19: #{tpu_custom_call.1} parent=1 // pred_check_branch
      %38 = sbr.rel (0) target = $region21
    $region20: #{tpu_custom_call.1} parent=1 // pred_region
      _
    $region21: #{tpu_custom_call.1} parent=1 // pred_fallthru
      _
    // Predicated region
    $region22: #{tpu_custom_call.1} parent=1 // pred_check
      _
    $region23: #{tpu_custom_call.1} parent=1 // pred_check_branch
      %40 = sbr.rel (0) target = $region25
    $region24: #{tpu_custom_call.1} parent=1 // pred_region
      _
    $region25: #{tpu_custom_call.1} parent=1 // pred_fallthru
      _
    // Predicated region
    $region26: #{tpu_custom_call.1} parent=1 // pred_check
      _
    $region27: #{tpu_custom_call.1} parent=1 // pred_check_branch
      %42 = sbr.rel (0) target = $region29
    $region28: #{tpu_custom_call.1} parent=1 // pred_region
      _
    $region29: #{tpu_custom_call.1} parent=1 // pred_fallthru
      _
    // Predicated region
    $region30: #{tpu_custom_call.1} parent=1 // pred_check
      _
    $region31: #{tpu_custom_call.1} parent=1 // pred_check_branch
      %44 = sbr.rel (0) target = $region33
    $region32: #{tpu_custom_call.1} parent=1 // pred_region
      _
    $region33: #{tpu_custom_call.1} parent=1 // pred_fallthru
      _
    // Predicated region
    $region34: #{tpu_custom_call.1} parent=1 // pred_check
      _
    $region35: #{tpu_custom_call.1} parent=1 // pred_check_branch
      %46 = sbr.rel (0) target = $region37
    $region36: #{tpu_custom_call.1} parent=1 // pred_region
      _
    $region37: #{tpu_custom_call.1} parent=1 // pred_fallthru
      _
    // Predicated region
    $region38: #{tpu_custom_call.1} parent=1 // pred_check
      _
    $region39: #{tpu_custom_call.1} parent=1 // pred_check_branch
      %48 = sbr.rel (0) target = $region41
    $region40: #{tpu_custom_call.1} parent=1 // pred_region
      %49 = dma.done [#allocation6], 2048
    $region41: #{tpu_custom_call.1} parent=1 // pred_fallthru
      _
    %v50 = vld [vmem:[%s0] sm:$0xff]
    %v51 = vld [vmem:[%s0 + $0x8] sm:$0xff]
    %v52 = vld [vmem:[%s0 + $0x10] sm:$0xff]
    %v53 = vld [vmem:[%s0 + $0x18] sm:$0xff]
    %v54 = vld [vmem:[%s0 + $0x20] sm:$0xff]
    %v55 = vld [vmem:[%s0 + $0x28] sm:$0xff]
    %v56 = vld [vmem:[%s0 + $0x30] sm:$0xff]
    %v57 = vld [vmem:[%s0 + $0x38] sm:$0xff]
    %v58 = vlaneseq
    %v59 = vand.u32 %v58, 127
    %60 = vset.pattern.permute.xlu0 0
    %61 = vperm.xlu0 %60, %v50
    %v62 = vpop.permute.xlu0 %61
    %63 = vset.pattern.permute.xlu0 0
    %64 = vperm.xlu0 %63, %v51
    %v65 = vpop.permute.xlu0 %64
    %66 = vset.pattern.permute.xlu0 0
    %67 = vperm.xlu0 %66, %v52
    %v68 = vpop.permute.xlu0 %67
    %69 = vset.pattern.permute.xlu0 0
    %70 = vperm.xlu0 %69, %v53
    %v71 = vpop.permute.xlu0 %70
    %72 = vset.pattern.permute.xlu0 0
    %73 = vperm.xlu0 %72, %v54
    %v74 = vpop.permute.xlu0 %73
    %75 = vset.pattern.permute.xlu0 0
    %76 = vperm.xlu0 %75, %v55
    %v77 = vpop.permute.xlu0 %76
    %78 = vset.pattern.permute.xlu0 0
    %79 = vperm.xlu0 %78, %v56
    %v80 = vpop.permute.xlu0 %79
    %81 = vset.pattern.permute.xlu0 0
    %82 = vperm.xlu0 %81, %v57
    %v83 = vpop.permute.xlu0 %82
    %vm84 = vcmp.eq.s32.totalorder %v62, %v59
    %vm85 = vcmp.eq.s32.totalorder %v65, %v59
    %vm86 = vcmp.eq.s32.totalorder %v68, %v59
    %vm87 = vcmp.eq.s32.totalorder %v71, %v59
    %vm88 = vcmp.eq.s32.totalorder %v74, %v59
    %vm89 = vcmp.eq.s32.totalorder %v77, %v59
    %vm90 = vcmp.eq.s32.totalorder %v80, %v59
    %vm91 = vcmp.eq.s32.totalorder %v83, %v59
    %v92 = vsel %vm84, 1, 0
    %v93 = vsel %vm85, 1, 0
    %v94 = vsel %vm86, 1, 0
    %v95 = vsel %vm87, 1, 0
    %v96 = vsel %vm88, 1, 0
    %v97 = vsel %vm89, 1, 0
    %v98 = vsel %vm90, 1, 0
    %v99 = vsel %vm91, 1, 0
    %v100 = vcvt.s32.f32 %v92
    %v101 = vcvt.s32.f32 %v93
    %v102 = vcvt.s32.f32 %v94
    %v103 = vcvt.s32.f32 %v95
    %v104 = vcvt.s32.f32 %v96
    %v105 = vcvt.s32.f32 %v97
    %v106 = vcvt.s32.f32 %v98
    %v107 = vcvt.s32.f32 %v99
    %v108 = vld [vmem:[#allocation5] sm:$0xff]
    %v109 = vld [vmem:[#allocation5 + $0x8] sm:$0xff]
    %v110 = vld [vmem:[#allocation5 + $0x10] sm:$0xff]
    %v111 = vld [vmem:[#allocation5 + $0x18] sm:$0xff]
    %v112 = vld [vmem:[#allocation5 + $0x20] sm:$0xff]
    %v113 = vld [vmem:[#allocation5 + $0x28] sm:$0xff]
    %v114 = vld [vmem:[#allocation5 + $0x30] sm:$0xff]
    %v115 = vld [vmem:[#allocation5 + $0x38] sm:$0xff]
    %v116 = vld [vmem:[#allocation5 + $0x40] sm:$0xff]
    %v117 = vld [vmem:[#allocation5 + $0x48] sm:$0xff]
    %v118 = vld [vmem:[#allocation5 + $0x50] sm:$0xff]
    %v119 = vld [vmem:[#allocation5 + $0x58] sm:$0xff]
    %v120 = vld [vmem:[#allocation5 + $0x60] sm:$0xff]
    %v121 = vld [vmem:[#allocation5 + $0x68] sm:$0xff]
    %v122 = vld [vmem:[#allocation5 + $0x70] sm:$0xff]
    %v123 = vld [vmem:[#allocation5 + $0x78] sm:$0xff]
    %v124 = vld [vmem:[%s4] sm:$0x3]
    %v126 = vlaneseq
    %v127 = vshrl.u32 %v126, 7
    %v128 = vsub.s32 0, %v127
    %v129 = vrot.slane %v124, %v128
    %v130 = vlaneseq
    %v131 = vshrl.u32 %v130, 7
    %v132 = vsub.s32 1, %v131
    %v133 = vrot.slane %v124, %v132
    %vm136 = vcmask 523264
    %v138 = vsel %vm136, %v100, 0
    %v141 = vsel %vm136, %v101, 0
    %v144 = vsel %vm136, %v102, 0
    %v147 = vsel %vm136, %v103, 0
    %v150 = vsel %vm136, %v104, 0
    %v153 = vsel %vm136, %v105, 0
    %v156 = vsel %vm136, %v106, 0
    %v159 = vsel %vm136, %v107, 0
    %161 = vmatprep.subr.mxu0 %v109
    %162 = vmatpush1.msra.mxu0 %v108
    %163 = vmatprep.subr.mxu0 %v111
    %164 = vmatpush1.msra.mxu0 %v110
    %165 = vmatprep.subr.mxu0 %v113
    %166 = vmatpush1.msra.mxu0 %v112
    %167 = vmatprep.subr.mxu0 %v115
    %168 = vmatpush1.msra.mxu0 %v114
    %169 = vmatprep.subr.mxu0 %v117
    %170 = vmatpush1.msra.mxu0 %v116
    %171 = vmatprep.subr.mxu0 %v119
    %172 = vmatpush1.msra.mxu0 %v118
    %173 = vmatprep.subr.mxu0 %v121
    %174 = vmatpush1.msra.mxu0 %v120
    %175 = vmatprep.subr.mxu0 %v123
    %176 = vmatpush1.msra.mxu0 %v122
    %177 = vmatprep.subr.mxu0 0.0
    %178 = vmatpush1.msra.mxu0 0.0
    %179 = vmatprep.subr.mxu0 0.0
    %180 = vmatpush1.msra.mxu0 0.0
    %181 = vmatprep.subr.mxu0 0.0
    %182 = vmatpush1.msra.mxu0 0.0
    %183 = vmatprep.subr.mxu0 0.0
    %184 = vmatpush1.msra.mxu0 0.0
    %185 = vmatprep.subr.mxu0 0.0
    %186 = vmatpush1.msra.mxu0 0.0
    %187 = vmatprep.subr.mxu0 0.0
    %188 = vmatpush1.msra.mxu0 0.0
    %189 = vmatprep.subr.mxu0 0.0
    %190 = vmatpush1.msra.mxu0 0.0
    %191 = vmatprep.subr.mxu0 0.0
    %192 = vmatpush1.msra.mxu0 0.0
    %193 = vmatprep.subr.mxu0 0.0
    %194 = vmatpush1.msra.mxu0 0.0
    %195 = vmatprep.subr.mxu0 0.0
    %196 = vmatpush1.msra.mxu0 0.0
    %197 = vmatprep.subr.mxu0 0.0
    %198 = vmatpush1.msra.mxu0 0.0
    %199 = vmatprep.subr.mxu0 0.0
    %200 = vmatpush1.msra.mxu0 0.0
    %201 = vmatprep.subr.mxu0 0.0
    %202 = vmatpush1.msra.mxu0 0.0
    %203 = vmatprep.subr.mxu0 0.0
    %204 = vmatpush1.msra.mxu0 0.0
    %205 = vmatprep.subr.mxu0 0.0
    %206 = vmatpush1.msra.mxu0 0.0
    %207 = vmatprep.subr.mxu0 0.0
    %208 = vmatpush1.msra.mxu0 0.0
    %209 = vmatprep.subr.mxu0 0.0
    %210 = vmatpush1.msra.mxu0 0.0
    %211 = vmatprep.subr.mxu0 0.0
    %212 = vmatpush1.msra.mxu0 0.0
    %213 = vmatprep.subr.mxu0 0.0
    %214 = vmatpush1.msra.mxu0 0.0
    %215 = vmatprep.subr.mxu0 0.0
    %216 = vmatpush1.msra.mxu0 0.0
    %217 = vmatprep.subr.mxu0 0.0
    %218 = vmatpush1.msra.mxu0 0.0
    %219 = vmatprep.subr.mxu0 0.0
    %220 = vmatpush1.msra.mxu0 0.0
    %221 = vmatprep.subr.mxu0 0.0
    %222 = vmatpush1.msra.mxu0 0.0
    %223 = vmatprep.subr.mxu0 0.0
    %224 = vmatpush1.msra.mxu0 0.0
    %225 = vmatprep.mubr.f32.mxu0 0.0
    %226 = vmatmul.mubr.f32.gmra.mrb[0].mxu0 %v138
    %v227 = vpop.f32.mrb[0].mxu0
    %v228 = vadd.f32 %v129, %v227
    %v229 = vpop.f32.mrb[0].mxu0
    %v230 = vadd.f32 %v133, %v229
    %231 = vmatprep.mubr.f32.mxu0 0.0
    %232 = vmatmul.mubr.f32.gmra.mrb[0].mxu0 %v141
    %v233 = vpop.f32.mrb[0].mxu0
    %v234 = vadd.f32 %v129, %v233
    %v235 = vpop.f32.mrb[0].mxu0
    %v236 = vadd.f32 %v133, %v235
    %237 = vmatprep.mubr.f32.mxu0 0.0
    %238 = vmatmul.mubr.f32.gmra.mrb[0].mxu0 %v144
    %v239 = vpop.f32.mrb[0].mxu0
    %v240 = vadd.f32 %v129, %v239
    %v241 = vpop.f32.mrb[0].mxu0
    %v242 = vadd.f32 %v133, %v241
    %243 = vmatprep.mubr.f32.mxu0 0.0
    %244 = vmatmul.mubr.f32.gmra.mrb[0].mxu0 %v147
    %v245 = vpop.f32.mrb[0].mxu0
    %v246 = vadd.f32 %v129, %v245
    %v247 = vpop.f32.mrb[0].mxu0
    %v248 = vadd.f32 %v133, %v247
    %249 = vmatprep.mubr.f32.mxu0 0.0
    %250 = vmatmul.mubr.f32.gmra.mrb[0].mxu0 %v150
    %v251 = vpop.f32.mrb[0].mxu0
    %v252 = vadd.f32 %v129, %v251
    %v253 = vpop.f32.mrb[0].mxu0
    %v254 = vadd.f32 %v133, %v253
    %255 = vmatprep.mubr.f32.mxu0 0.0
    %256 = vmatmul.mubr.f32.gmra.mrb[0].mxu0 %v153
    %v257 = vpop.f32.mrb[0].mxu0
    %v258 = vadd.f32 %v129, %v257
    %v259 = vpop.f32.mrb[0].mxu0
    %v260 = vadd.f32 %v133, %v259
    %261 = vmatprep.mubr.f32.mxu0 0.0
    %262 = vmatmul.mubr.f32.gmra.mrb[0].mxu0 %v156
    %v263 = vpop.f32.mrb[0].mxu0
    %v264 = vadd.f32 %v129, %v263
    %v265 = vpop.f32.mrb[0].mxu0
    %v266 = vadd.f32 %v133, %v265
    %267 = vmatprep.mubr.f32.mxu0 0.0
    %268 = vmatmul.mubr.f32.gmra.mrb[0].mxu0 %v159
    %v269 = vpop.f32.mrb[0].mxu0
    %v270 = vadd.f32 %v129, %v269
    %v271 = vpop.f32.mrb[0].mxu0
    %v272 = vadd.f32 %v133, %v271
    %273 = vdwg.mxu0
    %274 = vst [vmem:[#allocation2] sm:$0xff] %v228
    %275 = vst [vmem:[#allocation2 + $0x8] sm:$0xff] %v234
    %276 = vst [vmem:[#allocation2 + $0x10] sm:$0xff] %v240
    %277 = vst [vmem:[#allocation2 + $0x18] sm:$0xff] %v246
    %278 = vst [vmem:[#allocation2 + $0x20] sm:$0xff] %v252
    %279 = vst [vmem:[#allocation2 + $0x28] sm:$0xff] %v258
    %280 = vst [vmem:[#allocation2 + $0x30] sm:$0xff] %v264
    %281 = vst [vmem:[#allocation2 + $0x38] sm:$0xff] %v270
    %282 = vst [vmem:[#allocation3] sm:$0xff] %v230
    %283 = vst [vmem:[#allocation3 + $0x8] sm:$0xff] %v236
    %284 = vst [vmem:[#allocation3 + $0x10] sm:$0xff] %v242
    %285 = vst [vmem:[#allocation3 + $0x18] sm:$0xff] %v248
    %286 = vst [vmem:[#allocation3 + $0x20] sm:$0xff] %v254
    %287 = vst [vmem:[#allocation3 + $0x28] sm:$0xff] %v260
    %288 = vst [vmem:[#allocation3 + $0x30] sm:$0xff] %v266
    %289 = vst [vmem:[#allocation3 + $0x38] sm:$0xff] %v272
    %v290 = vld [vmem:[%s1] sm:$0xff]
    %291 = vset.pattern.permute.xlu0 0
    %292 = vperm.xlu0 %291, %v290
    %v293 = vpop.permute.xlu0 %292
    %vm294 = vcmp.gt.s32.totalorder %v293, 0
    %vm295 = vcmp.gt.s32.totalorder %v293, 1
    %vm296 = vcmp.gt.s32.totalorder %v293, 2
    %vm297 = vcmp.gt.s32.totalorder %v293, 3
    %vm298 = vcmp.gt.s32.totalorder %v293, 4
    %vm299 = vcmp.gt.s32.totalorder %v293, 5
    %vm300 = vcmp.gt.s32.totalorder %v293, 6
    %vm301 = vcmp.gt.s32.totalorder %v293, 7
    %v302 = vld [vmem:[%s5] sm:$0xff]
    %v303 = vld [vmem:[%s5 + $0x8] sm:$0xff]
    %v304 = vld [vmem:[%s5 + $0x10] sm:$0xff]
    %v305 = vld [vmem:[%s5 + $0x18] sm:$0xff]
    %v306 = vld [vmem:[%s6] sm:$0xff]
    %v307 = vld [vmem:[%s6 + $0x8] sm:$0xff]
    %v308 = vld [vmem:[%s6 + $0x10] sm:$0xff]
    %v309 = vld [vmem:[%s6 + $0x18] sm:$0xff]
    %v310 = vld [vmem:[%s7] sm:$0x1]
    %v311 = vld [vmem:[%s8] sm:$0x1]
    %v312 = vld [vmem:[%s2] sm:$0xff]
    %s313 = scalar_lea.vmem %s2, 8
    %v314 = vld [vmem:[%s313] sm:$0xff]
    %v315 = vld [vmem:[#allocation2] sm:$0xff]
    %v316 = vld [vmem:[#allocation3 + $0x38] sm:$0xff]
    %v318 = vlaneseq
    %v319 = vshrl.u32 %v318, 7
    %v320 = vsub.s32 0, %v319
    %v321 = vrot.slane %v310, %v320
    %vm323 = vcmask 261120
    %v325 = vsel %vm323, %v312, 0
    %327 = vmatprep.subr.mxu0 0.0
    %328 = vmatpush1.msra.mxu0 %v302
    %329 = vmatprep.subr.mxu0 0.0
    %330 = vmatpush1.msra.mxu0 %v303
    %331 = vmatprep.subr.mxu0 0.0
    %332 = vmatpush1.msra.mxu0 %v304
    %333 = vmatprep.subr.mxu0 0.0
    %334 = vmatpush1.msra.mxu0 %v305
    %335 = vmatprep.subr.mxu0 0.0
    %336 = vmatpush1.msra.mxu0 0.0
    %337 = vmatprep.subr.mxu0 0.0
    %338 = vmatpush1.msra.mxu0 0.0
    %339 = vmatprep.subr.mxu0 0.0
    %340 = vmatpush1.msra.mxu0 0.0
    %341 = vmatprep.subr.mxu0 0.0
    %342 = vmatpush1.msra.mxu0 0.0
    %343 = vmatprep.subr.mxu0 0.0
    %344 = vmatpush1.msra.mxu0 0.0
    %345 = vmatprep.subr.mxu0 0.0
    %346 = vmatpush1.msra.mxu0 0.0
    %347 = vmatprep.subr.mxu0 0.0
    %348 = vmatpush1.msra.mxu0 0.0
    %349 = vmatprep.subr.mxu0 0.0
    %350 = vmatpush1.msra.mxu0 0.0
    %351 = vmatprep.subr.mxu0 0.0
    %352 = vmatpush1.msra.mxu0 0.0
    %353 = vmatprep.subr.mxu0 0.0
    %354 = vmatpush1.msra.mxu0 0.0
    %355 = vmatprep.subr.mxu0 0.0
    %356 = vmatpush1.msra.mxu0 0.0
    %357 = vmatprep.subr.mxu0 0.0
    %358 = vmatpush1.msra.mxu0 0.0
    %359 = vmatprep.subr.mxu0 0.0
    %360 = vmatpush1.msra.mxu0 0.0
    %361 = vmatprep.subr.mxu0 0.0
    %362 = vmatpush1.msra.mxu0 0.0
    %363 = vmatprep.subr.mxu0 0.0
    %364 = vmatpush1.msra.mxu0 0.0
    %365 = vmatprep.subr.mxu0 0.0
    %366 = vmatpush1.msra.mxu0 0.0
    %367 = vmatprep.subr.mxu0 0.0
    %368 = vmatpush1.msra.mxu0 0.0
    %369 = vmatprep.subr.mxu0 0.0
    %370 = vmatpush1.msra.mxu0 0.0
    %371 = vmatprep.subr.mxu0 0.0
    %372 = vmatpush1.msra.mxu0 0.0
    %373 = vmatprep.subr.mxu0 0.0
    %374 = vmatpush1.msra.mxu0 0.0
    %375 = vmatprep.subr.mxu0 0.0
    %376 = vmatpush1.msra.mxu0 0.0
    %377 = vmatprep.subr.mxu0 0.0
    %378 = vmatpush1.msra.mxu0 0.0
    %379 = vmatprep.subr.mxu0 0.0
    %380 = vmatpush1.msra.mxu0 0.0
    %381 = vmatprep.subr.mxu0 0.0
    %382 = vmatpush1.msra.mxu0 0.0
    %383 = vmatprep.subr.mxu0 0.0
    %384 = vmatpush1.msra.mxu0 0.0
    %385 = vmatprep.subr.mxu0 0.0
    %386 = vmatpush1.msra.mxu0 0.0
    %387 = vmatprep.subr.mxu0 0.0
    %388 = vmatpush1.msra.mxu0 0.0
    %389 = vmatprep.subr.mxu0 0.0
    %390 = vmatpush1.msra.mxu0 0.0
    %391 = vmatprep.mubr.f32.mxu0 0.0
    %392 = vmatmul.mubr.f32.gmra.mrb[0].mxu0 %v325
    %v393 = vpop.f32.mrb[0].mxu0
    %v394 = vadd.f32 %v321, %v393
    %v395 = vpop.f32.mrb[0].mxu0
    %396 = vdwg.mxu0
    %v397 = vadd.f32 %v315, %v394
    %v398 = vxor.u32 %v397, 2147483648
    %v399 = vmul.f32 %v398, 1.442695
    %v400 = vpow.pop %v399
    %v401 = vadd.f32 %v400, 1.0
    %v402 = vrcp.pop %v401
    %v403 = vmul.f32 1.0, %v402
    %405 = vrot.lane.b32.xlu0 %v394, 64
    %v406 = vpop.permute.xlu0 %405
    %v408 = vmul.f32 %v403, %v406
    %410 = vrot.lane.b32.xlu0 %v408, 64
    %v411 = vpop.permute.xlu0 %410
    %v413 = vadd.f32 %v315, %v411
    %v414 = vtanh.pop %v413
    %416 = vrot.lane.b32.xlu0 %v414, 64
    %v417 = vpop.permute.xlu0 %416
    %v419 = vsub.f32 %v312, %v417
    %421 = vrot.lane.b32.xlu0 %v419, 32
    %v422 = vpop.permute.xlu0 %421
    %v424 = vmul.f32 %v403, %v422
    %426 = vrot.lane.b32.xlu0 %v424, 32
    %v427 = vpop.permute.xlu0 %426
    %v429 = vadd.f32 %v414, %v427
    %v431 = vlaneseq
    %v432 = vshrl.u32 %v431, 7
    %v433 = vsub.s32 0, %v432
    %v434 = vrot.slane %v311, %v433
    %v437 = vsel %vm323, %v314, 0
    %439 = vmatprep.subr.mxu0 0.0
    %440 = vmatpush1.msra.mxu0 %v306
    %441 = vmatprep.subr.mxu0 0.0
    %442 = vmatpush1.msra.mxu0 %v307
    %443 = vmatprep.subr.mxu0 0.0
    %444 = vmatpush1.msra.mxu0 %v308
    %445 = vmatprep.subr.mxu0 0.0
    %446 = vmatpush1.msra.mxu0 %v309
    %447 = vmatprep.subr.mxu0 0.0
    %448 = vmatpush1.msra.mxu0 0.0
    %449 = vmatprep.subr.mxu0 0.0
    %450 = vmatpush1.msra.mxu0 0.0
    %451 = vmatprep.subr.mxu0 0.0
    %452 = vmatpush1.msra.mxu0 0.0
    %453 = vmatprep.subr.mxu0 0.0
    %454 = vmatpush1.msra.mxu0 0.0
    %455 = vmatprep.subr.mxu0 0.0
    %456 = vmatpush1.msra.mxu0 0.0
    %457 = vmatprep.subr.mxu0 0.0
    %458 = vmatpush1.msra.mxu0 0.0
    %459 = vmatprep.subr.mxu0 0.0
    %460 = vmatpush1.msra.mxu0 0.0
    %461 = vmatprep.subr.mxu0 0.0
    %462 = vmatpush1.msra.mxu0 0.0
    %463 = vmatprep.subr.mxu0 0.0
    %464 = vmatpush1.msra.mxu0 0.0
    %465 = vmatprep.subr.mxu0 0.0
    %466 = vmatpush1.msra.mxu0 0.0
    %467 = vmatprep.subr.mxu0 0.0
    %468 = vmatpush1.msra.mxu0 0.0
    %469 = vmatprep.subr.mxu0 0.0
    %470 = vmatpush1.msra.mxu0 0.0
    %471 = vmatprep.subr.mxu0 0.0
    %472 = vmatpush1.msra.mxu0 0.0
    %473 = vmatprep.subr.mxu0 0.0
    %474 = vmatpush1.msra.mxu0 0.0
    %475 = vmatprep.subr.mxu0 0.0
    %476 = vmatpush1.msra.mxu0 0.0
    %477 = vmatprep.subr.mxu0 0.0
    %478 = vmatpush1.msra.mxu0 0.0
    %479 = vmatprep.subr.mxu0 0.0
    %480 = vmatpush1.msra.mxu0 0.0
    %481 = vmatprep.subr.mxu0 0.0
    %482 = vmatpush1.msra.mxu0 0.0
    %483 = vmatprep.subr.mxu0 0.0
    %484 = vmatpush1.msra.mxu0 0.0
    %485 = vmatprep.subr.mxu0 0.0
    %486 = vmatpush1.msra.mxu0 0.0
    %487 = vmatprep.subr.mxu0 0.0
    %488 = vmatpush1.msra.mxu0 0.0
    %489 = vmatprep.subr.mxu0 0.0
    %490 = vmatpush1.msra.mxu0 0.0
    %491 = vmatprep.subr.mxu0 0.0
    %492 = vmatpush1.msra.mxu0 0.0
    %493 = vmatprep.subr.mxu0 0.0
    %494 = vmatpush1.msra.mxu0 0.0
    %495 = vmatprep.subr.mxu0 0.0
    %496 = vmatpush1.msra.mxu0 0.0
    %497 = vmatprep.subr.mxu0 0.0
    %498 = vmatpush1.msra.mxu0 0.0
    %499 = vmatprep.subr.mxu0 0.0
    %500 = vmatpush1.msra.mxu0 0.0
    %501 = vmatprep.subr.mxu0 0.0
    %502 = vmatpush1.msra.mxu0 0.0
    %503 = vmatprep.mubr.f32.mxu0 0.0
    %504 = vmatmul.mubr.f32.gmra.mrb[0].mxu0 %v437
    %v505 = vpop.f32.mrb[0].mxu0
    %v506 = vadd.f32 %v434, %v505
    %v507 = vpop.f32.mrb[0].mxu0
    %508 = vdwg.mxu0
    %v509 = vadd.f32 %v316, %v506
    %v510 = vxor.u32 %v509, 2147483648
    %v511 = vmul.f32 %v510, 1.442695
    %v512 = vpow.pop %v511
    %v513 = vadd.f32 %v512, 1.0
    %v514 = vrcp.pop %v513
    %v515 = vmul.f32 1.0, %v514
    %517 = vrot.lane.b32.xlu0 %v506, 64
    %v518 = vpop.permute.xlu0 %517
    %v520 = vmul.f32 %v515, %v518
    %522 = vrot.lane.b32.xlu0 %v520, 64
    %v523 = vpop.permute.xlu0 %522
    %v525 = vadd.f32 %v316, %v523
    %v526 = vtanh.pop %v525
    %528 = vrot.lane.b32.xlu0 %v526, 64
    %v529 = vpop.permute.xlu0 %528
    %v531 = vsub.f32 %v314, %v529
    %533 = vrot.lane.b32.xlu0 %v531, 32
    %v534 = vpop.permute.xlu0 %533
    %v536 = vmul.f32 %v515, %v534
    %538 = vrot.lane.b32.xlu0 %v536, 32
    %v539 = vpop.permute.xlu0 %538
    %v541 = vadd.f32 %v526, %v539
    %v542 = vsel %vm294, %v429, 0.0
    %544 = vrot.lane.b32.xlu0 %v542, 64
    %v545 = vpop.permute.xlu0 %544
    %547 = vst.msk [vmem:[#allocation8] sm:$0xff] %vm323, %v545
    %v548 = vsel %vm301, %v541, 0.0
    %550 = vrot.lane.b32.xlu0 %v548, 64
    %v551 = vpop.permute.xlu0 %550
    %s553 = scalar_lea.vmem [#allocation4], 56
    %554 = vst.msk [vmem:[%s553] sm:$0xff] %vm323, %v551
    %555 = vrot.lane.b32.xlu0 %v312, 64
    %v556 = vpop.permute.xlu0 %555
    %v558 = vsel %vm294, %v429, %v556
    %559 = vrot.lane.b32.xlu0 %v314, 64
    %v560 = vpop.permute.xlu0 %559
    %v562 = vsel %vm301, %v541, %v560
    %v563 = vld [vmem:[#allocation2 + $0x8] sm:$0xff]
    %v564 = vld [vmem:[#allocation3 + $0x30] sm:$0xff]
    %566 = vrot.lane.b32.xlu0 %v558, 64
    %v567 = vpop.permute.xlu0 %566
    %v568 = vsel %vm323, %v567, 0
    %570 = vmatprep.subr.mxu0 0.0
    %571 = vmatpush1.msra.mxu0 %v302
    %572 = vmatprep.subr.mxu0 0.0
    %573 = vmatpush1.msra.mxu0 %v303
    %574 = vmatprep.subr.mxu0 0.0
    %575 = vmatpush1.msra.mxu0 %v304
    %576 = vmatprep.subr.mxu0 0.0
    %577 = vmatpush1.msra.mxu0 %v305
    %578 = vmatprep.subr.mxu0 0.0
    %579 = vmatpush1.msra.mxu0 0.0
    %580 = vmatprep.subr.mxu0 0.0
    %581 = vmatpush1.msra.mxu0 0.0
    %582 = vmatprep.subr.mxu0 0.0
    %583 = vmatpush1.msra.mxu0 0.0
    %584 = vmatprep.subr.mxu0 0.0
    %585 = vmatpush1.msra.mxu0 0.0
    %586 = vmatprep.subr.mxu0 0.0
    %587 = vmatpush1.msra.mxu0 0.0
    %588 = vmatprep.subr.mxu0 0.0
    %589 = vmatpush1.msra.mxu0 0.0
    %590 = vmatprep.subr.mxu0 0.0
    %591 = vmatpush1.msra.mxu0 0.0
    %592 = vmatprep.subr.mxu0 0.0
    %593 = vmatpush1.msra.mxu0 0.0
    %594 = vmatprep.subr.mxu0 0.0
    %595 = vmatpush1.msra.mxu0 0.0
    %596 = vmatprep.subr.mxu0 0.0
    %597 = vmatpush1.msra.mxu0 0.0
    %598 = vmatprep.subr.mxu0 0.0
    %599 = vmatpush1.msra.mxu0 0.0
    %600 = vmatprep.subr.mxu0 0.0
    %601 = vmatpush1.msra.mxu0 0.0
    %602 = vmatprep.subr.mxu0 0.0
    %603 = vmatpush1.msra.mxu0 0.0
    %604 = vmatprep.subr.mxu0 0.0
    %605 = vmatpush1.msra.mxu0 0.0
    %606 = vmatprep.subr.mxu0 0.0
    %607 = vmatpush1.msra.mxu0 0.0
    %608 = vmatprep.subr.mxu0 0.0
    %609 = vmatpush1.msra.mxu0 0.0
    %610 = vmatprep.subr.mxu0 0.0
    %611 = vmatpush1.msra.mxu0 0.0
    %612 = vmatprep.subr.mxu0 0.0
    %613 = vmatpush1.msra.mxu0 0.0
    %614 = vmatprep.subr.mxu0 0.0
    %615 = vmatpush1.msra.mxu0 0.0
    %616 = vmatprep.subr.mxu0 0.0
    %617 = vmatpush1.msra.mxu0 0.0
    %618 = vmatprep.subr.mxu0 0.0
    %619 = vmatpush1.msra.mxu0 0.0
    %620 = vmatprep.subr.mxu0 0.0
    %621 = vmatpush1.msra.mxu0 0.0
    %622 = vmatprep.subr.mxu0 0.0
    %623 = vmatpush1.msra.mxu0 0.0
    %624 = vmatprep.subr.mxu0 0.0
    %625 = vmatpush1.msra.mxu0 0.0
    %626 = vmatprep.subr.mxu0 0.0
    %627 = vmatpush1.msra.mxu0 0.0
    %628 = vmatprep.subr.mxu0 0.0
    %629 = vmatpush1.msra.mxu0 0.0
    %630 = vmatprep.subr.mxu0 0.0
    %631 = vmatpush1.msra.mxu0 0.0
    %632 = vmatprep.subr.mxu0 0.0
    %633 = vmatpush1.msra.mxu0 0.0
    %634 = vmatprep.mubr.f32.mxu0 0.0
    %635 = vmatmul.mubr.f32.gmra.mrb[0].mxu0 %v568
    %v636 = vpop.f32.mrb[0].mxu0
    %v637 = vadd.f32 %v321, %v636
    %v638 = vpop.f32.mrb[0].mxu0
    %639 = vdwg.mxu0
    %v640 = vadd.f32 %v563, %v637
    %v641 = vxor.u32 %v640, 2147483648
    %v642 = vmul.f32 %v641, 1.442695
    %v643 = vpow.pop %v642
    %v644 = vadd.f32 %v643, 1.0
    %v645 = vrcp.pop %v644
    %v646 = vmul.f32 1.0, %v645
    %648 = vrot.lane.b32.xlu0 %v637, 64
    %v649 = vpop.permute.xlu0 %648
    %v651 = vmul.f32 %v646, %v649
    %653 = vrot.lane.b32.xlu0 %v651, 64
    %v654 = vpop.permute.xlu0 %653
    %v656 = vadd.f32 %v563, %v654
    %v657 = vtanh.pop %v656
    %v658 = vsub.f32 %v558, %v657
    %660 = vrot.lane.b32.xlu0 %v658, 96
    %v661 = vpop.permute.xlu0 %660
    %v663 = vmul.f32 %v646, %v661
    %665 = vrot.lane.b32.xlu0 %v663, 32
    %v666 = vpop.permute.xlu0 %665
    %v668 = vadd.f32 %v657, %v666
    %670 = vrot.lane.b32.xlu0 %v562, 64
    %v671 = vpop.permute.xlu0 %670
    %v672 = vsel %vm323, %v671, 0
    %674 = vmatprep.subr.mxu0 0.0
    %675 = vmatpush1.msra.mxu0 %v306
    %676 = vmatprep.subr.mxu0 0.0
    %677 = vmatpush1.msra.mxu0 %v307
    %678 = vmatprep.subr.mxu0 0.0
    %679 = vmatpush1.msra.mxu0 %v308
    %680 = vmatprep.subr.mxu0 0.0
    %681 = vmatpush1.msra.mxu0 %v309
    %682 = vmatprep.subr.mxu0 0.0
    %683 = vmatpush1.msra.mxu0 0.0
    %684 = vmatprep.subr.mxu0 0.0
    %685 = vmatpush1.msra.mxu0 0.0
    %686 = vmatprep.subr.mxu0 0.0
    %687 = vmatpush1.msra.mxu0 0.0
    %688 = vmatprep.subr.mxu0 0.0
    %689 = vmatpush1.msra.mxu0 0.0
    %690 = vmatprep.subr.mxu0 0.0
    %691 = vmatpush1.msra.mxu0 0.0
    %692 = vmatprep.subr.mxu0 0.0
    %693 = vmatpush1.msra.mxu0 0.0
    %694 = vmatprep.subr.mxu0 0.0
    %695 = vmatpush1.msra.mxu0 0.0
    %696 = vmatprep.subr.mxu0 0.0
    %697 = vmatpush1.msra.mxu0 0.0
    %698 = vmatprep.subr.mxu0 0.0
    %699 = vmatpush1.msra.mxu0 0.0
    %700 = vmatprep.subr.mxu0 0.0
    %701 = vmatpush1.msra.mxu0 0.0
    %702 = vmatprep.subr.mxu0 0.0
    %703 = vmatpush1.msra.mxu0 0.0
    %704 = vmatprep.subr.mxu0 0.0
    %705 = vmatpush1.msra.mxu0 0.0
    %706 = vmatprep.subr.mxu0 0.0
    %707 = vmatpush1.msra.mxu0 0.0
    %708 = vmatprep.subr.mxu0 0.0
    %709 = vmatpush1.msra.mxu0 0.0
    %710 = vmatprep.subr.mxu0 0.0
    %711 = vmatpush1.msra.mxu0 0.0
    %712 = vmatprep.subr.mxu0 0.0
    %713 = vmatpush1.msra.mxu0 0.0
    %714 = vmatprep.subr.mxu0 0.0
    %715 = vmatpush1.msra.mxu0 0.0
    %716 = vmatprep.subr.mxu0 0.0
    %717 = vmatpush1.msra.mxu0 0.0
    %718 = vmatprep.subr.mxu0 0.0
    %719 = vmatpush1.msra.mxu0 0.0
    %720 = vmatprep.subr.mxu0 0.0
    %721 = vmatpush1.msra.mxu0 0.0
    %722 = vmatprep.subr.mxu0 0.0
    %723 = vmatpush1.msra.mxu0 0.0
    %724 = vmatprep.subr.mxu0 0.0
    %725 = vmatpush1.msra.mxu0 0.0
    %726 = vmatprep.subr.mxu0 0.0
    %727 = vmatpush1.msra.mxu0 0.0
    %728 = vmatprep.subr.mxu0 0.0
    %729 = vmatpush1.msra.mxu0 0.0
    %730 = vmatprep.subr.mxu0 0.0
    %731 = vmatpush1.msra.mxu0 0.0
    %732 = vmatprep.subr.mxu0 0.0
    %733 = vmatpush1.msra.mxu0 0.0
    %734 = vmatprep.subr.mxu0 0.0
    %735 = vmatpush1.msra.mxu0 0.0
    %736 = vmatprep.subr.mxu0 0.0
    %737 = vmatpush1.msra.mxu0 0.0
    %738 = vmatprep.mubr.f32.mxu0 0.0
    %739 = vmatmul.mubr.f32.gmra.mrb[0].mxu0 %v672
    %v740 = vpop.f32.mrb[0].mxu0
    %v741 = vadd.f32 %v434, %v740
    %v742 = vpop.f32.mrb[0].mxu0
    %743 = vdwg.mxu0
    %v744 = vadd.f32 %v564, %v741
    %v745 = vxor.u32 %v744, 2147483648
    %v746 = vmul.f32 %v745, 1.442695
    %v747 = vpow.pop %v746
    %v748 = vadd.f32 %v747, 1.0
    %v749 = vrcp.pop %v748
    %v750 = vmul.f32 1.0, %v749
    %752 = vrot.lane.b32.xlu0 %v741, 64
    %v753 = vpop.permute.xlu0 %752
    %v755 = vmul.f32 %v750, %v753
    %757 = vrot.lane.b32.xlu0 %v755, 64
    %v758 = vpop.permute.xlu0 %757
    %v760 = vadd.f32 %v564, %v758
    %v761 = vtanh.pop %v760
    %v762 = vsub.f32 %v562, %v761
    %764 = vrot.lane.b32.xlu0 %v762, 96
    %v765 = vpop.permute.xlu0 %764
    %v767 = vmul.f32 %v750, %v765
    %769 = vrot.lane.b32.xlu0 %v767, 32
    %v770 = vpop.permute.xlu0 %769
    %v772 = vadd.f32 %v761, %v770
    %v773 = vsel %vm295, %v668, 0.0
    %775 = vrot.lane.b32.xlu0 %v773, 64
    %v776 = vpop.permute.xlu0 %775
    %s778 = scalar_lea.vmem [#allocation8], 8
    %779 = vst.msk [vmem:[%s778] sm:$0xff] %vm323, %v776
    %v780 = vsel %vm300, %v772, 0.0
    %782 = vrot.lane.b32.xlu0 %v780, 64
    %v783 = vpop.permute.xlu0 %782
    %s785 = scalar_lea.vmem [#allocation4], 48
    %786 = vst.msk [vmem:[%s785] sm:$0xff] %vm323, %v783
    %v787 = vsel %vm295, %v668, %v558
    %v788 = vsel %vm300, %v772, %v562
    %v789 = vld [vmem:[#allocation2 + $0x10] sm:$0xff]
    %v790 = vld [vmem:[#allocation3 + $0x28] sm:$0xff]
    %792 = vrot.lane.b32.xlu0 %v787, 64
    %v793 = vpop.permute.xlu0 %792
    %v794 = vsel %vm323, %v793, 0
    %796 = vmatprep.subr.mxu0 0.0
    %797 = vmatpush1.msra.mxu0 %v302
    %798 = vmatprep.subr.mxu0 0.0
    %799 = vmatpush1.msra.mxu0 %v303
    %800 = vmatprep.subr.mxu0 0.0
    %801 = vmatpush1.msra.mxu0 %v304
    %802 = vmatprep.subr.mxu0 0.0
    %803 = vmatpush1.msra.mxu0 %v305
    %804 = vmatprep.subr.mxu0 0.0
    %805 = vmatpush1.msra.mxu0 0.0
    %806 = vmatprep.subr.mxu0 0.0
    %807 = vmatpush1.msra.mxu0 0.0
    %808 = vmatprep.subr.mxu0 0.0
    %809 = vmatpush1.msra.mxu0 0.0
    %810 = vmatprep.subr.mxu0 0.0
    %811 = vmatpush1.msra.mxu0 0.0
    %812 = vmatprep.subr.mxu0 0.0
    %813 = vmatpush1.msra.mxu0 0.0
    %814 = vmatprep.subr.mxu0 0.0
    %815 = vmatpush1.msra.mxu0 0.0
    %816 = vmatprep.subr.mxu0 0.0
    %817 = vmatpush1.msra.mxu0 0.0
    %818 = vmatprep.subr.mxu0 0.0
    %819 = vmatpush1.msra.mxu0 0.0
    %820 = vmatprep.subr.mxu0 0.0
    %821 = vmatpush1.msra.mxu0 0.0
    %822 = vmatprep.subr.mxu0 0.0
    %823 = vmatpush1.msra.mxu0 0.0
    %824 = vmatprep.subr.mxu0 0.0
    %825 = vmatpush1.msra.mxu0 0.0
    %826 = vmatprep.subr.mxu0 0.0
    %827 = vmatpush1.msra.mxu0 0.0
    %828 = vmatprep.subr.mxu0 0.0
    %829 = vmatpush1.msra.mxu0 0.0
    %830 = vmatprep.subr.mxu0 0.0
    %831 = vmatpush1.msra.mxu0 0.0
    %832 = vmatprep.subr.mxu0 0.0
    %833 = vmatpush1.msra.mxu0 0.0
    %834 = vmatprep.subr.mxu0 0.0
    %835 = vmatpush1.msra.mxu0 0.0
    %836 = vmatprep.subr.mxu0 0.0
    %837 = vmatpush1.msra.mxu0 0.0
    %838 = vmatprep.subr.mxu0 0.0
    %839 = vmatpush1.msra.mxu0 0.0
    %840 = vmatprep.subr.mxu0 0.0
    %841 = vmatpush1.msra.mxu0 0.0
    %842 = vmatprep.subr.mxu0 0.0
    %843 = vmatpush1.msra.mxu0 0.0
    %844 = vmatprep.subr.mxu0 0.0
    %845 = vmatpush1.msra.mxu0 0.0
    %846 = vmatprep.subr.mxu0 0.0
    %847 = vmatpush1.msra.mxu0 0.0
    %848 = vmatprep.subr.mxu0 0.0
    %849 = vmatpush1.msra.mxu0 0.0
    %850 = vmatprep.subr.mxu0 0.0
    %851 = vmatpush1.msra.mxu0 0.0
    %852 = vmatprep.subr.mxu0 0.0
    %853 = vmatpush1.msra.mxu0 0.0
    %854 = vmatprep.subr.mxu0 0.0
    %855 = vmatpush1.msra.mxu0 0.0
    %856 = vmatprep.subr.mxu0 0.0
    %857 = vmatpush1.msra.mxu0 0.0
    %858 = vmatprep.subr.mxu0 0.0
    %859 = vmatpush1.msra.mxu0 0.0
    %860 = vmatprep.mubr.f32.mxu0 0.0
    %861 = vmatmul.mubr.f32.gmra.mrb[0].mxu0 %v794
    %v862 = vpop.f32.mrb[0].mxu0
    %v863 = vadd.f32 %v321, %v862
    %v864 = vpop.f32.mrb[0].mxu0
    %865 = vdwg.mxu0
    %v866 = vadd.f32 %v789, %v863
    %v867 = vxor.u32 %v866, 2147483648
    %v868 = vmul.f32 %v867, 1.442695
    %v869 = vpow.pop %v868
    %v870 = vadd.f32 %v869, 1.0
    %v871 = vrcp.pop %v870
    %v872 = vmul.f32 1.0, %v871
    %874 = vrot.lane.b32.xlu0 %v863, 64
    %v875 = vpop.permute.xlu0 %874
    %v877 = vmul.f32 %v872, %v875
    %879 = vrot.lane.b32.xlu0 %v877, 64
    %v880 = vpop.permute.xlu0 %879
    %v882 = vadd.f32 %v789, %v880
    %v883 = vtanh.pop %v882
    %v884 = vsub.f32 %v787, %v883
    %886 = vrot.lane.b32.xlu0 %v884, 96
    %v887 = vpop.permute.xlu0 %886
    %v889 = vmul.f32 %v872, %v887
    %891 = vrot.lane.b32.xlu0 %v889, 32
    %v892 = vpop.permute.xlu0 %891
    %v894 = vadd.f32 %v883, %v892
    %896 = vrot.lane.b32.xlu0 %v788, 64
    %v897 = vpop.permute.xlu0 %896
    %v898 = vsel %vm323, %v897, 0
    %900 = vmatprep.subr.mxu0 0.0
    %901 = vmatpush1.msra.mxu0 %v306
    %902 = vmatprep.subr.mxu0 0.0
    %903 = vmatpush1.msra.mxu0 %v307
    %904 = vmatprep.subr.mxu0 0.0
    %905 = vmatpush1.msra.mxu0 %v308
    %906 = vmatprep.subr.mxu0 0.0
    %907 = vmatpush1.msra.mxu0 %v309
    %908 = vmatprep.subr.mxu0 0.0
    %909 = vmatpush1.msra.mxu0 0.0
    %910 = vmatprep.subr.mxu0 0.0
    %911 = vmatpush1.msra.mxu0 0.0
    %912 = vmatprep.subr.mxu0 0.0
    %913 = vmatpush1.msra.mxu0 0.0
    %914 = vmatprep.subr.mxu0 0.0
    %915 = vmatpush1.msra.mxu0 0.0
    %916 = vmatprep.subr.mxu0 0.0
    %917 = vmatpush1.msra.mxu0 0.0
    %918 = vmatprep.subr.mxu0 0.0
    %919 = vmatpush1.msra.mxu0 0.0
    %920 = vmatprep.subr.mxu0 0.0
    %921 = vmatpush1.msra.mxu0 0.0
    %922 = vmatprep.subr.mxu0 0.0
    %923 = vmatpush1.msra.mxu0 0.0
    %924 = vmatprep.subr.mxu0 0.0
    %925 = vmatpush1.msra.mxu0 0.0
    %926 = vmatprep.subr.mxu0 0.0
    %927 = vmatpush1.msra.mxu0 0.0
    %928 = vmatprep.subr.mxu0 0.0
    %929 = vmatpush1.msra.mxu0 0.0
    %930 = vmatprep.subr.mxu0 0.0
    %931 = vmatpush1.msra.mxu0 0.0
    %932 = vmatprep.subr.mxu0 0.0
    %933 = vmatpush1.msra.mxu0 0.0
    %934 = vmatprep.subr.mxu0 0.0
    %935 = vmatpush1.msra.mxu0 0.0
    %936 = vmatprep.subr.mxu0 0.0
    %937 = vmatpush1.msra.mxu0 0.0
    %938 = vmatprep.subr.mxu0 0.0
    %939 = vmatpush1.msra.mxu0 0.0
    %940 = vmatprep.subr.mxu0 0.0
    %941 = vmatpush1.msra.mxu0 0.0
    %942 = vmatprep.subr.mxu0 0.0
    %943 = vmatpush1.msra.mxu0 0.0
    %944 = vmatprep.subr.mxu0 0.0
    %945 = vmatpush1.msra.mxu0 0.0
    %946 = vmatprep.subr.mxu0 0.0
    %947 = vmatpush1.msra.mxu0 0.0
    %948 = vmatprep.subr.mxu0 0.0
    %949 = vmatpush1.msra.mxu0 0.0
    %950 = vmatprep.subr.mxu0 0.0
    %951 = vmatpush1.msra.mxu0 0.0
    %952 = vmatprep.subr.mxu0 0.0
    %953 = vmatpush1.msra.mxu0 0.0
    %954 = vmatprep.subr.mxu0 0.0
    %955 = vmatpush1.msra.mxu0 0.0
    %956 = vmatprep.subr.mxu0 0.0
    %957 = vmatpush1.msra.mxu0 0.0
    %958 = vmatprep.subr.mxu0 0.0
    %959 = vmatpush1.msra.mxu0 0.0
    %960 = vmatprep.subr.mxu0 0.0
    %961 = vmatpush1.msra.mxu0 0.0
    %962 = vmatprep.subr.mxu0 0.0
    %963 = vmatpush1.msra.mxu0 0.0
    %964 = vmatprep.mubr.f32.mxu0 0.0
    %965 = vmatmul.mubr.f32.gmra.mrb[0].mxu0 %v898
    %v966 = vpop.f32.mrb[0].mxu0
    %v967 = vadd.f32 %v434, %v966
    %v968 = vpop.f32.mrb[0].mxu0
    %969 = vdwg.mxu0
    %v970 = vadd.f32 %v790, %v967
    %v971 = vxor.u32 %v970, 2147483648
    %v972 = vmul.f32 %v971, 1.442695
    %v973 = vpow.pop %v972
    %v974 = vadd.f32 %v973, 1.0
    %v975 = vrcp.pop %v974
    %v976 = vmul.f32 1.0, %v975
    %978 = vrot.lane.b32.xlu0 %v967, 64
    %v979 = vpop.permute.xlu0 %978
    %v981 = vmul.f32 %v976, %v979
    %983 = vrot.lane.b32.xlu0 %v981, 64
    %v984 = vpop.permute.xlu0 %983
    %v986 = vadd.f32 %v790, %v984
    %v987 = vtanh.pop %v986
    %v988 = vsub.f32 %v788, %v987
    %990 = vrot.lane.b32.xlu0 %v988, 96
    %v991 = vpop.permute.xlu0 %990
    %v993 = vmul.f32 %v976, %v991
    %995 = vrot.lane.b32.xlu0 %v993, 32
    %v996 = vpop.permute.xlu0 %995
    %v998 = vadd.f32 %v987, %v996
    %v999 = vsel %vm296, %v894, 0.0
    %1001 = vrot.lane.b32.xlu0 %v999, 64
    %v1002 = vpop.permute.xlu0 %1001
    %s1004 = scalar_lea.vmem [#allocation8], 16
    %1005 = vst.msk [vmem:[%s1004] sm:$0xff] %vm323, %v1002
    %v1006 = vsel %vm299, %v998, 0.0
    %1008 = vrot.lane.b32.xlu0 %v1006, 64
    %v1009 = vpop.permute.xlu0 %1008
    %s1011 = scalar_lea.vmem [#allocation4], 40
    %1012 = vst.msk [vmem:[%s1011] sm:$0xff] %vm323, %v1009
    %v1013 = vsel %vm296, %v894, %v787
    %v1014 = vsel %vm299, %v998, %v788
    %v1015 = vld [vmem:[#allocation2 + $0x18] sm:$0xff]
    %v1016 = vld [vmem:[#allocation3 + $0x20] sm:$0xff]
    %1018 = vrot.lane.b32.xlu0 %v1013, 64
    %v1019 = vpop.permute.xlu0 %1018
    %v1020 = vsel %vm323, %v1019, 0
    %1022 = vmatprep.subr.mxu0 0.0
    %1023 = vmatpush1.msra.mxu0 %v302
    %1024 = vmatprep.subr.mxu0 0.0
    %1025 = vmatpush1.msra.mxu0 %v303
    %1026 = vmatprep.subr.mxu0 0.0
    %1027 = vmatpush1.msra.mxu0 %v304
    %1028 = vmatprep.subr.mxu0 0.0
    %1029 = vmatpush1.msra.mxu0 %v305
    %1030 = vmatprep.subr.mxu0 0.0
    %1031 = vmatpush1.msra.mxu0 0.0
    %1032 = vmatprep.subr.mxu0 0.0
    %1033 = vmatpush1.msra.mxu0 0.0
    %1034 = vmatprep.subr.mxu0 0.0
    %1035 = vmatpush1.msra.mxu0 0.0
    %1036 = vmatprep.subr.mxu0 0.0
    %1037 = vmatpush1.msra.mxu0 0.0
    %1038 = vmatprep.subr.mxu0 0.0
    %1039 = vmatpush1.msra.mxu0 0.0
    %1040 = vmatprep.subr.mxu0 0.0
    %1041 = vmatpush1.msra.mxu0 0.0
    %1042 = vmatprep.subr.mxu0 0.0
    %1043 = vmatpush1.msra.mxu0 0.0
    %1044 = vmatprep.subr.mxu0 0.0
    %1045 = vmatpush1.msra.mxu0 0.0
    %1046 = vmatprep.subr.mxu0 0.0
    %1047 = vmatpush1.msra.mxu0 0.0
    %1048 = vmatprep.subr.mxu0 0.0
    %1049 = vmatpush1.msra.mxu0 0.0
    %1050 = vmatprep.subr.mxu0 0.0
    %1051 = vmatpush1.msra.mxu0 0.0
    %1052 = vmatprep.subr.mxu0 0.0
    %1053 = vmatpush1.msra.mxu0 0.0
    %1054 = vmatprep.subr.mxu0 0.0
    %1055 = vmatpush1.msra.mxu0 0.0
    %1056 = vmatprep.subr.mxu0 0.0
    %1057 = vmatpush1.msra.mxu0 0.0
    %1058 = vmatprep.subr.mxu0 0.0
    %1059 = vmatpush1.msra.mxu0 0.0
    %1060 = vmatprep.subr.mxu0 0.0
    %1061 = vmatpush1.msra.mxu0 0.0
    %1062 = vmatprep.subr.mxu0 0.0
    %1063 = vmatpush1.msra.mxu0 0.0
    %1064 = vmatprep.subr.mxu0 0.0
    %1065 = vmatpush1.msra.mxu0 0.0
    %1066 = vmatprep.subr.mxu0 0.0
    %1067 = vmatpush1.msra.mxu0 0.0
    %1068 = vmatprep.subr.mxu0 0.0
    %1069 = vmatpush1.msra.mxu0 0.0
    %1070 = vmatprep.subr.mxu0 0.0
    %1071 = vmatpush1.msra.mxu0 0.0
    %1072 = vmatprep.subr.mxu0 0.0
    %1073 = vmatpush1.msra.mxu0 0.0
    %1074 = vmatprep.subr.mxu0 0.0
    %1075 = vmatpush1.msra.mxu0 0.0
    %1076 = vmatprep.subr.mxu0 0.0
    %1077 = vmatpush1.msra.mxu0 0.0
    %1078 = vmatprep.subr.mxu0 0.0
    %1079 = vmatpush1.msra.mxu0 0.0
    %1080 = vmatprep.subr.mxu0 0.0
    %1081 = vmatpush1.msra.mxu0 0.0
    %1082 = vmatprep.subr.mxu0 0.0
    %1083 = vmatpush1.msra.mxu0 0.0
    %1084 = vmatprep.subr.mxu0 0.0
    %1085 = vmatpush1.msra.mxu0 0.0
    %1086 = vmatprep.mubr.f32.mxu0 0.0
    %1087 = vmatmul.mubr.f32.gmra.mrb[0].mxu0 %v1020
    %v1088 = vpop.f32.mrb[0].mxu0
    %v1089 = vadd.f32 %v321, %v1088
    %v1090 = vpop.f32.mrb[0].mxu0
    %1091 = vdwg.mxu0
    %v1092 = vadd.f32 %v1015, %v1089
    %v1093 = vxor.u32 %v1092, 2147483648
    %v1094 = vmul.f32 %v1093, 1.442695
    %v1095 = vpow.pop %v1094
    %v1096 = vadd.f32 %v1095, 1.0
    %v1097 = vrcp.pop %v1096
    %v1098 = vmul.f32 1.0, %v1097
    %1100 = vrot.lane.b32.xlu0 %v1089, 64
    %v1101 = vpop.permute.xlu0 %1100
    %v1103 = vmul.f32 %v1098, %v1101
    %1105 = vrot.lane.b32.xlu0 %v1103, 64
    %v1106 = vpop.permute.xlu0 %1105
    %v1108 = vadd.f32 %v1015, %v1106
    %v1109 = vtanh.pop %v1108
    %v1110 = vsub.f32 %v1013, %v1109
    %1112 = vrot.lane.b32.xlu0 %v1110, 96
    %v1113 = vpop.permute.xlu0 %1112
    %v1115 = vmul.f32 %v1098, %v1113
    %1117 = vrot.lane.b32.xlu0 %v1115, 32
    %v1118 = vpop.permute.xlu0 %1117
    %v1120 = vadd.f32 %v1109, %v1118
    %1122 = vrot.lane.b32.xlu0 %v1014, 64
    %v1123 = vpop.permute.xlu0 %1122
    %v1124 = vsel %vm323, %v1123, 0
    %1126 = vmatprep.subr.mxu0 0.0
    %1127 = vmatpush1.msra.mxu0 %v306
    %1128 = vmatprep.subr.mxu0 0.0
    %1129 = vmatpush1.msra.mxu0 %v307
    %1130 = vmatprep.subr.mxu0 0.0
    %1131 = vmatpush1.msra.mxu0 %v308
    %1132 = vmatprep.subr.mxu0 0.0
    %1133 = vmatpush1.msra.mxu0 %v309
    %1134 = vmatprep.subr.mxu0 0.0
    %1135 = vmatpush1.msra.mxu0 0.0
    %1136 = vmatprep.subr.mxu0 0.0
    %1137 = vmatpush1.msra.mxu0 0.0
    %1138 = vmatprep.subr.mxu0 0.0
    %1139 = vmatpush1.msra.mxu0 0.0
    %1140 = vmatprep.subr.mxu0 0.0
    %1141 = vmatpush1.msra.mxu0 0.0
    %1142 = vmatprep.subr.mxu0 0.0
    %1143 = vmatpush1.msra.mxu0 0.0
    %1144 = vmatprep.subr.mxu0 0.0
    %1145 = vmatpush1.msra.mxu0 0.0
    %1146 = vmatprep.subr.mxu0 0.0
    %1147 = vmatpush1.msra.mxu0 0.0
    %1148 = vmatprep.subr.mxu0 0.0
    %1149 = vmatpush1.msra.mxu0 0.0
    %1150 = vmatprep.subr.mxu0 0.0
    %1151 = vmatpush1.msra.mxu0 0.0
    %1152 = vmatprep.subr.mxu0 0.0
    %1153 = vmatpush1.msra.mxu0 0.0
    %1154 = vmatprep.subr.mxu0 0.0
    %1155 = vmatpush1.msra.mxu0 0.0
    %1156 = vmatprep.subr.mxu0 0.0
    %1157 = vmatpush1.msra.mxu0 0.0
    %1158 = vmatprep.subr.mxu0 0.0
    %1159 = vmatpush1.msra.mxu0 0.0
    %1160 = vmatprep.subr.mxu0 0.0
    %1161 = vmatpush1.msra.mxu0 0.0
    %1162 = vmatprep.subr.mxu0 0.0
    %1163 = vmatpush1.msra.mxu0 0.0
    %1164 = vmatprep.subr.mxu0 0.0
    %1165 = vmatpush1.msra.mxu0 0.0
    %1166 = vmatprep.subr.mxu0 0.0
    %1167 = vmatpush1.msra.mxu0 0.0
    %1168 = vmatprep.subr.mxu0 0.0
    %1169 = vmatpush1.msra.mxu0 0.0
    %1170 = vmatprep.subr.mxu0 0.0
    %1171 = vmatpush1.msra.mxu0 0.0
    %1172 = vmatprep.subr.mxu0 0.0
    %1173 = vmatpush1.msra.mxu0 0.0
    %1174 = vmatprep.subr.mxu0 0.0
    %1175 = vmatpush1.msra.mxu0 0.0
    %1176 = vmatprep.subr.mxu0 0.0
    %1177 = vmatpush1.msra.mxu0 0.0
    %1178 = vmatprep.subr.mxu0 0.0
    %1179 = vmatpush1.msra.mxu0 0.0
    %1180 = vmatprep.subr.mxu0 0.0
    %1181 = vmatpush1.msra.mxu0 0.0
    %1182 = vmatprep.subr.mxu0 0.0
    %1183 = vmatpush1.msra.mxu0 0.0
    %1184 = vmatprep.subr.mxu0 0.0
    %1185 = vmatpush1.msra.mxu0 0.0
    %1186 = vmatprep.subr.mxu0 0.0
    %1187 = vmatpush1.msra.mxu0 0.0
    %1188 = vmatprep.subr.mxu0 0.0
    %1189 = vmatpush1.msra.mxu0 0.0
    %1190 = vmatprep.mubr.f32.mxu0 0.0
    %1191 = vmatmul.mubr.f32.gmra.mrb[0].mxu0 %v1124
    %v1192 = vpop.f32.mrb[0].mxu0
    %v1193 = vadd.f32 %v434, %v1192
    %v1194 = vpop.f32.mrb[0].mxu0
    %1195 = vdwg.mxu0
    %v1196 = vadd.f32 %v1016, %v1193
    %v1197 = vxor.u32 %v1196, 2147483648
    %v1198 = vmul.f32 %v1197, 1.442695
    %v1199 = vpow.pop %v1198
    %v1200 = vadd.f32 %v1199, 1.0
    %v1201 = vrcp.pop %v1200
    %v1202 = vmul.f32 1.0, %v1201
    %1204 = vrot.lane.b32.xlu0 %v1193, 64
    %v1205 = vpop.permute.xlu0 %1204
    %v1207 = vmul.f32 %v1202, %v1205
    %1209 = vrot.lane.b32.xlu0 %v1207, 64
    %v1210 = vpop.permute.xlu0 %1209
    %v1212 = vadd.f32 %v1016, %v1210
    %v1213 = vtanh.pop %v1212
    %v1214 = vsub.f32 %v1014, %v1213
    %1216 = vrot.lane.b32.xlu0 %v1214, 96
    %v1217 = vpop.permute.xlu0 %1216
    %v1219 = vmul.f32 %v1202, %v1217
    %1221 = vrot.lane.b32.xlu0 %v1219, 32
    %v1222 = vpop.permute.xlu0 %1221
    %v1224 = vadd.f32 %v1213, %v1222
    %v1225 = vsel %vm297, %v1120, 0.0
    %1227 = vrot.lane.b32.xlu0 %v1225, 64
    %v1228 = vpop.permute.xlu0 %1227
    %s1230 = scalar_lea.vmem [#allocation8], 24
    %1231 = vst.msk [vmem:[%s1230] sm:$0xff] %vm323, %v1228
    %v1232 = vsel %vm298, %v1224, 0.0
    %1234 = vrot.lane.b32.xlu0 %v1232, 64
    %v1235 = vpop.permute.xlu0 %1234
    %s1237 = scalar_lea.vmem [#allocation4], 32
    %1238 = vst.msk [vmem:[%s1237] sm:$0xff] %vm323, %v1235
    %v1239 = vsel %vm297, %v1120, %v1013
    %v1240 = vsel %vm298, %v1224, %v1014
    %v1241 = vld [vmem:[#allocation2 + $0x20] sm:$0xff]
    %v1242 = vld [vmem:[#allocation3 + $0x18] sm:$0xff]
    %1244 = vrot.lane.b32.xlu0 %v1239, 64
    %v1245 = vpop.permute.xlu0 %1244
    %v1246 = vsel %vm323, %v1245, 0
    %1248 = vmatprep.subr.mxu0 0.0
    %1249 = vmatpush1.msra.mxu0 %v302
    %1250 = vmatprep.subr.mxu0 0.0
    %1251 = vmatpush1.msra.mxu0 %v303
    %1252 = vmatprep.subr.mxu0 0.0
    %1253 = vmatpush1.msra.mxu0 %v304
    %1254 = vmatprep.subr.mxu0 0.0
    %1255 = vmatpush1.msra.mxu0 %v305
    %1256 = vmatprep.subr.mxu0 0.0
    %1257 = vmatpush1.msra.mxu0 0.0
    %1258 = vmatprep.subr.mxu0 0.0
    %1259 = vmatpush1.msra.mxu0 0.0
    %1260 = vmatprep.subr.mxu0 0.0
    %1261 = vmatpush1.msra.mxu0 0.0
    %1262 = vmatprep.subr.mxu0 0.0
    %1263 = vmatpush1.msra.mxu0 0.0
    %1264 = vmatprep.subr.mxu0 0.0
    %1265 = vmatpush1.msra.mxu0 0.0
    %1266 = vmatprep.subr.mxu0 0.0
    %1267 = vmatpush1.msra.mxu0 0.0
    %1268 = vmatprep.subr.mxu0 0.0
    %1269 = vmatpush1.msra.mxu0 0.0
    %1270 = vmatprep.subr.mxu0 0.0
    %1271 = vmatpush1.msra.mxu0 0.0
    %1272 = vmatprep.subr.mxu0 0.0
    %1273 = vmatpush1.msra.mxu0 0.0
    %1274 = vmatprep.subr.mxu0 0.0
    %1275 = vmatpush1.msra.mxu0 0.0
    %1276 = vmatprep.subr.mxu0 0.0
    %1277 = vmatpush1.msra.mxu0 0.0
    %1278 = vmatprep.subr.mxu0 0.0
    %1279 = vmatpush1.msra.mxu0 0.0
    %1280 = vmatprep.subr.mxu0 0.0
    %1281 = vmatpush1.msra.mxu0 0.0
    %1282 = vmatprep.subr.mxu0 0.0
    %1283 = vmatpush1.msra.mxu0 0.0
    %1284 = vmatprep.subr.mxu0 0.0
    %1285 = vmatpush1.msra.mxu0 0.0
    %1286 = vmatprep.subr.mxu0 0.0
    %1287 = vmatpush1.msra.mxu0 0.0
    %1288 = vmatprep.subr.mxu0 0.0
    %1289 = vmatpush1.msra.mxu0 0.0
    %1290 = vmatprep.subr.mxu0 0.0
    %1291 = vmatpush1.msra.mxu0 0.0
    %1292 = vmatprep.subr.mxu0 0.0
    %1293 = vmatpush1.msra.mxu0 0.0
    %1294 = vmatprep.subr.mxu0 0.0
    %1295 = vmatpush1.msra.mxu0 0.0
    %1296 = vmatprep.subr.mxu0 0.0
    %1297 = vmatpush1.msra.mxu0 0.0
    %1298 = vmatprep.subr.mxu0 0.0
    %1299 = vmatpush1.msra.mxu0 0.0
    %1300 = vmatprep.subr.mxu0 0.0
    %1301 = vmatpush1.msra.mxu0 0.0
    %1302 = vmatprep.subr.mxu0 0.0
    %1303 = vmatpush1.msra.mxu0 0.0
    %1304 = vmatprep.subr.mxu0 0.0
    %1305 = vmatpush1.msra.mxu0 0.0
    %1306 = vmatprep.subr.mxu0 0.0
    %1307 = vmatpush1.msra.mxu0 0.0
    %1308 = vmatprep.subr.mxu0 0.0
    %1309 = vmatpush1.msra.mxu0 0.0
    %1310 = vmatprep.subr.mxu0 0.0
    %1311 = vmatpush1.msra.mxu0 0.0
    %1312 = vmatprep.mubr.f32.mxu0 0.0
    %1313 = vmatmul.mubr.f32.gmra.mrb[0].mxu0 %v1246
    %v1314 = vpop.f32.mrb[0].mxu0
    %v1315 = vadd.f32 %v321, %v1314
    %v1316 = vpop.f32.mrb[0].mxu0
    %1317 = vdwg.mxu0
    %v1318 = vadd.f32 %v1241, %v1315
    %v1319 = vxor.u32 %v1318, 2147483648
    %v1320 = vmul.f32 %v1319, 1.442695
    %v1321 = vpow.pop %v1320
    %v1322 = vadd.f32 %v1321, 1.0
    %v1323 = vrcp.pop %v1322
    %v1324 = vmul.f32 1.0, %v1323
    %1326 = vrot.lane.b32.xlu0 %v1315, 64
    %v1327 = vpop.permute.xlu0 %1326
    %v1329 = vmul.f32 %v1324, %v1327
    %1331 = vrot.lane.b32.xlu0 %v1329, 64
    %v1332 = vpop.permute.xlu0 %1331
    %v1334 = vadd.f32 %v1241, %v1332
    %v1335 = vtanh.pop %v1334
    %v1336 = vsub.f32 %v1239, %v1335
    %1338 = vrot.lane.b32.xlu0 %v1336, 96
    %v1339 = vpop.permute.xlu0 %1338
    %v1341 = vmul.f32 %v1324, %v1339
    %1343 = vrot.lane.b32.xlu0 %v1341, 32
    %v1344 = vpop.permute.xlu0 %1343
    %v1346 = vadd.f32 %v1335, %v1344
    %1348 = vrot.lane.b32.xlu0 %v1240, 64
    %v1349 = vpop.permute.xlu0 %1348
    %v1350 = vsel %vm323, %v1349, 0
    %1352 = vmatprep.subr.mxu0 0.0
    %1353 = vmatpush1.msra.mxu0 %v306
    %1354 = vmatprep.subr.mxu0 0.0
    %1355 = vmatpush1.msra.mxu0 %v307
    %1356 = vmatprep.subr.mxu0 0.0
    %1357 = vmatpush1.msra.mxu0 %v308
    %1358 = vmatprep.subr.mxu0 0.0
    %1359 = vmatpush1.msra.mxu0 %v309
    %1360 = vmatprep.subr.mxu0 0.0
    %1361 = vmatpush1.msra.mxu0 0.0
    %1362 = vmatprep.subr.mxu0 0.0
    %1363 = vmatpush1.msra.mxu0 0.0
    %1364 = vmatprep.subr.mxu0 0.0
    %1365 = vmatpush1.msra.mxu0 0.0
    %1366 = vmatprep.subr.mxu0 0.0
    %1367 = vmatpush1.msra.mxu0 0.0
    %1368 = vmatprep.subr.mxu0 0.0
    %1369 = vmatpush1.msra.mxu0 0.0
    %1370 = vmatprep.subr.mxu0 0.0
    %1371 = vmatpush1.msra.mxu0 0.0
    %1372 = vmatprep.subr.mxu0 0.0
    %1373 = vmatpush1.msra.mxu0 0.0
    %1374 = vmatprep.subr.mxu0 0.0
    %1375 = vmatpush1.msra.mxu0 0.0
    %1376 = vmatprep.subr.mxu0 0.0
    %1377 = vmatpush1.msra.mxu0 0.0
    %1378 = vmatprep.subr.mxu0 0.0
    %1379 = vmatpush1.msra.mxu0 0.0
    %1380 = vmatprep.subr.mxu0 0.0
    %1381 = vmatpush1.msra.mxu0 0.0
    %1382 = vmatprep.subr.mxu0 0.0
    %1383 = vmatpush1.msra.mxu0 0.0
    %1384 = vmatprep.subr.mxu0 0.0
    %1385 = vmatpush1.msra.mxu0 0.0
    %1386 = vmatprep.subr.mxu0 0.0
    %1387 = vmatpush1.msra.mxu0 0.0
    %1388 = vmatprep.subr.mxu0 0.0
    %1389 = vmatpush1.msra.mxu0 0.0
    %1390 = vmatprep.subr.mxu0 0.0
    %1391 = vmatpush1.msra.mxu0 0.0
    %1392 = vmatprep.subr.mxu0 0.0
    %1393 = vmatpush1.msra.mxu0 0.0
    %1394 = vmatprep.subr.mxu0 0.0
    %1395 = vmatpush1.msra.mxu0 0.0
    %1396 = vmatprep.subr.mxu0 0.0
    %1397 = vmatpush1.msra.mxu0 0.0
    %1398 = vmatprep.subr.mxu0 0.0
    %1399 = vmatpush1.msra.mxu0 0.0
    %1400 = vmatprep.subr.mxu0 0.0
    %1401 = vmatpush1.msra.mxu0 0.0
    %1402 = vmatprep.subr.mxu0 0.0
    %1403 = vmatpush1.msra.mxu0 0.0
    %1404 = vmatprep.subr.mxu0 0.0
    %1405 = vmatpush1.msra.mxu0 0.0
    %1406 = vmatprep.subr.mxu0 0.0
    %1407 = vmatpush1.msra.mxu0 0.0
    %1408 = vmatprep.subr.mxu0 0.0
    %1409 = vmatpush1.msra.mxu0 0.0
    %1410 = vmatprep.subr.mxu0 0.0
    %1411 = vmatpush1.msra.mxu0 0.0
    %1412 = vmatprep.subr.mxu0 0.0
    %1413 = vmatpush1.msra.mxu0 0.0
    %1414 = vmatprep.subr.mxu0 0.0
    %1415 = vmatpush1.msra.mxu0 0.0
    %1416 = vmatprep.mubr.f32.mxu0 0.0
    %1417 = vmatmul.mubr.f32.gmra.mrb[0].mxu0 %v1350
    %v1418 = vpop.f32.mrb[0].mxu0
    %v1419 = vadd.f32 %v434, %v1418
    %v1420 = vpop.f32.mrb[0].mxu0
    %1421 = vdwg.mxu0
    %v1422 = vadd.f32 %v1242, %v1419
    %v1423 = vxor.u32 %v1422, 2147483648
    %v1424 = vmul.f32 %v1423, 1.442695
    %v1425 = vpow.pop %v1424
    %v1426 = vadd.f32 %v1425, 1.0
    %v1427 = vrcp.pop %v1426
    %v1428 = vmul.f32 1.0, %v1427
    %1430 = vrot.lane.b32.xlu0 %v1419, 64
    %v1431 = vpop.permute.xlu0 %1430
    %v1433 = vmul.f32 %v1428, %v1431
    %1435 = vrot.lane.b32.xlu0 %v1433, 64
    %v1436 = vpop.permute.xlu0 %1435
    %v1438 = vadd.f32 %v1242, %v1436
    %v1439 = vtanh.pop %v1438
    %v1440 = vsub.f32 %v1240, %v1439
    %1442 = vrot.lane.b32.xlu0 %v1440, 96
    %v1443 = vpop.permute.xlu0 %1442
    %v1445 = vmul.f32 %v1428, %v1443
    %1447 = vrot.lane.b32.xlu0 %v1445, 32
    %v1448 = vpop.permute.xlu0 %1447
    %v1450 = vadd.f32 %v1439, %v1448
    %v1451 = vsel %vm298, %v1346, 0.0
    %1453 = vrot.lane.b32.xlu0 %v1451, 64
    %v1454 = vpop.permute.xlu0 %1453
    %s1456 = scalar_lea.vmem [#allocation8], 32
    %1457 = vst.msk [vmem:[%s1456] sm:$0xff] %vm323, %v1454
    %v1458 = vsel %vm297, %v1450, 0.0
    %1460 = vrot.lane.b32.xlu0 %v1458, 64
    %v1461 = vpop.permute.xlu0 %1460
    %s1463 = scalar_lea.vmem [#allocation4], 24
    %1464 = vst.msk [vmem:[%s1463] sm:$0xff] %vm323, %v1461
    %v1465 = vsel %vm298, %v1346, %v1239
    %v1466 = vsel %vm297, %v1450, %v1240
    %v1467 = vld [vmem:[#allocation2 + $0x28] sm:$0xff]
    %v1468 = vld [vmem:[#allocation3 + $0x10] sm:$0xff]
    %1470 = vrot.lane.b32.xlu0 %v1465, 64
    %v1471 = vpop.permute.xlu0 %1470
    %v1472 = vsel %vm323, %v1471, 0
    %1474 = vmatprep.subr.mxu0 0.0
    %1475 = vmatpush1.msra.mxu0 %v302
    %1476 = vmatprep.subr.mxu0 0.0
    %1477 = vmatpush1.msra.mxu0 %v303
    %1478 = vmatprep.subr.mxu0 0.0
    %1479 = vmatpush1.msra.mxu0 %v304
    %1480 = vmatprep.subr.mxu0 0.0
    %1481 = vmatpush1.msra.mxu0 %v305
    %1482 = vmatprep.subr.mxu0 0.0
    %1483 = vmatpush1.msra.mxu0 0.0
    %1484 = vmatprep.subr.mxu0 0.0
    %1485 = vmatpush1.msra.mxu0 0.0
    %1486 = vmatprep.subr.mxu0 0.0
    %1487 = vmatpush1.msra.mxu0 0.0
    %1488 = vmatprep.subr.mxu0 0.0
    %1489 = vmatpush1.msra.mxu0 0.0
    %1490 = vmatprep.subr.mxu0 0.0
    %1491 = vmatpush1.msra.mxu0 0.0
    %1492 = vmatprep.subr.mxu0 0.0
    %1493 = vmatpush1.msra.mxu0 0.0
    %1494 = vmatprep.subr.mxu0 0.0
    %1495 = vmatpush1.msra.mxu0 0.0
    %1496 = vmatprep.subr.mxu0 0.0
    %1497 = vmatpush1.msra.mxu0 0.0
    %1498 = vmatprep.subr.mxu0 0.0
    %1499 = vmatpush1.msra.mxu0 0.0
    %1500 = vmatprep.subr.mxu0 0.0
    %1501 = vmatpush1.msra.mxu0 0.0
    %1502 = vmatprep.subr.mxu0 0.0
    %1503 = vmatpush1.msra.mxu0 0.0
    %1504 = vmatprep.subr.mxu0 0.0
    %1505 = vmatpush1.msra.mxu0 0.0
    %1506 = vmatprep.subr.mxu0 0.0
    %1507 = vmatpush1.msra.mxu0 0.0
    %1508 = vmatprep.subr.mxu0 0.0
    %1509 = vmatpush1.msra.mxu0 0.0
    %1510 = vmatprep.subr.mxu0 0.0
    %1511 = vmatpush1.msra.mxu0 0.0
    %1512 = vmatprep.subr.mxu0 0.0
    %1513 = vmatpush1.msra.mxu0 0.0
    %1514 = vmatprep.subr.mxu0 0.0
    %1515 = vmatpush1.msra.mxu0 0.0
    %1516 = vmatprep.subr.mxu0 0.0
    %1517 = vmatpush1.msra.mxu0 0.0
    %1518 = vmatprep.subr.mxu0 0.0
    %1519 = vmatpush1.msra.mxu0 0.0
    %1520 = vmatprep.subr.mxu0 0.0
    %1521 = vmatpush1.msra.mxu0 0.0
    %1522 = vmatprep.subr.mxu0 0.0
    %1523 = vmatpush1.msra.mxu0 0.0
    %1524 = vmatprep.subr.mxu0 0.0
    %1525 = vmatpush1.msra.mxu0 0.0
    %1526 = vmatprep.subr.mxu0 0.0
    %1527 = vmatpush1.msra.mxu0 0.0
    %1528 = vmatprep.subr.mxu0 0.0
    %1529 = vmatpush1.msra.mxu0 0.0
    %1530 = vmatprep.subr.mxu0 0.0
    %1531 = vmatpush1.msra.mxu0 0.0
    %1532 = vmatprep.subr.mxu0 0.0
    %1533 = vmatpush1.msra.mxu0 0.0
    %1534 = vmatprep.subr.mxu0 0.0
    %1535 = vmatpush1.msra.mxu0 0.0
    %1536 = vmatprep.subr.mxu0 0.0
    %1537 = vmatpush1.msra.mxu0 0.0
    %1538 = vmatprep.mubr.f32.mxu0 0.0
    %1539 = vmatmul.mubr.f32.gmra.mrb[0].mxu0 %v1472
    %v1540 = vpop.f32.mrb[0].mxu0
    %v1541 = vadd.f32 %v321, %v1540
    %v1542 = vpop.f32.mrb[0].mxu0
    %1543 = vdwg.mxu0
    %v1544 = vadd.f32 %v1467, %v1541
    %v1545 = vxor.u32 %v1544, 2147483648
    %v1546 = vmul.f32 %v1545, 1.442695
    %v1547 = vpow.pop %v1546
    %v1548 = vadd.f32 %v1547, 1.0
    %v1549 = vrcp.pop %v1548
    %v1550 = vmul.f32 1.0, %v1549
    %1552 = vrot.lane.b32.xlu0 %v1541, 64
    %v1553 = vpop.permute.xlu0 %1552
    %v1555 = vmul.f32 %v1550, %v1553
    %1557 = vrot.lane.b32.xlu0 %v1555, 64
    %v1558 = vpop.permute.xlu0 %1557
    %v1560 = vadd.f32 %v1467, %v1558
    %v1561 = vtanh.pop %v1560
    %v1562 = vsub.f32 %v1465, %v1561
    %1564 = vrot.lane.b32.xlu0 %v1562, 96
    %v1565 = vpop.permute.xlu0 %1564
    %v1567 = vmul.f32 %v1550, %v1565
    %1569 = vrot.lane.b32.xlu0 %v1567, 32
    %v1570 = vpop.permute.xlu0 %1569
    %v1572 = vadd.f32 %v1561, %v1570
    %1574 = vrot.lane.b32.xlu0 %v1466, 64
    %v1575 = vpop.permute.xlu0 %1574
    %v1576 = vsel %vm323, %v1575, 0
    %1578 = vmatprep.subr.mxu0 0.0
    %1579 = vmatpush1.msra.mxu0 %v306
    %1580 = vmatprep.subr.mxu0 0.0
    %1581 = vmatpush1.msra.mxu0 %v307
    %1582 = vmatprep.subr.mxu0 0.0
    %1583 = vmatpush1.msra.mxu0 %v308
    %1584 = vmatprep.subr.mxu0 0.0
    %1585 = vmatpush1.msra.mxu0 %v309
    %1586 = vmatprep.subr.mxu0 0.0
    %1587 = vmatpush1.msra.mxu0 0.0
    %1588 = vmatprep.subr.mxu0 0.0
    %1589 = vmatpush1.msra.mxu0 0.0
    %1590 = vmatprep.subr.mxu0 0.0
    %1591 = vmatpush1.msra.mxu0 0.0
    %1592 = vmatprep.subr.mxu0 0.0
    %1593 = vmatpush1.msra.mxu0 0.0
    %1594 = vmatprep.subr.mxu0 0.0
    %1595 = vmatpush1.msra.mxu0 0.0
    %1596 = vmatprep.subr.mxu0 0.0
    %1597 = vmatpush1.msra.mxu0 0.0
    %1598 = vmatprep.subr.mxu0 0.0
    %1599 = vmatpush1.msra.mxu0 0.0
    %1600 = vmatprep.subr.mxu0 0.0
    %1601 = vmatpush1.msra.mxu0 0.0
    %1602 = vmatprep.subr.mxu0 0.0
    %1603 = vmatpush1.msra.mxu0 0.0
    %1604 = vmatprep.subr.mxu0 0.0
    %1605 = vmatpush1.msra.mxu0 0.0
    %1606 = vmatprep.subr.mxu0 0.0
    %1607 = vmatpush1.msra.mxu0 0.0
    %1608 = vmatprep.subr.mxu0 0.0
    %1609 = vmatpush1.msra.mxu0 0.0
    %1610 = vmatprep.subr.mxu0 0.0
    %1611 = vmatpush1.msra.mxu0 0.0
    %1612 = vmatprep.subr.mxu0 0.0
    %1613 = vmatpush1.msra.mxu0 0.0
    %1614 = vmatprep.subr.mxu0 0.0
    %1615 = vmatpush1.msra.mxu0 0.0
    %1616 = vmatprep.subr.mxu0 0.0
    %1617 = vmatpush1.msra.mxu0 0.0
    %1618 = vmatprep.subr.mxu0 0.0
    %1619 = vmatpush1.msra.mxu0 0.0
    %1620 = vmatprep.subr.mxu0 0.0
    %1621 = vmatpush1.msra.mxu0 0.0
    %1622 = vmatprep.subr.mxu0 0.0
    %1623 = vmatpush1.msra.mxu0 0.0
    %1624 = vmatprep.subr.mxu0 0.0
    %1625 = vmatpush1.msra.mxu0 0.0
    %1626 = vmatprep.subr.mxu0 0.0
    %1627 = vmatpush1.msra.mxu0 0.0
    %1628 = vmatprep.subr.mxu0 0.0
    %1629 = vmatpush1.msra.mxu0 0.0
    %1630 = vmatprep.subr.mxu0 0.0
    %1631 = vmatpush1.msra.mxu0 0.0
    %1632 = vmatprep.subr.mxu0 0.0
    %1633 = vmatpush1.msra.mxu0 0.0
    %1634 = vmatprep.subr.mxu0 0.0
    %1635 = vmatpush1.msra.mxu0 0.0
    %1636 = vmatprep.subr.mxu0 0.0
    %1637 = vmatpush1.msra.mxu0 0.0
    %1638 = vmatprep.subr.mxu0 0.0
    %1639 = vmatpush1.msra.mxu0 0.0
    %1640 = vmatprep.subr.mxu0 0.0
    %1641 = vmatpush1.msra.mxu0 0.0
    %1642 = vmatprep.mubr.f32.mxu0 0.0
    %1643 = vmatmul.mubr.f32.gmra.mrb[0].mxu0 %v1576
    %v1644 = vpop.f32.mrb[0].mxu0
    %v1645 = vadd.f32 %v434, %v1644
    %v1646 = vpop.f32.mrb[0].mxu0
    %1647 = vdwg.mxu0
    %v1648 = vadd.f32 %v1468, %v1645
    %v1649 = vxor.u32 %v1648, 2147483648
    %v1650 = vmul.f32 %v1649, 1.442695
    %v1651 = vpow.pop %v1650
    %v1652 = vadd.f32 %v1651, 1.0
    %v1653 = vrcp.pop %v1652
    %v1654 = vmul.f32 1.0, %v1653
    %1656 = vrot.lane.b32.xlu0 %v1645, 64
    %v1657 = vpop.permute.xlu0 %1656
    %v1659 = vmul.f32 %v1654, %v1657
    %1661 = vrot.lane.b32.xlu0 %v1659, 64
    %v1662 = vpop.permute.xlu0 %1661
    %v1664 = vadd.f32 %v1468, %v1662
    %v1665 = vtanh.pop %v1664
    %v1666 = vsub.f32 %v1466, %v1665
    %1668 = vrot.lane.b32.xlu0 %v1666, 96
    %v1669 = vpop.permute.xlu0 %1668
    %v1671 = vmul.f32 %v1654, %v1669
    %1673 = vrot.lane.b32.xlu0 %v1671, 32
    %v1674 = vpop.permute.xlu0 %1673
    %v1676 = vadd.f32 %v1665, %v1674
    %v1677 = vsel %vm299, %v1572, 0.0
    %1679 = vrot.lane.b32.xlu0 %v1677, 64
    %v1680 = vpop.permute.xlu0 %1679
    %s1682 = scalar_lea.vmem [#allocation8], 40
    %1683 = vst.msk [vmem:[%s1682] sm:$0xff] %vm323, %v1680
    %v1684 = vsel %vm296, %v1676, 0.0
    %1686 = vrot.lane.b32.xlu0 %v1684, 64
    %v1687 = vpop.permute.xlu0 %1686
    %s1689 = scalar_lea.vmem [#allocation4], 16
    %1690 = vst.msk [vmem:[%s1689] sm:$0xff] %vm323, %v1687
    %v1691 = vsel %vm299, %v1572, %v1465
    %v1692 = vsel %vm296, %v1676, %v1466
    %v1693 = vld [vmem:[#allocation2 + $0x30] sm:$0xff]
    %v1694 = vld [vmem:[#allocation3 + $0x8] sm:$0xff]
    %1696 = vrot.lane.b32.xlu0 %v1691, 64
    %v1697 = vpop.permute.xlu0 %1696
    %v1698 = vsel %vm323, %v1697, 0
    %1700 = vmatprep.subr.mxu0 0.0
    %1701 = vmatpush1.msra.mxu0 %v302
    %1702 = vmatprep.subr.mxu0 0.0
    %1703 = vmatpush1.msra.mxu0 %v303
    %1704 = vmatprep.subr.mxu0 0.0
    %1705 = vmatpush1.msra.mxu0 %v304
    %1706 = vmatprep.subr.mxu0 0.0
    %1707 = vmatpush1.msra.mxu0 %v305
    %1708 = vmatprep.subr.mxu0 0.0
    %1709 = vmatpush1.msra.mxu0 0.0
    %1710 = vmatprep.subr.mxu0 0.0
    %1711 = vmatpush1.msra.mxu0 0.0
    %1712 = vmatprep.subr.mxu0 0.0
    %1713 = vmatpush1.msra.mxu0 0.0
    %1714 = vmatprep.subr.mxu0 0.0
    %1715 = vmatpush1.msra.mxu0 0.0
    %1716 = vmatprep.subr.mxu0 0.0
    %1717 = vmatpush1.msra.mxu0 0.0
    %1718 = vmatprep.subr.mxu0 0.0
    %1719 = vmatpush1.msra.mxu0 0.0
    %1720 = vmatprep.subr.mxu0 0.0
    %1721 = vmatpush1.msra.mxu0 0.0
    %1722 = vmatprep.subr.mxu0 0.0
    %1723 = vmatpush1.msra.mxu0 0.0
    %1724 = vmatprep.subr.mxu0 0.0
    %1725 = vmatpush1.msra.mxu0 0.0
    %1726 = vmatprep.subr.mxu0 0.0
    %1727 = vmatpush1.msra.mxu0 0.0
    %1728 = vmatprep.subr.mxu0 0.0
    %1729 = vmatpush1.msra.mxu0 0.0
    %1730 = vmatprep.subr.mxu0 0.0
    %1731 = vmatpush1.msra.mxu0 0.0
    %1732 = vmatprep.subr.mxu0 0.0
    %1733 = vmatpush1.msra.mxu0 0.0
    %1734 = vmatprep.subr.mxu0 0.0
    %1735 = vmatpush1.msra.mxu0 0.0
    %1736 = vmatprep.subr.mxu0 0.0
    %1737 = vmatpush1.msra.mxu0 0.0
    %1738 = vmatprep.subr.mxu0 0.0
    %1739 = vmatpush1.msra.mxu0 0.0
    %1740 = vmatprep.subr.mxu0 0.0
    %1741 = vmatpush1.msra.mxu0 0.0
    %1742 = vmatprep.subr.mxu0 0.0
    %1743 = vmatpush1.msra.mxu0 0.0
    %1744 = vmatprep.subr.mxu0 0.0
    %1745 = vmatpush1.msra.mxu0 0.0
    %1746 = vmatprep.subr.mxu0 0.0
    %1747 = vmatpush1.msra.mxu0 0.0
    %1748 = vmatprep.subr.mxu0 0.0
    %1749 = vmatpush1.msra.mxu0 0.0
    %1750 = vmatprep.subr.mxu0 0.0
    %1751 = vmatpush1.msra.mxu0 0.0
    %1752 = vmatprep.subr.mxu0 0.0
    %1753 = vmatpush1.msra.mxu0 0.0
    %1754 = vmatprep.subr.mxu0 0.0
    %1755 = vmatpush1.msra.mxu0 0.0
    %1756 = vmatprep.subr.mxu0 0.0
    %1757 = vmatpush1.msra.mxu0 0.0
    %1758 = vmatprep.subr.mxu0 0.0
    %1759 = vmatpush1.msra.mxu0 0.0
    %1760 = vmatprep.subr.mxu0 0.0
    %1761 = vmatpush1.msra.mxu0 0.0
    %1762 = vmatprep.subr.mxu0 0.0
    %1763 = vmatpush1.msra.mxu0 0.0
    %1764 = vmatprep.mubr.f32.mxu0 0.0
    %1765 = vmatmul.mubr.f32.gmra.mrb[0].mxu0 %v1698
    %v1766 = vpop.f32.mrb[0].mxu0
    %v1767 = vadd.f32 %v321, %v1766
    %v1768 = vpop.f32.mrb[0].mxu0
    %1769 = vdwg.mxu0
    %v1770 = vadd.f32 %v1693, %v1767
    %v1771 = vxor.u32 %v1770, 2147483648
    %v1772 = vmul.f32 %v1771, 1.442695
    %v1773 = vpow.pop %v1772
    %v1774 = vadd.f32 %v1773, 1.0
    %v1775 = vrcp.pop %v1774
    %v1776 = vmul.f32 1.0, %v1775
    %1778 = vrot.lane.b32.xlu0 %v1767, 64
    %v1779 = vpop.permute.xlu0 %1778
    %v1781 = vmul.f32 %v1776, %v1779
    %1783 = vrot.lane.b32.xlu0 %v1781, 64
    %v1784 = vpop.permute.xlu0 %1783
    %v1786 = vadd.f32 %v1693, %v1784
    %v1787 = vtanh.pop %v1786
    %v1788 = vsub.f32 %v1691, %v1787
    %1790 = vrot.lane.b32.xlu0 %v1788, 96
    %v1791 = vpop.permute.xlu0 %1790
    %v1793 = vmul.f32 %v1776, %v1791
    %1795 = vrot.lane.b32.xlu0 %v1793, 32
    %v1796 = vpop.permute.xlu0 %1795
    %v1798 = vadd.f32 %v1787, %v1796
    %1800 = vrot.lane.b32.xlu0 %v1692, 64
    %v1801 = vpop.permute.xlu0 %1800
    %v1802 = vsel %vm323, %v1801, 0
    %1804 = vmatprep.subr.mxu0 0.0
    %1805 = vmatpush1.msra.mxu0 %v306
    %1806 = vmatprep.subr.mxu0 0.0
    %1807 = vmatpush1.msra.mxu0 %v307
    %1808 = vmatprep.subr.mxu0 0.0
    %1809 = vmatpush1.msra.mxu0 %v308
    %1810 = vmatprep.subr.mxu0 0.0
    %1811 = vmatpush1.msra.mxu0 %v309
    %1812 = vmatprep.subr.mxu0 0.0
    %1813 = vmatpush1.msra.mxu0 0.0
    %1814 = vmatprep.subr.mxu0 0.0
    %1815 = vmatpush1.msra.mxu0 0.0
    %1816 = vmatprep.subr.mxu0 0.0
    %1817 = vmatpush1.msra.mxu0 0.0
    %1818 = vmatprep.subr.mxu0 0.0
    %1819 = vmatpush1.msra.mxu0 0.0
    %1820 = vmatprep.subr.mxu0 0.0
    %1821 = vmatpush1.msra.mxu0 0.0
    %1822 = vmatprep.subr.mxu0 0.0
    %1823 = vmatpush1.msra.mxu0 0.0
    %1824 = vmatprep.subr.mxu0 0.0
    %1825 = vmatpush1.msra.mxu0 0.0
    %1826 = vmatprep.subr.mxu0 0.0
    %1827 = vmatpush1.msra.mxu0 0.0
    %1828 = vmatprep.subr.mxu0 0.0
    %1829 = vmatpush1.msra.mxu0 0.0
    %1830 = vmatprep.subr.mxu0 0.0
    %1831 = vmatpush1.msra.mxu0 0.0
    %1832 = vmatprep.subr.mxu0 0.0
    %1833 = vmatpush1.msra.mxu0 0.0
    %1834 = vmatprep.subr.mxu0 0.0
    %1835 = vmatpush1.msra.mxu0 0.0
    %1836 = vmatprep.subr.mxu0 0.0
    %1837 = vmatpush1.msra.mxu0 0.0
    %1838 = vmatprep.subr.mxu0 0.0
    %1839 = vmatpush1.msra.mxu0 0.0
    %1840 = vmatprep.subr.mxu0 0.0
    %1841 = vmatpush1.msra.mxu0 0.0
    %1842 = vmatprep.subr.mxu0 0.0
    %1843 = vmatpush1.msra.mxu0 0.0
    %1844 = vmatprep.subr.mxu0 0.0
    %1845 = vmatpush1.msra.mxu0 0.0
    %1846 = vmatprep.subr.mxu0 0.0
    %1847 = vmatpush1.msra.mxu0 0.0
    %1848 = vmatprep.subr.mxu0 0.0
    %1849 = vmatpush1.msra.mxu0 0.0
    %1850 = vmatprep.subr.mxu0 0.0
    %1851 = vmatpush1.msra.mxu0 0.0
    %1852 = vmatprep.subr.mxu0 0.0
    %1853 = vmatpush1.msra.mxu0 0.0
    %1854 = vmatprep.subr.mxu0 0.0
    %1855 = vmatpush1.msra.mxu0 0.0
    %1856 = vmatprep.subr.mxu0 0.0
    %1857 = vmatpush1.msra.mxu0 0.0
    %1858 = vmatprep.subr.mxu0 0.0
    %1859 = vmatpush1.msra.mxu0 0.0
    %1860 = vmatprep.subr.mxu0 0.0
    %1861 = vmatpush1.msra.mxu0 0.0
    %1862 = vmatprep.subr.mxu0 0.0
    %1863 = vmatpush1.msra.mxu0 0.0
    %1864 = vmatprep.subr.mxu0 0.0
    %1865 = vmatpush1.msra.mxu0 0.0
    %1866 = vmatprep.subr.mxu0 0.0
    %1867 = vmatpush1.msra.mxu0 0.0
    %1868 = vmatprep.mubr.f32.mxu0 0.0
    %1869 = vmatmul.mubr.f32.gmra.mrb[0].mxu0 %v1802
    %v1870 = vpop.f32.mrb[0].mxu0
    %v1871 = vadd.f32 %v434, %v1870
    %v1872 = vpop.f32.mrb[0].mxu0
    %1873 = vdwg.mxu0
    %v1874 = vadd.f32 %v1694, %v1871
    %v1875 = vxor.u32 %v1874, 2147483648
    %v1876 = vmul.f32 %v1875, 1.442695
    %v1877 = vpow.pop %v1876
    %v1878 = vadd.f32 %v1877, 1.0
    %v1879 = vrcp.pop %v1878
    %v1880 = vmul.f32 1.0, %v1879
    %1882 = vrot.lane.b32.xlu0 %v1871, 64
    %v1883 = vpop.permute.xlu0 %1882
    %v1885 = vmul.f32 %v1880, %v1883
    %1887 = vrot.lane.b32.xlu0 %v1885, 64
    %v1888 = vpop.permute.xlu0 %1887
    %v1890 = vadd.f32 %v1694, %v1888
    %v1891 = vtanh.pop %v1890
    %v1892 = vsub.f32 %v1692, %v1891
    %1894 = vrot.lane.b32.xlu0 %v1892, 96
    %v1895 = vpop.permute.xlu0 %1894
    %v1897 = vmul.f32 %v1880, %v1895
    %1899 = vrot.lane.b32.xlu0 %v1897, 32
    %v1900 = vpop.permute.xlu0 %1899
    %v1902 = vadd.f32 %v1891, %v1900
    %v1903 = vsel %vm300, %v1798, 0.0
    %1905 = vrot.lane.b32.xlu0 %v1903, 64
    %v1906 = vpop.permute.xlu0 %1905
    %s1908 = scalar_lea.vmem [#allocation8], 48
    %1909 = vst.msk [vmem:[%s1908] sm:$0xff] %vm323, %v1906
    %v1910 = vsel %vm295, %v1902, 0.0
    %1912 = vrot.lane.b32.xlu0 %v1910, 64
    %v1913 = vpop.permute.xlu0 %1912
    %s1915 = scalar_lea.vmem [#allocation4], 8
    %1916 = vst.msk [vmem:[%s1915] sm:$0xff] %vm323, %v1913
    %v1917 = vsel %vm300, %v1798, %v1691
    %v1918 = vsel %vm295, %v1902, %v1692
    %v1919 = vld [vmem:[#allocation2 + $0x38] sm:$0xff]
    %v1920 = vld [vmem:[#allocation3] sm:$0xff]
    %1922 = vrot.lane.b32.xlu0 %v1917, 64
    %v1923 = vpop.permute.xlu0 %1922
    %v1924 = vsel %vm323, %v1923, 0
    %1926 = vmatprep.subr.mxu0 0.0
    %1927 = vmatpush1.msra.mxu0 %v302
    %1928 = vmatprep.subr.mxu0 0.0
    %1929 = vmatpush1.msra.mxu0 %v303
    %1930 = vmatprep.subr.mxu0 0.0
    %1931 = vmatpush1.msra.mxu0 %v304
    %1932 = vmatprep.subr.mxu0 0.0
    %1933 = vmatpush1.msra.mxu0 %v305
    %1934 = vmatprep.subr.mxu0 0.0
    %1935 = vmatpush1.msra.mxu0 0.0
    %1936 = vmatprep.subr.mxu0 0.0
    %1937 = vmatpush1.msra.mxu0 0.0
    %1938 = vmatprep.subr.mxu0 0.0
    %1939 = vmatpush1.msra.mxu0 0.0
    %1940 = vmatprep.subr.mxu0 0.0
    %1941 = vmatpush1.msra.mxu0 0.0
    %1942 = vmatprep.subr.mxu0 0.0
    %1943 = vmatpush1.msra.mxu0 0.0
    %1944 = vmatprep.subr.mxu0 0.0
    %1945 = vmatpush1.msra.mxu0 0.0
    %1946 = vmatprep.subr.mxu0 0.0
    %1947 = vmatpush1.msra.mxu0 0.0
    %1948 = vmatprep.subr.mxu0 0.0
    %1949 = vmatpush1.msra.mxu0 0.0
    %1950 = vmatprep.subr.mxu0 0.0
    %1951 = vmatpush1.msra.mxu0 0.0
    %1952 = vmatprep.subr.mxu0 0.0
    %1953 = vmatpush1.msra.mxu0 0.0
    %1954 = vmatprep.subr.mxu0 0.0
    %1955 = vmatpush1.msra.mxu0 0.0
    %1956 = vmatprep.subr.mxu0 0.0
    %1957 = vmatpush1.msra.mxu0 0.0
    %1958 = vmatprep.subr.mxu0 0.0
    %1959 = vmatpush1.msra.mxu0 0.0
    %1960 = vmatprep.subr.mxu0 0.0
    %1961 = vmatpush1.msra.mxu0 0.0
    %1962 = vmatprep.subr.mxu0 0.0
    %1963 = vmatpush1.msra.mxu0 0.0
    %1964 = vmatprep.subr.mxu0 0.0
    %1965 = vmatpush1.msra.mxu0 0.0
    %1966 = vmatprep.subr.mxu0 0.0
    %1967 = vmatpush1.msra.mxu0 0.0
    %1968 = vmatprep.subr.mxu0 0.0
    %1969 = vmatpush1.msra.mxu0 0.0
    %1970 = vmatprep.subr.mxu0 0.0
    %1971 = vmatpush1.msra.mxu0 0.0
    %1972 = vmatprep.subr.mxu0 0.0
    %1973 = vmatpush1.msra.mxu0 0.0
    %1974 = vmatprep.subr.mxu0 0.0
    %1975 = vmatpush1.msra.mxu0 0.0
    %1976 = vmatprep.subr.mxu0 0.0
    %1977 = vmatpush1.msra.mxu0 0.0
    %1978 = vmatprep.subr.mxu0 0.0
    %1979 = vmatpush1.msra.mxu0 0.0
    %1980 = vmatprep.subr.mxu0 0.0
    %1981 = vmatpush1.msra.mxu0 0.0
    %1982 = vmatprep.subr.mxu0 0.0
    %1983 = vmatpush1.msra.mxu0 0.0
    %1984 = vmatprep.subr.mxu0 0.0
    %1985 = vmatpush1.msra.mxu0 0.0
    %1986 = vmatprep.subr.mxu0 0.0
    %1987 = vmatpush1.msra.mxu0 0.0
    %1988 = vmatprep.subr.mxu0 0.0
    %1989 = vmatpush1.msra.mxu0 0.0
    %1990 = vmatprep.mubr.f32.mxu0 0.0
    %1991 = vmatmul.mubr.f32.gmra.mrb[0].mxu0 %v1924
    %v1992 = vpop.f32.mrb[0].mxu0
    %v1993 = vadd.f32 %v321, %v1992
    %v1994 = vpop.f32.mrb[0].mxu0
    %1995 = vdwg.mxu0
    %v1996 = vadd.f32 %v1919, %v1993
    %v1997 = vxor.u32 %v1996, 2147483648
    %v1998 = vmul.f32 %v1997, 1.442695
    %v1999 = vpow.pop %v1998
    %v2000 = vadd.f32 %v1999, 1.0
    %v2001 = vrcp.pop %v2000
    %v2002 = vmul.f32 1.0, %v2001
    %2004 = vrot.lane.b32.xlu0 %v1993, 64
    %v2005 = vpop.permute.xlu0 %2004
    %v2007 = vmul.f32 %v2002, %v2005
    %2009 = vrot.lane.b32.xlu0 %v2007, 64
    %v2010 = vpop.permute.xlu0 %2009
    %v2012 = vadd.f32 %v1919, %v2010
    %v2013 = vtanh.pop %v2012
    %v2014 = vsub.f32 %v1917, %v2013
    %2016 = vrot.lane.b32.xlu0 %v2014, 96
    %v2017 = vpop.permute.xlu0 %2016
    %v2019 = vmul.f32 %v2002, %v2017
    %2021 = vrot.lane.b32.xlu0 %v2019, 32
    %v2022 = vpop.permute.xlu0 %2021
    %v2024 = vadd.f32 %v2013, %v2022
    %2026 = vrot.lane.b32.xlu0 %v1918, 64
    %v2027 = vpop.permute.xlu0 %2026
    %v2028 = vsel %vm323, %v2027, 0
    %2030 = vmatprep.subr.mxu0 0.0
    %2031 = vmatpush1.msra.mxu0 %v306
    %2032 = vmatprep.subr.mxu0 0.0
    %2033 = vmatpush1.msra.mxu0 %v307
    %2034 = vmatprep.subr.mxu0 0.0
    %2035 = vmatpush1.msra.mxu0 %v308
    %2036 = vmatprep.subr.mxu0 0.0
    %2037 = vmatpush1.msra.mxu0 %v309
    %2038 = vmatprep.subr.mxu0 0.0
    %2039 = vmatpush1.msra.mxu0 0.0
    %2040 = vmatprep.subr.mxu0 0.0
    %2041 = vmatpush1.msra.mxu0 0.0
    %2042 = vmatprep.subr.mxu0 0.0
    %2043 = vmatpush1.msra.mxu0 0.0
    %2044 = vmatprep.subr.mxu0 0.0
    %2045 = vmatpush1.msra.mxu0 0.0
    %2046 = vmatprep.subr.mxu0 0.0
    %2047 = vmatpush1.msra.mxu0 0.0
    %2048 = vmatprep.subr.mxu0 0.0
    %2049 = vmatpush1.msra.mxu0 0.0
    %2050 = vmatprep.subr.mxu0 0.0
    %2051 = vmatpush1.msra.mxu0 0.0
    %2052 = vmatprep.subr.mxu0 0.0
    %2053 = vmatpush1.msra.mxu0 0.0
    %2054 = vmatprep.subr.mxu0 0.0
    %2055 = vmatpush1.msra.mxu0 0.0
    %2056 = vmatprep.subr.mxu0 0.0
    %2057 = vmatpush1.msra.mxu0 0.0
    %2058 = vmatprep.subr.mxu0 0.0
    %2059 = vmatpush1.msra.mxu0 0.0
    %2060 = vmatprep.subr.mxu0 0.0
    %2061 = vmatpush1.msra.mxu0 0.0
    %2062 = vmatprep.subr.mxu0 0.0
    %2063 = vmatpush1.msra.mxu0 0.0
    %2064 = vmatprep.subr.mxu0 0.0
    %2065 = vmatpush1.msra.mxu0 0.0
    %2066 = vmatprep.subr.mxu0 0.0
    %2067 = vmatpush1.msra.mxu0 0.0
    %2068 = vmatprep.subr.mxu0 0.0
    %2069 = vmatpush1.msra.mxu0 0.0
    %2070 = vmatprep.subr.mxu0 0.0
    %2071 = vmatpush1.msra.mxu0 0.0
    %2072 = vmatprep.subr.mxu0 0.0
    %2073 = vmatpush1.msra.mxu0 0.0
    %2074 = vmatprep.subr.mxu0 0.0
    %2075 = vmatpush1.msra.mxu0 0.0
    %2076 = vmatprep.subr.mxu0 0.0
    %2077 = vmatpush1.msra.mxu0 0.0
    %2078 = vmatprep.subr.mxu0 0.0
    %2079 = vmatpush1.msra.mxu0 0.0
    %2080 = vmatprep.subr.mxu0 0.0
    %2081 = vmatpush1.msra.mxu0 0.0
    %2082 = vmatprep.subr.mxu0 0.0
    %2083 = vmatpush1.msra.mxu0 0.0
    %2084 = vmatprep.subr.mxu0 0.0
    %2085 = vmatpush1.msra.mxu0 0.0
    %2086 = vmatprep.subr.mxu0 0.0
    %2087 = vmatpush1.msra.mxu0 0.0
    %2088 = vmatprep.subr.mxu0 0.0
    %2089 = vmatpush1.msra.mxu0 0.0
    %2090 = vmatprep.subr.mxu0 0.0
    %2091 = vmatpush1.msra.mxu0 0.0
    %2092 = vmatprep.subr.mxu0 0.0
    %2093 = vmatpush1.msra.mxu0 0.0
    %2094 = vmatprep.mubr.f32.mxu0 0.0
    %2095 = vmatmul.mubr.f32.gmra.mrb[0].mxu0 %v2028
    %v2096 = vpop.f32.mrb[0].mxu0
    %v2097 = vadd.f32 %v434, %v2096
    %v2098 = vpop.f32.mrb[0].mxu0
    %2099 = vdwg.mxu0
    %v2100 = vadd.f32 %v1920, %v2097
    %v2101 = vxor.u32 %v2100, 2147483648
    %v2102 = vmul.f32 %v2101, 1.442695
    %v2103 = vpow.pop %v2102
    %v2104 = vadd.f32 %v2103, 1.0
    %v2105 = vrcp.pop %v2104
    %v2106 = vmul.f32 1.0, %v2105
    %2108 = vrot.lane.b32.xlu0 %v2097, 64
    %v2109 = vpop.permute.xlu0 %2108
    %v2111 = vmul.f32 %v2106, %v2109
    %2113 = vrot.lane.b32.xlu0 %v2111, 64
    %v2114 = vpop.permute.xlu0 %2113
    %v2116 = vadd.f32 %v1920, %v2114
    %v2117 = vtanh.pop %v2116
    %v2118 = vsub.f32 %v1918, %v2117
    %2120 = vrot.lane.b32.xlu0 %v2118, 96
    %v2121 = vpop.permute.xlu0 %2120
    %v2123 = vmul.f32 %v2106, %v2121
    %2125 = vrot.lane.b32.xlu0 %v2123, 32
    %v2126 = vpop.permute.xlu0 %2125
    %v2128 = vadd.f32 %v2117, %v2126
    %v2129 = vsel %vm301, %v2024, 0.0
    %2131 = vrot.lane.b32.xlu0 %v2129, 64
    %v2132 = vpop.permute.xlu0 %2131
    %s2134 = scalar_lea.vmem [#allocation8], 56
    %2135 = vst.msk [vmem:[%s2134] sm:$0xff] %vm323, %v2132
    %v2136 = vsel %vm294, %v2128, 0.0
    %2138 = vrot.lane.b32.xlu0 %v2136, 64
    %v2139 = vpop.permute.xlu0 %2138
    %2141 = vst.msk [vmem:[#allocation4] sm:$0xff] %vm323, %v2139
    %v2142 = vsel %vm301, %v2024, %v1917
    %v2143 = vsel %vm294, %v2128, %v1918
    %v2144 = vld [vmem:[#allocation8] sm:$0xff]
    %v2145 = vld [vmem:[#allocation8 + $0x8] sm:$0xff]
    %v2146 = vld [vmem:[#allocation8 + $0x10] sm:$0xff]
    %v2147 = vld [vmem:[#allocation8 + $0x18] sm:$0xff]
    %v2148 = vld [vmem:[#allocation8 + $0x20] sm:$0xff]
    %v2149 = vld [vmem:[#allocation8 + $0x28] sm:$0xff]
    %v2150 = vld [vmem:[#allocation8 + $0x30] sm:$0xff]
    %v2151 = vld [vmem:[#allocation8 + $0x38] sm:$0xff]
    %v2152 = vld [vmem:[#allocation4] sm:$0xff]
    %v2153 = vld [vmem:[#allocation4 + $0x8] sm:$0xff]
    %v2154 = vld [vmem:[#allocation4 + $0x10] sm:$0xff]
    %v2155 = vld [vmem:[#allocation4 + $0x18] sm:$0xff]
    %v2156 = vld [vmem:[#allocation4 + $0x20] sm:$0xff]
    %v2157 = vld [vmem:[#allocation4 + $0x28] sm:$0xff]
    %v2158 = vld [vmem:[#allocation4 + $0x30] sm:$0xff]
    %v2159 = vld [vmem:[#allocation4 + $0x38] sm:$0xff]
    %v2160 = vadd.f32 %v2144, %v2152
    %v2161 = vadd.f32 %v2145, %v2153
    %v2162 = vadd.f32 %v2146, %v2154
    %v2163 = vadd.f32 %v2147, %v2155
    %v2164 = vadd.f32 %v2148, %v2156
    %v2165 = vadd.f32 %v2149, %v2157
    %v2166 = vadd.f32 %v2150, %v2158
    %v2167 = vadd.f32 %v2151, %v2159
    %2168 = vst.msk [vmem:[#allocation8] sm:$0xff] %vm323, %v2160
    %2169 = vst.msk [vmem:[#allocation8 + $0x8] sm:$0xff] %vm323, %v2161
    %2170 = vst.msk [vmem:[#allocation8 + $0x10] sm:$0xff] %vm323, %v2162
    %2171 = vst.msk [vmem:[#allocation8 + $0x18] sm:$0xff] %vm323, %v2163
    %2172 = vst.msk [vmem:[#allocation8 + $0x20] sm:$0xff] %vm323, %v2164
    %2173 = vst.msk [vmem:[#allocation8 + $0x28] sm:$0xff] %vm323, %v2165
    %2174 = vst.msk [vmem:[#allocation8 + $0x30] sm:$0xff] %vm323, %v2166
    %2175 = vst.msk [vmem:[#allocation8 + $0x38] sm:$0xff] %vm323, %v2167
    %2177 = vrot.lane.b32.xlu0 %v2142, 64
    %v2178 = vpop.permute.xlu0 %2177
    %2180 = vst.msk [vmem:[#allocation9] sm:$0xff] %vm323, %v2178
    %2182 = vrot.lane.b32.xlu0 %v2143, 64
    %v2183 = vpop.permute.xlu0 %2182
    %s2185 = scalar_lea.vmem [#allocation9], 8
    %2186 = vst.msk [vmem:[%s2185] sm:$0xff] %vm323, %v2183
    // Predicated region
    $region42: #{tpu_custom_call.1} parent=1 // pred_check
      _
    $region43: #{tpu_custom_call.1} parent=1 // pred_check_branch
      %2188 = sbr.rel (0) target = $region45
    $region44: #{tpu_custom_call.1} parent=1 // pred_region
      %s2190 = ssub.s32 1024, 1024
      %2191 = vsyncadd [#allocation7], %s2190
      %s2192 = sshll.u32 [#allocation8], 4
      %s2193 = int_to_ptr.vmem [resolvable:$true] %s2192
      %2198 = dma.vmem_to_hbm [thread:$0]  %s2193, 1024, %s9, [#allocation7], 128, 128, 8
    $region45: #{tpu_custom_call.1} parent=1 // pred_fallthru
      _
    // Predicated region
    $region46: #{tpu_custom_call.1} parent=1 // pred_check
      _
    $region47: #{tpu_custom_call.1} parent=1 // pred_check_branch
      %2200 = sbr.rel (0) target = $region49
    $region48: #{tpu_custom_call.1} parent=1 // pred_region
      %s2202 = ssub.s32 256, 256
      %2203 = vsyncadd [#allocation10], %s2202
      %s2204 = sshll.u32 [#allocation9], 4
      %s2205 = int_to_ptr.vmem [resolvable:$true] %s2204
      %2210 = dma.vmem_to_hbm [thread:$0]  %s2205, 256, %s10, [#allocation10], 128, 128, 8
    $region49: #{tpu_custom_call.1} parent=1 // pred_fallthru
      _
    // Predicated region
    $region50: #{tpu_custom_call.1} parent=1 // pred_check
      _
    $region51: #{tpu_custom_call.1} parent=1 // pred_check_branch
      %2212 = sbr.rel (0) target = $region53
    $region52: #{tpu_custom_call.1} parent=1 // pred_region
      %2213 = dma.done [#allocation7], 1024
    $region53: #{tpu_custom_call.1} parent=1 // pred_fallthru
      _
    // Predicated region
    $region54: #{tpu_custom_call.1} parent=1 // pred_check
      _
    $region55: #{tpu_custom_call.1} parent=1 // pred_check_branch
      %2215 = sbr.rel (0) target = $region57
    $region56: #{tpu_custom_call.1} parent=1 // pred_region
      %2216 = dma.done [#allocation10], 256
    $region57: #{tpu_custom_call.1} parent=1 // pred_fallthru
      _
    %2217 = vsyncpa [#allocation6], 1
    %2218 = vsyncpa [#allocation7], 1
    %2219 = vsyncpa [#allocation10], 1

</llo_original>
